<compile_context>
chip_gen: v5e
topology: v5e:2x2
jax: 0.10.0
libtpu: 0.0.40
codegen_flags: <defaults>
</compile_context>

<pallas_src>
import math

import jax
import jax.numpy as jnp
from jax.experimental import pallas as pl
from jax.experimental.pallas import tpu as pltpu


_VMEM = pl.BlockSpec(memory_space=pltpu.MemorySpace.VMEM)


# ----------------------------------------------------------------------------
# Fused Pallas kernel: full GraspCVAE training forward + losses
# ----------------------------------------------------------------------------
def _fused_kernel(
    hand_ref, obj_ref, eps_ref,
    he_w1_ref, he_b1_ref, he_w2_ref, he_b2_ref,
    enc0_wh_ref, enc0_wo_ref, enc0_b_ref,
    enc1_w_ref, enc1_b_ref,
    head_w_ref, head_b_ref,
    dec0_wz_ref, dec0_wo_ref, dec0_b_ref,
    dec1_w_ref, dec1_b_ref,
    dec2_w_ref, dec2_b_ref,
    out_ref,
):
    def mm(x, w_ref):
        # bf16 (or f32) weights, f32 MXU accumulation.
        w = w_ref[...]
        return jnp.dot(x.astype(w.dtype), w, preferred_element_type=jnp.float32)

    hand = hand_ref[...]                       # [B, 12]  f32
    obj = obj_ref[...]                         # [B, 512] f32
    eps = eps_ref[...]                         # [B, L]   f32
    batch = hand.shape[0]
    latent = eps.shape[-1]

    # ---- hand encoder (BasicMLP) ----
    # TODO(synk): BasicMLP's exact architecture is not given in the spec;
    #             approximated as Linear(12,64) + ReLU + Linear(64, feature_dim).
    h = jnp.maximum(mm(hand, he_w1_ref) + he_b1_ref[...], 0.0)
    hand_glb = mm(h, he_w2_ref) + he_b2_ref[...]                 # [B, 512]

    # ---- CVAE encoder:  cat([hand_glb, obj]) @ W == hand_glb @ W_h + obj @ W_o
    x = jnp.maximum(mm(hand_glb, enc0_wh_ref) + mm(obj, enc0_wo_ref)
                    + enc0_b_ref[...], 0.0)                      # [B, 512]
    x = jnp.maximum(mm(x, enc1_w_ref) + enc1_b_ref[...], 0.0)    # [B, 256]

    # merged mean / log_var head -> single lane-dense [B, 128] output
    head = mm(x, head_w_ref) + head_b_ref[...]
    means = head[:, :latent]
    log_var = head[:, latent:2 * latent]

    # ---- reparameterization (f32 elementwise + EUP exp) ----
    z = eps * jnp.exp(0.5 * log_var) + means                     # [B, L]

    # ---- CVAE decoder:  cat([z, obj]) @ W == z @ W_z + obj @ W_o
    d = jnp.maximum(mm(z, dec0_wz_ref) + mm(obj, dec0_wo_ref)
                    + dec0_b_ref[...], 0.0)                      # [B, 512]
    d = jnp.maximum(mm(d, dec1_w_ref) + dec1_b_ref[...], 0.0)    # [B, 256]
    recon = mm(d, dec2_w_ref) + dec2_b_ref[...]                  # [B, 12]

    # ---- losses (cal_loss) ----
    diff = jnp.abs(recon - hand)                                 # [B, 12]
    lane = jax.lax.broadcasted_iota(jnp.int32, diff.shape, 1)
    trans_sum = jnp.sum(jnp.where(lane < 3, diff, 0.0))
    total_sum = jnp.sum(diff)
    rot_sum = total_sum - trans_sum
    loss_trans = trans_sum / float(batch * 3)
    loss_rot = rot_sum / float(batch * 9)
    # Reference sums KLD over all elements (no division by batch).
    loss_kld = -0.5 * jnp.sum(1.0 + log_var - means * means - jnp.exp(log_var))

    out_lane = jax.lax.broadcasted_iota(jnp.int32, out_ref.shape, 1)
    out_ref[...] = jnp.where(
        out_lane == 0, loss_trans,
        jnp.where(out_lane == 1, loss_rot,
                  jnp.where(out_lane == 2, loss_kld, 0.0))).astype(out_ref.dtype)


def grasp_cvae_forward(fp, obj_glb_feature, trans, rot, eps):
    """Returns (loss_trans, loss_rot, loss_KLD) exactly as GraspCVAE.forward(train)."""
    # hand_input = cat([trans, rot.reshape(-1, 9)], dim=-1)  -> [B, 12]
    hand_input = jnp.concatenate([trans, rot.reshape(-1, 9)], axis=-1)

    inputs = (
        hand_input, obj_glb_feature, eps,
        fp["he_w1"], fp["he_b1"], fp["he_w2"], fp["he_b2"],
        fp["enc0_wh"], fp["enc0_wo"], fp["enc0_b"],
        fp["enc1_w"], fp["enc1_b"],
        fp["head_w"], fp["head_b"],
        fp["dec0_wz"], fp["dec0_wo"], fp["dec0_b"],
        fp["dec1_w"], fp["dec1_b"],
        fp["dec2_w"], fp["dec2_b"],
    )

    out = pl.pallas_call(
        _fused_kernel,
        in_specs=[_VMEM] * len(inputs),
        out_specs=_VMEM,
        out_shape=jax.ShapeDtypeStruct((1, 128), jnp.float32),
    )(*inputs)
    return out[0, 0], out[0, 1], out[0, 2]


# ----------------------------------------------------------------------------
# Parameter construction (mimics nn.Linear default init) + fused-layout prep
# ----------------------------------------------------------------------------
def init_linear(key, in_dim, out_dim):
    k1, k2 = jax.random.split(key)
    bound = 1.0 / math.sqrt(in_dim)
    w = jax.random.uniform(k1, (in_dim, out_dim), jnp.float32, -bound, bound)
    b = jax.random.uniform(k2, (out_dim,), jnp.float32, -bound, bound)
    return w, b


def make_params(key, condition_size=512, feature_dim=512, latent_size=64,
                hand_hidden=64):
    keys = jax.random.split(key, 9)
    p = {}
    # TODO(synk): BasicMLP architecture is a guess (2-layer MLP 12->64->feature_dim).
    p["he_fc1"] = init_linear(keys[0], 12, hand_hidden)
    p["he_fc2"] = init_linear(keys[1], hand_hidden, feature_dim)
    # CVAE encoder: layer_sizes [512, 512, 256] -> conditional input 1024
    p["enc_l0"] = init_linear(keys[2], feature_dim + condition_size, 512)
    p["enc_l1"] = init_linear(keys[3], 512, 256)
    p["enc_mean"] = init_linear(keys[4], 256, latent_size)
    p["enc_logvar"] = init_linear(keys[5], 256, latent_size)
    # CVAE decoder: layer_sizes [512, 256, 12], input = latent + condition = 576
    p["dec_l0"] = init_linear(keys[6], latent_size + condition_size, 512)
    p["dec_l1"] = init_linear(keys[7], 512, 256)
    p["dec_l2"] = init_linear(keys[8], 256, 12)
    return p


def prepare_fused_params(params, weight_dtype=jnp.bfloat16,
                         feature_dim=512, latent_size=64):
    """Split concat-layer weights, merge mean/logvar heads, cast weights."""
    def w(a):
        return a.astype(weight_dtype)

    def b(a):
        return a.reshape(1, -1).astype(jnp.float32)

    he_w1, he_b1 = params["he_fc1"]
    he_w2, he_b2 = params["he_fc2"]
    enc0_w, enc0_b = params["enc_l0"]          # [feature_dim + cond, 512]
    enc1_w, enc1_b = params["enc_l1"]
    mean_w, mean_b = params["enc_mean"]
    lv_w, lv_b = params["enc_logvar"]
    dec0_w, dec0_b = params["dec_l0"]          # [latent + cond, 512]
    dec1_w, dec1_b = params["dec_l1"]
    dec2_w, dec2_b = params["dec_l2"]

    return {
        "he_w1": w(he_w1), "he_b1": b(he_b1),
        "he_w2": w(he_w2), "he_b2": b(he_b2),
        # cat([hand_glb, obj]) @ W  ->  hand rows first, obj rows second
        "enc0_wh": w(enc0_w[:feature_dim]), "enc0_wo": w(enc0_w[feature_dim:]),
        "enc0_b": b(enc0_b),
        "enc1_w": w(enc1_w), "enc1_b": b(enc1_b),
        # merged mean/logvar head: [256, 2*latent], lane-dense output
        "head_w": w(jnp.concatenate([mean_w, lv_w], axis=1)),
        "head_b": b(jnp.concatenate([mean_b, lv_b], axis=0)),
        # cat([z, obj]) @ W  ->  z rows first, obj rows second
        "dec0_wz": w(dec0_w[:latent_size]), "dec0_wo": w(dec0_w[latent_size:]),
        "dec0_b": b(dec0_b),
        "dec1_w": w(dec1_w), "dec1_b": b(dec1_b),
        "dec2_w": w(dec2_w), "dec2_b": b(dec2_b),
    }


# ----------------------------------------------------------------------------
# Pure-JAX reference (same split-dot / merged-head math) for a sanity check
# ----------------------------------------------------------------------------
def reference_forward(fp, obj, trans, rot, eps):
    hand = jnp.concatenate([trans, rot.reshape(-1, 9)], axis=-1)

    def mm(x, wkey):
        w = fp[wkey]
        return jnp.dot(x.astype(w.dtype), w, preferred_element_type=jnp.float32)

    h = jax.nn.relu(mm(hand, "he_w1") + fp["he_b1"])
    hand_glb = mm(h, "he_w2") + fp["he_b2"]
    x = jax.nn.relu(mm(hand_glb, "enc0_wh") + mm(obj, "enc0_wo") + fp["enc0_b"])
    x = jax.nn.relu(mm(x, "enc1_w") + fp["enc1_b"])
    head = mm(x, "head_w") + fp["head_b"]
    L = eps.shape[-1]
    means, log_var = head[:, :L], head[:, L:2 * L]
    z = eps * jnp.exp(0.5 * log_var) + means
    d = jax.nn.relu(mm(z, "dec0_wz") + mm(obj, "dec0_wo") + fp["dec0_b"])
    d = jax.nn.relu(mm(d, "dec1_w") + fp["dec1_b"])
    recon = mm(d, "dec2_w") + fp["dec2_b"]
    lt = jnp.mean(jnp.abs(recon[:, :3] - hand[:, :3]))
    lr = jnp.mean(jnp.abs(recon[:, 3:12] - hand[:, 3:12]))
    kld = -0.5 * jnp.sum(1.0 + log_var - means * means - jnp.exp(log_var))
    return lt, lr, kld


# ----------------------------------------------------------------------------
if __name__ == "__main__":
    B = 2
    CONDITION = 512
    LATENT = 64

    key = jax.random.PRNGKey(0)
    k_params, k_obj, k_trans, k_rot, k_eps = jax.random.split(key, 5)

    params = make_params(k_params, condition_size=CONDITION,
                         feature_dim=CONDITION, latent_size=LATENT)
    fused_params = prepare_fused_params(params, weight_dtype=jnp.bfloat16,
                                        feature_dim=CONDITION,
                                        latent_size=LATENT)

    obj_glb_feature = jax.random.normal(k_obj, (B, CONDITION), jnp.float32)
    trans = jax.random.normal(k_trans, (B, 3), jnp.float32)
    rot = jax.random.normal(k_rot, (B, 3, 3), jnp.float32)
    # torch.randn([B, latent]) -> deterministic explicit input
    eps = jax.random.normal(k_eps, (B, LATENT), jnp.float32)

    fwd = jax.jit(grasp_cvae_forward)
    loss_trans, loss_rot, loss_kld = fwd(fused_params, obj_glb_feature,
                                         trans, rot, eps)
    jax.block_until_ready((loss_trans, loss_rot, loss_kld))

    # Sanity: finite + close to a pure-JAX reference doing the same math.
    ref_t, ref_r, ref_k = reference_forward(fused_params, obj_glb_feature,
                                            trans, rot, eps)
    for got, ref in ((loss_trans, ref_t), (loss_rot, ref_r), (loss_kld, ref_k)):
        assert jnp.isfinite(got), got
        assert jnp.allclose(got, ref, rtol=2e-2, atol=1e-3), (got, ref)

    print("KERNEL_OK")
</pallas_src>

<mosaic_0001>
module attributes {stable_mosaic.version = 11 : i64} {
  func.func @_fused_kernel(%arg0: memref<2x12xf32, #tpu.memory_space<vmem>>, %arg1: memref<2x512xf32, #tpu.memory_space<vmem>>, %arg2: memref<2x64xf32, #tpu.memory_space<vmem>>, %arg3: memref<12x64xbf16, #tpu.memory_space<vmem>>, %arg4: memref<1x64xf32, #tpu.memory_space<vmem>>, %arg5: memref<64x512xbf16, #tpu.memory_space<vmem>>, %arg6: memref<1x512xf32, #tpu.memory_space<vmem>>, %arg7: memref<512x512xbf16, #tpu.memory_space<vmem>>, %arg8: memref<512x512xbf16, #tpu.memory_space<vmem>>, %arg9: memref<1x512xf32, #tpu.memory_space<vmem>>, %arg10: memref<512x256xbf16, #tpu.memory_space<vmem>>, %arg11: memref<1x256xf32, #tpu.memory_space<vmem>>, %arg12: memref<256x128xbf16, #tpu.memory_space<vmem>>, %arg13: memref<1x128xf32, #tpu.memory_space<vmem>>, %arg14: memref<64x512xbf16, #tpu.memory_space<vmem>>, %arg15: memref<512x512xbf16, #tpu.memory_space<vmem>>, %arg16: memref<1x512xf32, #tpu.memory_space<vmem>>, %arg17: memref<512x256xbf16, #tpu.memory_space<vmem>>, %arg18: memref<1x256xf32, #tpu.memory_space<vmem>>, %arg19: memref<256x12xbf16, #tpu.memory_space<vmem>>, %arg20: memref<1x12xf32, #tpu.memory_space<vmem>>, %arg21: memref<1x128xf32, #tpu.memory_space<vmem>>) attributes {dimension_semantics = [], scalar_prefetch = 0 : i64, scratch_operands = 0 : i64, tpu.core_type = #tpu.core_type<tc>} {
    %c0 = arith.constant 0 : index
    %c0_0 = arith.constant 0 : index
    %0 = vector.load %arg0[%c0, %c0_0] : memref<2x12xf32, #tpu.memory_space<vmem>>, vector<2x12xf32>
    %c0_1 = arith.constant 0 : index
    %c0_2 = arith.constant 0 : index
    %1 = vector.load %arg1[%c0_1, %c0_2] : memref<2x512xf32, #tpu.memory_space<vmem>>, vector<2x512xf32>
    %c0_3 = arith.constant 0 : index
    %c0_4 = arith.constant 0 : index
    %2 = vector.load %arg2[%c0_3, %c0_4] : memref<2x64xf32, #tpu.memory_space<vmem>>, vector<2x64xf32>
    %c0_5 = arith.constant 0 : index
    %c0_6 = arith.constant 0 : index
    %3 = vector.load %arg3[%c0_5, %c0_6] : memref<12x64xbf16, #tpu.memory_space<vmem>>, vector<12x64xbf16>
    %4 = arith.truncf %0 : vector<2x12xf32> to vector<2x12xbf16>
    %cst = arith.constant dense<0.000000e+00> : vector<2x64xf32>
    %5 = tpu.matmul %4, %3, %cst {dimension_numbers = #tpu.dot_dimension_numbers<[1], [0], [0], [1], [0, 0, 1, 1], [], []>} : vector<2x12xbf16>, vector<12x64xbf16>, vector<2x64xf32> -> vector<2x64xf32>
    %c0_7 = arith.constant 0 : index
    %c0_8 = arith.constant 0 : index
    %6 = vector.load %arg4[%c0_7, %c0_8] : memref<1x64xf32, #tpu.memory_space<vmem>>, vector<1x64xf32>
    %7 = vector.broadcast %6 : vector<1x64xf32> to vector<2x64xf32>
    %8 = arith.addf %5, %7 : vector<2x64xf32>
    %cst_9 = arith.constant 0.000000e+00 : f32
    %9 = vector.broadcast %cst_9 : f32 to vector<2x64xf32>
    %10 = arith.maximumf %8, %9 : vector<2x64xf32>
    %c0_10 = arith.constant 0 : index
    %c0_11 = arith.constant 0 : index
    %11 = vector.load %arg5[%c0_10, %c0_11] : memref<64x512xbf16, #tpu.memory_space<vmem>>, vector<64x512xbf16>
    %12 = arith.truncf %10 : vector<2x64xf32> to vector<2x64xbf16>
    %cst_12 = arith.constant dense<0.000000e+00> : vector<2x512xf32>
    %13 = tpu.matmul %12, %11, %cst_12 {dimension_numbers = #tpu.dot_dimension_numbers<[1], [0], [0], [1], [0, 0, 1, 1], [], []>} : vector<2x64xbf16>, vector<64x512xbf16>, vector<2x512xf32> -> vector<2x512xf32>
    %c0_13 = arith.constant 0 : index
    %c0_14 = arith.constant 0 : index
    %14 = vector.load %arg6[%c0_13, %c0_14] : memref<1x512xf32, #tpu.memory_space<vmem>>, vector<1x512xf32>
    %15 = vector.broadcast %14 : vector<1x512xf32> to vector<2x512xf32>
    %16 = arith.addf %13, %15 : vector<2x512xf32>
    %c0_15 = arith.constant 0 : index
    %c0_16 = arith.constant 0 : index
    %17 = vector.load %arg7[%c0_15, %c0_16] : memref<512x512xbf16, #tpu.memory_space<vmem>>, vector<512x512xbf16>
    %18 = arith.truncf %16 : vector<2x512xf32> to vector<2x512xbf16>
    %cst_17 = arith.constant dense<0.000000e+00> : vector<2x512xf32>
    %19 = tpu.matmul %18, %17, %cst_17 {dimension_numbers = #tpu.dot_dimension_numbers<[1], [0], [0], [1], [0, 0, 1, 1], [], []>} : vector<2x512xbf16>, vector<512x512xbf16>, vector<2x512xf32> -> vector<2x512xf32>
    %c0_18 = arith.constant 0 : index
    %c0_19 = arith.constant 0 : index
    %20 = vector.load %arg8[%c0_18, %c0_19] : memref<512x512xbf16, #tpu.memory_space<vmem>>, vector<512x512xbf16>
    %21 = arith.truncf %1 : vector<2x512xf32> to vector<2x512xbf16>
    %cst_20 = arith.constant dense<0.000000e+00> : vector<2x512xf32>
    %22 = tpu.matmul %21, %20, %cst_20 {dimension_numbers = #tpu.dot_dimension_numbers<[1], [0], [0], [1], [0, 0, 1, 1], [], []>} : vector<2x512xbf16>, vector<512x512xbf16>, vector<2x512xf32> -> vector<2x512xf32>
    %23 = arith.addf %19, %22 : vector<2x512xf32>
    %c0_21 = arith.constant 0 : index
    %c0_22 = arith.constant 0 : index
    %24 = vector.load %arg9[%c0_21, %c0_22] : memref<1x512xf32, #tpu.memory_space<vmem>>, vector<1x512xf32>
    %25 = vector.broadcast %24 : vector<1x512xf32> to vector<2x512xf32>
    %26 = arith.addf %23, %25 : vector<2x512xf32>
    %cst_23 = arith.constant 0.000000e+00 : f32
    %27 = vector.broadcast %cst_23 : f32 to vector<2x512xf32>
    %28 = arith.maximumf %26, %27 : vector<2x512xf32>
    %c0_24 = arith.constant 0 : index
    %c0_25 = arith.constant 0 : index
    %29 = vector.load %arg10[%c0_24, %c0_25] : memref<512x256xbf16, #tpu.memory_space<vmem>>, vector<512x256xbf16>
    %30 = arith.truncf %28 : vector<2x512xf32> to vector<2x512xbf16>
    %cst_26 = arith.constant dense<0.000000e+00> : vector<2x256xf32>
    %31 = tpu.matmul %30, %29, %cst_26 {dimension_numbers = #tpu.dot_dimension_numbers<[1], [0], [0], [1], [0, 0, 1, 1], [], []>} : vector<2x512xbf16>, vector<512x256xbf16>, vector<2x256xf32> -> vector<2x256xf32>
    %c0_27 = arith.constant 0 : index
    %c0_28 = arith.constant 0 : index
    %32 = vector.load %arg11[%c0_27, %c0_28] : memref<1x256xf32, #tpu.memory_space<vmem>>, vector<1x256xf32>
    %33 = vector.broadcast %32 : vector<1x256xf32> to vector<2x256xf32>
    %34 = arith.addf %31, %33 : vector<2x256xf32>
    %cst_29 = arith.constant 0.000000e+00 : f32
    %35 = vector.broadcast %cst_29 : f32 to vector<2x256xf32>
    %36 = arith.maximumf %34, %35 : vector<2x256xf32>
    %c0_30 = arith.constant 0 : index
    %c0_31 = arith.constant 0 : index
    %37 = vector.load %arg12[%c0_30, %c0_31] : memref<256x128xbf16, #tpu.memory_space<vmem>>, vector<256x128xbf16>
    %38 = arith.truncf %36 : vector<2x256xf32> to vector<2x256xbf16>
    %cst_32 = arith.constant dense<0.000000e+00> : vector<2x128xf32>
    %39 = tpu.matmul %38, %37, %cst_32 {dimension_numbers = #tpu.dot_dimension_numbers<[1], [0], [0], [1], [0, 0, 1, 1], [], []>} : vector<2x256xbf16>, vector<256x128xbf16>, vector<2x128xf32> -> vector<2x128xf32>
    %c0_33 = arith.constant 0 : index
    %c0_34 = arith.constant 0 : index
    %40 = vector.load %arg13[%c0_33, %c0_34] : memref<1x128xf32, #tpu.memory_space<vmem>>, vector<1x128xf32>
    %41 = vector.broadcast %40 : vector<1x128xf32> to vector<2x128xf32>
    %42 = arith.addf %39, %41 : vector<2x128xf32>
    %43 = vector.extract_strided_slice %42 {offsets = [0, 0], sizes = [2, 64], strides = [1, 1]} : vector<2x128xf32> to vector<2x64xf32>
    %44 = vector.extract_strided_slice %42 {offsets = [0, 64], sizes = [2, 64], strides = [1, 1]} : vector<2x128xf32> to vector<2x64xf32>
    %cst_35 = arith.constant 5.000000e-01 : f32
    %45 = vector.broadcast %cst_35 : f32 to vector<2x64xf32>
    %46 = arith.mulf %45, %44 : vector<2x64xf32>
    %47 = math.exp %46 : vector<2x64xf32>
    %48 = arith.mulf %2, %47 : vector<2x64xf32>
    %49 = arith.addf %48, %43 : vector<2x64xf32>
    %c0_36 = arith.constant 0 : index
    %c0_37 = arith.constant 0 : index
    %50 = vector.load %arg14[%c0_36, %c0_37] : memref<64x512xbf16, #tpu.memory_space<vmem>>, vector<64x512xbf16>
    %51 = arith.truncf %49 : vector<2x64xf32> to vector<2x64xbf16>
    %cst_38 = arith.constant dense<0.000000e+00> : vector<2x512xf32>
    %52 = tpu.matmul %51, %50, %cst_38 {dimension_numbers = #tpu.dot_dimension_numbers<[1], [0], [0], [1], [0, 0, 1, 1], [], []>} : vector<2x64xbf16>, vector<64x512xbf16>, vector<2x512xf32> -> vector<2x512xf32>
    %c0_39 = arith.constant 0 : index
    %c0_40 = arith.constant 0 : index
    %53 = vector.load %arg15[%c0_39, %c0_40] : memref<512x512xbf16, #tpu.memory_space<vmem>>, vector<512x512xbf16>
    %54 = arith.truncf %1 : vector<2x512xf32> to vector<2x512xbf16>
    %cst_41 = arith.constant dense<0.000000e+00> : vector<2x512xf32>
    %55 = tpu.matmul %54, %53, %cst_41 {dimension_numbers = #tpu.dot_dimension_numbers<[1], [0], [0], [1], [0, 0, 1, 1], [], []>} : vector<2x512xbf16>, vector<512x512xbf16>, vector<2x512xf32> -> vector<2x512xf32>
    %56 = arith.addf %52, %55 : vector<2x512xf32>
    %c0_42 = arith.constant 0 : index
    %c0_43 = arith.constant 0 : index
    %57 = vector.load %arg16[%c0_42, %c0_43] : memref<1x512xf32, #tpu.memory_space<vmem>>, vector<1x512xf32>
    %58 = vector.broadcast %57 : vector<1x512xf32> to vector<2x512xf32>
    %59 = arith.addf %56, %58 : vector<2x512xf32>
    %cst_44 = arith.constant 0.000000e+00 : f32
    %60 = vector.broadcast %cst_44 : f32 to vector<2x512xf32>
    %61 = arith.maximumf %59, %60 : vector<2x512xf32>
    %c0_45 = arith.constant 0 : index
    %c0_46 = arith.constant 0 : index
    %62 = vector.load %arg17[%c0_45, %c0_46] : memref<512x256xbf16, #tpu.memory_space<vmem>>, vector<512x256xbf16>
    %63 = arith.truncf %61 : vector<2x512xf32> to vector<2x512xbf16>
    %cst_47 = arith.constant dense<0.000000e+00> : vector<2x256xf32>
    %64 = tpu.matmul %63, %62, %cst_47 {dimension_numbers = #tpu.dot_dimension_numbers<[1], [0], [0], [1], [0, 0, 1, 1], [], []>} : vector<2x512xbf16>, vector<512x256xbf16>, vector<2x256xf32> -> vector<2x256xf32>
    %c0_48 = arith.constant 0 : index
    %c0_49 = arith.constant 0 : index
    %65 = vector.load %arg18[%c0_48, %c0_49] : memref<1x256xf32, #tpu.memory_space<vmem>>, vector<1x256xf32>
    %66 = vector.broadcast %65 : vector<1x256xf32> to vector<2x256xf32>
    %67 = arith.addf %64, %66 : vector<2x256xf32>
    %cst_50 = arith.constant 0.000000e+00 : f32
    %68 = vector.broadcast %cst_50 : f32 to vector<2x256xf32>
    %69 = arith.maximumf %67, %68 : vector<2x256xf32>
    %c0_51 = arith.constant 0 : index
    %c0_52 = arith.constant 0 : index
    %70 = vector.load %arg19[%c0_51, %c0_52] : memref<256x12xbf16, #tpu.memory_space<vmem>>, vector<256x12xbf16>
    %71 = arith.truncf %69 : vector<2x256xf32> to vector<2x256xbf16>
    %cst_53 = arith.constant dense<0.000000e+00> : vector<2x12xf32>
    %72 = tpu.matmul %71, %70, %cst_53 {dimension_numbers = #tpu.dot_dimension_numbers<[1], [0], [0], [1], [0, 0, 1, 1], [], []>} : vector<2x256xbf16>, vector<256x12xbf16>, vector<2x12xf32> -> vector<2x12xf32>
    %c0_54 = arith.constant 0 : index
    %c0_55 = arith.constant 0 : index
    %73 = vector.load %arg20[%c0_54, %c0_55] : memref<1x12xf32, #tpu.memory_space<vmem>>, vector<1x12xf32>
    %74 = vector.broadcast %73 : vector<1x12xf32> to vector<2x12xf32>
    %75 = arith.addf %72, %74 : vector<2x12xf32>
    %76 = arith.subf %75, %0 : vector<2x12xf32>
    %77 = math.absf %76 : vector<2x12xf32>
    %78 = tpu.iota {dimensions = array<i32: 1>} : vector<2x12xi32>
    %c3_i32 = arith.constant 3 : i32
    %79 = vector.broadcast %c3_i32 : i32 to vector<2x12xi32>
    %80 = arith.cmpi slt, %78, %79 : vector<2x12xi32>
    %cst_56 = arith.constant 0.000000e+00 : f32
    %81 = vector.broadcast %cst_56 : f32 to vector<2x12xf32>
    %82 = arith.select %80, %77, %81 : vector<2x12xi1>, vector<2x12xf32>
    %83 = vector.shape_cast %82 : vector<2x12xf32> to vector<1x2x12xf32>
    %cst_57 = arith.constant dense<0.000000e+00> : vector<1xf32>
    %84 = vector.multi_reduction <add>, %83, %cst_57 [1, 2] : vector<1x2x12xf32> to vector<1xf32>
    %85 = vector.shape_cast %84 : vector<1xf32> to vector<1x1x1xf32>
    %86 = vector.extract %85[0, 0, 0] : f32 from vector<1x1x1xf32>
    %87 = vector.shape_cast %77 : vector<2x12xf32> to vector<1x2x12xf32>
    %cst_58 = arith.constant dense<0.000000e+00> : vector<1xf32>
    %88 = vector.multi_reduction <add>, %87, %cst_58 [1, 2] : vector<1x2x12xf32> to vector<1xf32>
    %89 = vector.shape_cast %88 : vector<1xf32> to vector<1x1x1xf32>
    %90 = vector.extract %89[0, 0, 0] : f32 from vector<1x1x1xf32>
    %91 = arith.subf %90, %86 : f32
    %cst_59 = arith.constant 6.000000e+00 : f32
    %92 = arith.divf %86, %cst_59 : f32
    %cst_60 = arith.constant 1.800000e+01 : f32
    %93 = arith.divf %91, %cst_60 : f32
    %cst_61 = arith.constant 1.000000e+00 : f32
    %94 = vector.broadcast %cst_61 : f32 to vector<2x64xf32>
    %95 = arith.addf %94, %44 : vector<2x64xf32>
    %96 = arith.mulf %43, %43 : vector<2x64xf32>
    %97 = arith.subf %95, %96 : vector<2x64xf32>
    %98 = math.exp %44 : vector<2x64xf32>
    %99 = arith.subf %97, %98 : vector<2x64xf32>
    %100 = vector.shape_cast %99 : vector<2x64xf32> to vector<1x2x64xf32>
    %cst_62 = arith.constant dense<0.000000e+00> : vector<1xf32>
    %101 = vector.multi_reduction <add>, %100, %cst_62 [1, 2] : vector<1x2x64xf32> to vector<1xf32>
    %102 = vector.shape_cast %101 : vector<1xf32> to vector<1x1x1xf32>
    %103 = vector.extract %102[0, 0, 0] : f32 from vector<1x1x1xf32>
    %cst_63 = arith.constant -5.000000e-01 : f32
    %104 = arith.mulf %cst_63, %103 : f32
    %105 = tpu.iota {dimensions = array<i32: 1>} : vector<1x128xi32>
    %c0_i32 = arith.constant 0 : i32
    %106 = vector.broadcast %c0_i32 : i32 to vector<1x128xi32>
    %107 = arith.cmpi eq, %105, %106 : vector<1x128xi32>
    %c1_i32 = arith.constant 1 : i32
    %108 = vector.broadcast %c1_i32 : i32 to vector<1x128xi32>
    %109 = arith.cmpi eq, %105, %108 : vector<1x128xi32>
    %c2_i32 = arith.constant 2 : i32
    %110 = vector.broadcast %c2_i32 : i32 to vector<1x128xi32>
    %111 = arith.cmpi eq, %105, %110 : vector<1x128xi32>
    %cst_64 = arith.constant 0.000000e+00 : f32
    %112 = vector.broadcast %104 : f32 to vector<1x128xf32>
    %113 = vector.broadcast %cst_64 : f32 to vector<1x128xf32>
    %114 = arith.select %111, %112, %113 : vector<1x128xi1>, vector<1x128xf32>
    %115 = vector.broadcast %93 : f32 to vector<1x128xf32>
    %116 = arith.select %109, %115, %114 : vector<1x128xi1>, vector<1x128xf32>
    %117 = vector.broadcast %92 : f32 to vector<1x128xf32>
    %118 = arith.select %107, %117, %116 : vector<1x128xi1>, vector<1x128xf32>
    %c0_65 = arith.constant 0 : index
    %c0_66 = arith.constant 0 : index
    %119 = vector.load %arg21[%c0_65, %c0_66] : memref<1x128xf32, #tpu.memory_space<vmem>>, vector<1x128xf32>
    tpu.vector_store %arg21[%c0_65, %c0_66], %118 {strides = array<i32>} : memref<1x128xf32, #tpu.memory_space<vmem>>, vector<1x128xf32>,
    return
  }
}

</mosaic_0001>

<llo_original>
// kernel: grasp_cvae_forward.1
$region0: #{grasp_cvae_forward.1}
  #allocation0 [shape = 'u32[]', space=smem, size = 0x4, offset = 0x4, fixed_abs, tag = 'smem constant byte address 0x4 - core index']
  #allocation1 [shape = 'u32[72,128]{1,0:T(1,128)}', space=vmem, size = 0x9000, scoped, tag = 'internal scratch']
  %s0 = inlined_call_operand.vmem [shape: f32[2,12], index: 0, kind: input, shape index: {}]
  %s1 = inlined_call_operand.vmem [shape: f32[2,512], index: 1, kind: input, shape index: {}]
  %s2 = inlined_call_operand.vmem [shape: f32[2,64], index: 2, kind: input, shape index: {}]
  %s3 = inlined_call_operand.vmem [shape: bf16[12,64], index: 3, kind: input, shape index: {}]
  %s4 = inlined_call_operand.vmem [shape: f32[1,64], index: 4, kind: input, shape index: {}]
  %s5 = inlined_call_operand.vmem [shape: bf16[64,512], index: 5, kind: input, shape index: {}]
  %s6 = inlined_call_operand.vmem [shape: f32[1,512], index: 6, kind: input, shape index: {}]
  %s7 = inlined_call_operand.hbm [shape: bf16[512,512], index: 7, kind: input, shape index: {}]
  %s8 = inlined_call_operand.hbm [shape: bf16[512,512], index: 8, kind: input, shape index: {}]
  %s9 = inlined_call_operand.vmem [shape: f32[1,512], index: 9, kind: input, shape index: {}]
  %s10 = inlined_call_operand.hbm [shape: bf16[512,256], index: 10, kind: input, shape index: {}]
  %s11 = inlined_call_operand.vmem [shape: f32[1,256], index: 11, kind: input, shape index: {}]
  %s12 = inlined_call_operand.hbm [shape: bf16[256,128], index: 12, kind: input, shape index: {}]
  %s13 = inlined_call_operand.vmem [shape: f32[1,128], index: 13, kind: input, shape index: {}]
  %s14 = inlined_call_operand.hbm [shape: bf16[64,512], index: 14, kind: input, shape index: {}]
  %s15 = inlined_call_operand.hbm [shape: bf16[512,512], index: 15, kind: input, shape index: {}]
  %s16 = inlined_call_operand.vmem [shape: f32[1,512], index: 16, kind: input, shape index: {}]
  %s17 = inlined_call_operand.hbm [shape: bf16[512,256], index: 17, kind: input, shape index: {}]
  %s18 = inlined_call_operand.hbm [shape: f32[1,256], index: 18, kind: input, shape index: {}]
  %s19 = inlined_call_operand.vmem [shape: bf16[256,12], index: 19, kind: input, shape index: {}]
  %s20 = inlined_call_operand.hbm [shape: f32[1,12], index: 20, kind: input, shape index: {}]
  %s21 = inlined_call_operand.vmem [shape: f32[1,128], index: 21, kind: output, shape index: {}]
  %s22 = sld [smem:[#allocation0]]
  $region130: #{grasp_cvae_forward.1} parent=0
    _
  %s24 = ssub.s32 1, %s22
  %s25 = scalar_select 0, %s24, %s22
  $region1: #{grasp_cvae_forward.1} parent=0
    #allocation2 [shape = 'u8[524288]{0}', space=vmem, size = 0x80000, scoped, tag = 'input window, operand 7, single buffered']
    #allocation3 [shape = 's32[1]{0}', space=sflag, size = 0x4, scoped, tag = 'scoped memory for grasp_cvae_forward.1']
    #allocation4 [shape = 'u8[524288]{0}', space=vmem, size = 0x80000, scoped, tag = 'input window, operand 8, single buffered']
    #allocation5 [shape = 's32[1]{0}', space=sflag, size = 0x4, scoped, tag = 'scoped memory for grasp_cvae_forward.1']
    #allocation6 [shape = 'u8[262144]{0}', space=vmem, size = 0x40000, scoped, tag = 'input window, operand 10, single buffered']
    #allocation7 [shape = 'u8[65536]{0}', space=vmem, size = 0x10000, scoped, tag = 'input window, operand 12, single buffered']
    #allocation8 [shape = 's32[1]{0}', space=sflag, size = 0x4, scoped, tag = 'scoped memory for grasp_cvae_forward.1']
    #allocation9 [shape = 'u8[65536]{0}', space=vmem, size = 0x10000, scoped, tag = 'input window, operand 14, single buffered']
    #allocation10 [shape = 'u8[524288]{0}', space=vmem, size = 0x80000, scoped, tag = 'input window, operand 15, single buffered']
    #allocation11 [shape = 's32[1]{0}', space=sflag, size = 0x4, scoped, tag = 'scoped memory for grasp_cvae_forward.1']
    #allocation12 [shape = 'u8[262144]{0}', space=vmem, size = 0x40000, scoped, tag = 'input window, operand 17, single buffered']
    #allocation13 [shape = 'u8[1024]{0}', space=vmem, size = 0x400, scoped, tag = 'input window, operand 18, single buffered']
    #allocation14 [shape = 's32[1]{0}', space=sflag, size = 0x4, scoped, tag = 'scoped memory for grasp_cvae_forward.1']
    #allocation15 [shape = 'u8[512]{0}', space=vmem, size = 0x400, scoped, tag = 'input window, operand 20, single buffered']
    %26 = vsyncpa [#allocation3], 0
    %27 = vsyncpa [#allocation5], 0
    %28 = vsyncpa [#allocation8], 0
    %29 = vsyncpa [#allocation11], 0
    %30 = vsyncpa [#allocation14], 0
    // Predicated region
    $region2: #{grasp_cvae_forward.1} parent=1 // pred_check
      _
    $region3: #{grasp_cvae_forward.1} parent=1 // pred_check_branch
      %32 = sbr.rel (0) target = $region5
    $region4: #{grasp_cvae_forward.1} parent=1 // pred_region
      _
    $region5: #{grasp_cvae_forward.1} parent=1 // pred_fallthru
      _
    // Predicated region
    $region6: #{grasp_cvae_forward.1} parent=1 // pred_check
      _
    $region7: #{grasp_cvae_forward.1} parent=1 // pred_check_branch
      %34 = sbr.rel (0) target = $region9
    $region8: #{grasp_cvae_forward.1} parent=1 // pred_region
      _
    $region9: #{grasp_cvae_forward.1} parent=1 // pred_fallthru
      _
    // Predicated region
    $region10: #{grasp_cvae_forward.1} parent=1 // pred_check
      _
    $region11: #{grasp_cvae_forward.1} parent=1 // pred_check_branch
      %36 = sbr.rel (0) target = $region13
    $region12: #{grasp_cvae_forward.1} parent=1 // pred_region
      _
    $region13: #{grasp_cvae_forward.1} parent=1 // pred_fallthru
      _
    // Predicated region
    $region14: #{grasp_cvae_forward.1} parent=1 // pred_check
      _
    $region15: #{grasp_cvae_forward.1} parent=1 // pred_check_branch
      %38 = sbr.rel (0) target = $region17
    $region16: #{grasp_cvae_forward.1} parent=1 // pred_region
      _
    $region17: #{grasp_cvae_forward.1} parent=1 // pred_fallthru
      _
    // Predicated region
    $region18: #{grasp_cvae_forward.1} parent=1 // pred_check
      _
    $region19: #{grasp_cvae_forward.1} parent=1 // pred_check_branch
      %40 = sbr.rel (0) target = $region21
    $region20: #{grasp_cvae_forward.1} parent=1 // pred_region
      _
    $region21: #{grasp_cvae_forward.1} parent=1 // pred_fallthru
      _
    // Predicated region
    $region22: #{grasp_cvae_forward.1} parent=1 // pred_check
      _
    $region23: #{grasp_cvae_forward.1} parent=1 // pred_check_branch
      %42 = sbr.rel (0) target = $region25
    $region24: #{grasp_cvae_forward.1} parent=1 // pred_region
      _
    $region25: #{grasp_cvae_forward.1} parent=1 // pred_fallthru
      _
    // Predicated region
    $region26: #{grasp_cvae_forward.1} parent=1 // pred_check
      _
    $region27: #{grasp_cvae_forward.1} parent=1 // pred_check_branch
      %44 = sbr.rel (0) target = $region29
    $region28: #{grasp_cvae_forward.1} parent=1 // pred_region
      _
    $region29: #{grasp_cvae_forward.1} parent=1 // pred_fallthru
      _
    // Predicated region
    $region30: #{grasp_cvae_forward.1} parent=1 // pred_check
      _
    $region31: #{grasp_cvae_forward.1} parent=1 // pred_check_branch
      %46 = sbr.rel (0) target = $region33
    $region32: #{grasp_cvae_forward.1} parent=1 // pred_region
      %48 = vsyncadd [#allocation3], 0
      %s49 = sshll.u32 %s7, 4
      %s50 = int_to_ptr.hbm [resolvable:$true] %s49
      %s51 = sshll.u32 [#allocation2], 4
      %s52 = int_to_ptr.vmem [resolvable:$true] %s51
      %57 = dma.hbm_to_vmem [thread:$0]  %s50, 16384, %s52, [#allocation3], 256, 256, 16
    $region33: #{grasp_cvae_forward.1} parent=1 // pred_fallthru
      _
    // Predicated region
    $region34: #{grasp_cvae_forward.1} parent=1 // pred_check
      _
    $region35: #{grasp_cvae_forward.1} parent=1 // pred_check_branch
      %59 = sbr.rel (0) target = $region37
    $region36: #{grasp_cvae_forward.1} parent=1 // pred_region
      %61 = vsyncadd [#allocation5], 0
      %s62 = sshll.u32 %s8, 4
      %s63 = int_to_ptr.hbm [resolvable:$true] %s62
      %s64 = sshll.u32 [#allocation4], 4
      %s65 = int_to_ptr.vmem [resolvable:$true] %s64
      %70 = dma.hbm_to_vmem [thread:$0]  %s63, 16384, %s65, [#allocation5], 256, 256, 16
    $region37: #{grasp_cvae_forward.1} parent=1 // pred_fallthru
      _
    // Predicated region
    $region38: #{grasp_cvae_forward.1} parent=1 // pred_check
      _
    $region39: #{grasp_cvae_forward.1} parent=1 // pred_check_branch
      %72 = sbr.rel (0) target = $region41
    $region40: #{grasp_cvae_forward.1} parent=1 // pred_region
      _
    $region41: #{grasp_cvae_forward.1} parent=1 // pred_fallthru
      _
    // Predicated region
    $region42: #{grasp_cvae_forward.1} parent=1 // pred_check
      _
    $region43: #{grasp_cvae_forward.1} parent=1 // pred_check_branch
      %74 = sbr.rel (0) target = $region45
    $region44: #{grasp_cvae_forward.1} parent=1 // pred_region
      %76 = vsyncadd [#allocation5], 0
      %s77 = sshll.u32 %s10, 4
      %s78 = int_to_ptr.hbm [resolvable:$true] %s77
      %s79 = sshll.u32 [#allocation6], 4
      %s80 = int_to_ptr.vmem [resolvable:$true] %s79
      %85 = dma.hbm_to_vmem [thread:$0]  %s78, 8192, %s80, [#allocation5], 128, 128, 8
    $region45: #{grasp_cvae_forward.1} parent=1 // pred_fallthru
      _
    // Predicated region
    $region46: #{grasp_cvae_forward.1} parent=1 // pred_check
      _
    $region47: #{grasp_cvae_forward.1} parent=1 // pred_check_branch
      %87 = sbr.rel (0) target = $region49
    $region48: #{grasp_cvae_forward.1} parent=1 // pred_region
      _
    $region49: #{grasp_cvae_forward.1} parent=1 // pred_fallthru
      _
    // Predicated region
    $region50: #{grasp_cvae_forward.1} parent=1 // pred_check
      _
    $region51: #{grasp_cvae_forward.1} parent=1 // pred_check_branch
      %89 = sbr.rel (0) target = $region53
    $region52: #{grasp_cvae_forward.1} parent=1 // pred_region
      %91 = vsyncadd [#allocation8], 0
      %s92 = sshll.u32 %s12, 4
      %s93 = int_to_ptr.hbm [resolvable:$true] %s92
      %s94 = sshll.u32 [#allocation7], 4
      %s95 = int_to_ptr.vmem [resolvable:$true] %s94
      %100 = dma.hbm_to_vmem [thread:$0]  %s93, 2048, %s95, [#allocation8], 64, 64, 4
    $region53: #{grasp_cvae_forward.1} parent=1 // pred_fallthru
      _
    // Predicated region
    $region54: #{grasp_cvae_forward.1} parent=1 // pred_check
      _
    $region55: #{grasp_cvae_forward.1} parent=1 // pred_check_branch
      %102 = sbr.rel (0) target = $region57
    $region56: #{grasp_cvae_forward.1} parent=1 // pred_region
      _
    $region57: #{grasp_cvae_forward.1} parent=1 // pred_fallthru
      _
    // Predicated region
    $region58: #{grasp_cvae_forward.1} parent=1 // pred_check
      _
    $region59: #{grasp_cvae_forward.1} parent=1 // pred_check_branch
      %104 = sbr.rel (0) target = $region61
    $region60: #{grasp_cvae_forward.1} parent=1 // pred_region
      %106 = vsyncadd [#allocation8], 0
      %s107 = sshll.u32 %s14, 4
      %s108 = int_to_ptr.hbm [resolvable:$true] %s107
      %s109 = sshll.u32 [#allocation9], 4
      %s110 = int_to_ptr.vmem [resolvable:$true] %s109
      %115 = dma.hbm_to_vmem [thread:$0]  %s108, 2048, %s110, [#allocation8], 256, 256, 16
    $region61: #{grasp_cvae_forward.1} parent=1 // pred_fallthru
      _
    // Predicated region
    $region62: #{grasp_cvae_forward.1} parent=1 // pred_check
      _
    $region63: #{grasp_cvae_forward.1} parent=1 // pred_check_branch
      %117 = sbr.rel (0) target = $region65
    $region64: #{grasp_cvae_forward.1} parent=1 // pred_region
      %119 = vsyncadd [#allocation11], 0
      %s120 = sshll.u32 %s15, 4
      %s121 = int_to_ptr.hbm [resolvable:$true] %s120
      %s122 = sshll.u32 [#allocation10], 4
      %s123 = int_to_ptr.vmem [resolvable:$true] %s122
      %128 = dma.hbm_to_vmem [thread:$0]  %s121, 16384, %s123, [#allocation11], 256, 256, 16
    $region65: #{grasp_cvae_forward.1} parent=1 // pred_fallthru
      _
    // Predicated region
    $region66: #{grasp_cvae_forward.1} parent=1 // pred_check
      _
    $region67: #{grasp_cvae_forward.1} parent=1 // pred_check_branch
      %130 = sbr.rel (0) target = $region69
    $region68: #{grasp_cvae_forward.1} parent=1 // pred_region
      _
    $region69: #{grasp_cvae_forward.1} parent=1 // pred_fallthru
      _
    // Predicated region
    $region70: #{grasp_cvae_forward.1} parent=1 // pred_check
      _
    $region71: #{grasp_cvae_forward.1} parent=1 // pred_check_branch
      %132 = sbr.rel (0) target = $region73
    $region72: #{grasp_cvae_forward.1} parent=1 // pred_region
      %134 = vsyncadd [#allocation11], 0
      %s135 = sshll.u32 %s17, 4
      %s136 = int_to_ptr.hbm [resolvable:$true] %s135
      %s137 = sshll.u32 [#allocation12], 4
      %s138 = int_to_ptr.vmem [resolvable:$true] %s137
      %143 = dma.hbm_to_vmem [thread:$0]  %s136, 8192, %s138, [#allocation11], 128, 128, 8
    $region73: #{grasp_cvae_forward.1} parent=1 // pred_fallthru
      _
    // Predicated region
    $region74: #{grasp_cvae_forward.1} parent=1 // pred_check
      _
    $region75: #{grasp_cvae_forward.1} parent=1 // pred_check_branch
      %145 = sbr.rel (0) target = $region77
    $region76: #{grasp_cvae_forward.1} parent=1 // pred_region
      %147 = vsyncadd [#allocation14], 0
      %s149 = sshll.u32 %s18, 4
      %s150 = int_to_ptr.hbm [resolvable:$true] %s149
      %s151 = sshll.u32 [#allocation13], 4
      %s152 = int_to_ptr.vmem [resolvable:$true] %s151
      %154 = dma.hbm_to_vmem [thread:$0]  %s150, 32, %s152, [#allocation14]
    $region77: #{grasp_cvae_forward.1} parent=1 // pred_fallthru
      _
    // Predicated region
    $region78: #{grasp_cvae_forward.1} parent=1 // pred_check
      _
    $region79: #{grasp_cvae_forward.1} parent=1 // pred_check_branch
      %156 = sbr.rel (0) target = $region81
    $region80: #{grasp_cvae_forward.1} parent=1 // pred_region
      _
    $region81: #{grasp_cvae_forward.1} parent=1 // pred_fallthru
      _
    // Predicated region
    $region82: #{grasp_cvae_forward.1} parent=1 // pred_check
      _
    $region83: #{grasp_cvae_forward.1} parent=1 // pred_check_branch
      %158 = sbr.rel (0) target = $region85
    $region84: #{grasp_cvae_forward.1} parent=1 // pred_region
      %160 = vsyncadd [#allocation14], 0
      %s162 = sshll.u32 %s20, 4
      %s163 = int_to_ptr.hbm [resolvable:$true] %s162
      %s164 = sshll.u32 [#allocation15], 4
      %s165 = int_to_ptr.vmem [resolvable:$true] %s164
      %167 = dma.hbm_to_vmem [thread:$0]  %s163, 16, %s165, [#allocation14]
    $region85: #{grasp_cvae_forward.1} parent=1 // pred_fallthru
      _
    // Predicated region
    $region86: #{grasp_cvae_forward.1} parent=1 // pred_check
      _
    $region87: #{grasp_cvae_forward.1} parent=1 // pred_check_branch
      %169 = sbr.rel (0) target = $region89
    $region88: #{grasp_cvae_forward.1} parent=1 // pred_region
      %171 = dma.done [#allocation3], 16384
    $region89: #{grasp_cvae_forward.1} parent=1 // pred_fallthru
      _
    // Predicated region
    $region90: #{grasp_cvae_forward.1} parent=1 // pred_check
      _
    $region91: #{grasp_cvae_forward.1} parent=1 // pred_check_branch
      %173 = sbr.rel (0) target = $region93
    $region92: #{grasp_cvae_forward.1} parent=1 // pred_region
      %175 = dma.done [#allocation5], 16384
    $region93: #{grasp_cvae_forward.1} parent=1 // pred_fallthru
      _
    // Predicated region
    $region94: #{grasp_cvae_forward.1} parent=1 // pred_check
      _
    $region95: #{grasp_cvae_forward.1} parent=1 // pred_check_branch
      %177 = sbr.rel (0) target = $region97
    $region96: #{grasp_cvae_forward.1} parent=1 // pred_region
      %179 = dma.done [#allocation5], 8192
    $region97: #{grasp_cvae_forward.1} parent=1 // pred_fallthru
      _
    // Predicated region
    $region98: #{grasp_cvae_forward.1} parent=1 // pred_check
      _
    $region99: #{grasp_cvae_forward.1} parent=1 // pred_check_branch
      %181 = sbr.rel (0) target = $region101
    $region100: #{grasp_cvae_forward.1} parent=1 // pred_region
      %183 = dma.done [#allocation8], 2048
    $region101: #{grasp_cvae_forward.1} parent=1 // pred_fallthru
      _
    // Predicated region
    $region102: #{grasp_cvae_forward.1} parent=1 // pred_check
      _
    $region103: #{grasp_cvae_forward.1} parent=1 // pred_check_branch
      %185 = sbr.rel (0) target = $region105
    $region104: #{grasp_cvae_forward.1} parent=1 // pred_region
      %187 = dma.done [#allocation8], 2048
    $region105: #{grasp_cvae_forward.1} parent=1 // pred_fallthru
      _
    // Predicated region
    $region106: #{grasp_cvae_forward.1} parent=1 // pred_check
      _
    $region107: #{grasp_cvae_forward.1} parent=1 // pred_check_branch
      %189 = sbr.rel (0) target = $region109
    $region108: #{grasp_cvae_forward.1} parent=1 // pred_region
      %191 = dma.done [#allocation11], 16384
    $region109: #{grasp_cvae_forward.1} parent=1 // pred_fallthru
      _
    // Predicated region
    $region110: #{grasp_cvae_forward.1} parent=1 // pred_check
      _
    $region111: #{grasp_cvae_forward.1} parent=1 // pred_check_branch
      %193 = sbr.rel (0) target = $region113
    $region112: #{grasp_cvae_forward.1} parent=1 // pred_region
      %195 = dma.done [#allocation11], 8192
    $region113: #{grasp_cvae_forward.1} parent=1 // pred_fallthru
      _
    // Predicated region
    $region114: #{grasp_cvae_forward.1} parent=1 // pred_check
      _
    $region115: #{grasp_cvae_forward.1} parent=1 // pred_check_branch
      %197 = sbr.rel (0) target = $region117
    $region116: #{grasp_cvae_forward.1} parent=1 // pred_region
      %199 = dma.done [#allocation14], 32
    $region117: #{grasp_cvae_forward.1} parent=1 // pred_fallthru
      _
    // Predicated region
    $region118: #{grasp_cvae_forward.1} parent=1 // pred_check
      _
    $region119: #{grasp_cvae_forward.1} parent=1 // pred_check_branch
      %201 = sbr.rel (0) target = $region121
    $region120: #{grasp_cvae_forward.1} parent=1 // pred_region
      %203 = dma.done [#allocation14], 16
    $region121: #{grasp_cvae_forward.1} parent=1 // pred_fallthru
      _
    %v205 = vld [vmem:[%s0] sm:$0x3]
    %v206 = vld [vmem:[%s1] sm:$0xff]
    %v207 = vld [vmem:[%s2] sm:$0x3]
    %v208 = vld [vmem:[%s3] sm:$0xf]
    %v209 = vld [vmem:[%s3 + $0x4] sm:$0x3]
    %v210 = vpack.c.bf16 %v205, %v205
    %v211 = vld [vmem:[%s4] sm:$0x1]
    %v213 = vperm.slane %v211, 0
    %v217 = vunpack.c.l.b16 %v208
    %v218 = vunpack.c.l.b16 %v209
    %v219 = vpack.c.b16 %v218, %v217
    %vm220 = vcmask 97280
    %v222 = vsel %vm220, %v210, 0
    %vm224 = vcmask 1045504
    %v226 = vsel %vm224, %v219, 0
    %228 = vmatpush.bf16.msra.mxu0 0
    %229 = vmatpush.bf16.msra.mxu0 0
    %230 = vmatpush.bf16.msra.mxu0 0
    %231 = vmatpush.bf16.msra.mxu0 0
    %232 = vmatpush.bf16.msra.mxu0 0
    %233 = vmatpush.bf16.msra.mxu0 0
    %234 = vmatpush.bf16.msra.mxu0 0
    %235 = vmatpush.bf16.msra.mxu0 %v226
    %236 = vmatmul.bf16.gmra.mxu0 %v222
    %v237 = vpop.f32.mrf.mxu0
    %v238 = vadd.f32 %v213, %v237
    %v239 = vpop.f32.mrf.mxu0
    %240 = vdwg.mxu0
    %v241 = vmax.f32 %v238, 0.0
    %v242 = vld [vmem:[%s5] sm:$0xff]
    %v243 = vld [vmem:[%s5 + $0x8] sm:$0xff]
    %v244 = vld [vmem:[%s5 + $0x10] sm:$0xff]
    %v245 = vld [vmem:[%s5 + $0x18] sm:$0xff]
    %v246 = vld [vmem:[%s5 + $0x20] sm:$0xff]
    %v247 = vld [vmem:[%s5 + $0x28] sm:$0xff]
    %v248 = vld [vmem:[%s5 + $0x30] sm:$0xff]
    %v249 = vld [vmem:[%s5 + $0x38] sm:$0xff]
    %v250 = vld [vmem:[%s5 + $0x40] sm:$0xff]
    %v251 = vld [vmem:[%s5 + $0x48] sm:$0xff]
    %v252 = vld [vmem:[%s5 + $0x50] sm:$0xff]
    %v253 = vld [vmem:[%s5 + $0x58] sm:$0xff]
    %v254 = vld [vmem:[%s5 + $0x60] sm:$0xff]
    %v255 = vld [vmem:[%s5 + $0x68] sm:$0xff]
    %v256 = vld [vmem:[%s5 + $0x70] sm:$0xff]
    %v257 = vld [vmem:[%s5 + $0x78] sm:$0xff]
    %v258 = vpack.c.bf16 %v241, %v241
    %v259 = vld [vmem:[%s6] sm:$0xf]
    %v261 = vperm.slane %v259, 0
    %v262 = vperm.slane %v259, 1
    %v263 = vperm.slane %v259, 2
    %v264 = vperm.slane %v259, 3
    %v285 = vunpack.c.l.b16 %v242
    %v286 = vunpack.c.h.b16 %v242
    %v287 = vunpack.c.l.b16 %v243
    %v288 = vunpack.c.h.b16 %v243
    %v289 = vunpack.c.l.b16 %v244
    %v290 = vunpack.c.h.b16 %v244
    %v291 = vunpack.c.l.b16 %v245
    %v292 = vunpack.c.h.b16 %v245
    %v293 = vunpack.c.l.b16 %v246
    %v294 = vunpack.c.h.b16 %v246
    %v295 = vunpack.c.l.b16 %v247
    %v296 = vunpack.c.h.b16 %v247
    %v297 = vunpack.c.l.b16 %v248
    %v298 = vunpack.c.h.b16 %v248
    %v299 = vunpack.c.l.b16 %v249
    %v300 = vunpack.c.h.b16 %v249
    %v301 = vunpack.c.l.b16 %v250
    %v302 = vunpack.c.h.b16 %v250
    %v303 = vunpack.c.l.b16 %v251
    %v304 = vunpack.c.h.b16 %v251
    %v305 = vunpack.c.l.b16 %v252
    %v306 = vunpack.c.h.b16 %v252
    %v307 = vunpack.c.l.b16 %v253
    %v308 = vunpack.c.h.b16 %v253
    %v309 = vunpack.c.l.b16 %v254
    %v310 = vunpack.c.h.b16 %v254
    %v311 = vunpack.c.l.b16 %v255
    %v312 = vunpack.c.h.b16 %v255
    %v313 = vunpack.c.l.b16 %v256
    %v314 = vunpack.c.h.b16 %v256
    %v315 = vunpack.c.l.b16 %v257
    %v316 = vunpack.c.h.b16 %v257
    %v317 = vpack.c.b16 %v289, %v285
    %v318 = vpack.c.b16 %v290, %v286
    %v319 = vpack.c.b16 %v291, %v287
    %v320 = vpack.c.b16 %v292, %v288
    %v321 = vpack.c.b16 %v297, %v293
    %v322 = vpack.c.b16 %v298, %v294
    %v323 = vpack.c.b16 %v299, %v295
    %v324 = vpack.c.b16 %v300, %v296
    %v325 = vpack.c.b16 %v305, %v301
    %v326 = vpack.c.b16 %v306, %v302
    %v327 = vpack.c.b16 %v307, %v303
    %v328 = vpack.c.b16 %v308, %v304
    %v329 = vpack.c.b16 %v313, %v309
    %v330 = vpack.c.b16 %v314, %v310
    %v331 = vpack.c.b16 %v315, %v311
    %v332 = vpack.c.b16 %v316, %v312
    %vm349 = vcmask 523264
    %v351 = vsel %vm349, %v258, 0
    %353 = vmatpush.bf16.msra.mxu0 0
    %354 = vmatpush.bf16.msra.mxu0 0
    %355 = vmatpush.bf16.msra.mxu0 0
    %356 = vmatpush.bf16.msra.mxu0 0
    %357 = vmatpush.bf16.msra.mxu0 %v329
    %358 = vmatpush.bf16.msra.mxu0 %v325
    %359 = vmatpush.bf16.msra.mxu0 %v321
    %360 = vmatpush.bf16.msra.mxu0 %v317
    %361 = vmatmul.bf16.gmra.mxu0 %v351
    %v362 = vpop.f32.mrf.mxu0
    %v363 = vadd.f32 %v261, %v362
    %v364 = vpop.f32.mrf.mxu0
    %365 = vdwg.mxu0
    %366 = vmatpush.bf16.msra.mxu0 0
    %367 = vmatpush.bf16.msra.mxu0 0
    %368 = vmatpush.bf16.msra.mxu0 0
    %369 = vmatpush.bf16.msra.mxu0 0
    %370 = vmatpush.bf16.msra.mxu0 %v330
    %371 = vmatpush.bf16.msra.mxu0 %v326
    %372 = vmatpush.bf16.msra.mxu0 %v322
    %373 = vmatpush.bf16.msra.mxu0 %v318
    %374 = vmatmul.bf16.gmra.mxu0 %v351
    %v375 = vpop.f32.mrf.mxu0
    %v376 = vadd.f32 %v262, %v375
    %v377 = vpop.f32.mrf.mxu0
    %378 = vdwg.mxu0
    %379 = vmatpush.bf16.msra.mxu0 0
    %380 = vmatpush.bf16.msra.mxu0 0
    %381 = vmatpush.bf16.msra.mxu0 0
    %382 = vmatpush.bf16.msra.mxu0 0
    %383 = vmatpush.bf16.msra.mxu0 %v331
    %384 = vmatpush.bf16.msra.mxu0 %v327
    %385 = vmatpush.bf16.msra.mxu0 %v323
    %386 = vmatpush.bf16.msra.mxu0 %v319
    %387 = vmatmul.bf16.gmra.mxu0 %v351
    %v388 = vpop.f32.mrf.mxu0
    %v389 = vadd.f32 %v263, %v388
    %v390 = vpop.f32.mrf.mxu0
    %391 = vdwg.mxu0
    %392 = vmatpush.bf16.msra.mxu0 0
    %393 = vmatpush.bf16.msra.mxu0 0
    %394 = vmatpush.bf16.msra.mxu0 0
    %395 = vmatpush.bf16.msra.mxu0 0
    %396 = vmatpush.bf16.msra.mxu0 %v332
    %397 = vmatpush.bf16.msra.mxu0 %v328
    %398 = vmatpush.bf16.msra.mxu0 %v324
    %399 = vmatpush.bf16.msra.mxu0 %v320
    %400 = vmatmul.bf16.gmra.mxu0 %v351
    %v401 = vpop.f32.mrf.mxu0
    %v402 = vadd.f32 %v264, %v401
    %v403 = vpop.f32.mrf.mxu0
    %404 = vdwg.mxu0
    %v405 = vld [vmem:[#allocation2] sm:$0xff]
    %v406 = vld [vmem:[#allocation2 + $0x8] sm:$0xff]
    %v407 = vld [vmem:[#allocation2 + $0x10] sm:$0xff]
    %v408 = vld [vmem:[#allocation2 + $0x18] sm:$0xff]
    %v409 = vld [vmem:[#allocation2 + $0x20] sm:$0xff]
    %v410 = vld [vmem:[#allocation2 + $0x28] sm:$0xff]
    %v411 = vld [vmem:[#allocation2 + $0x30] sm:$0xff]
    %v412 = vld [vmem:[#allocation2 + $0x38] sm:$0xff]
    %v413 = vld [vmem:[#allocation2 + $0x40] sm:$0xff]
    %v414 = vld [vmem:[#allocation2 + $0x48] sm:$0xff]
    %v415 = vld [vmem:[#allocation2 + $0x50] sm:$0xff]
    %v416 = vld [vmem:[#allocation2 + $0x58] sm:$0xff]
    %v417 = vld [vmem:[#allocation2 + $0x60] sm:$0xff]
    %v418 = vld [vmem:[#allocation2 + $0x68] sm:$0xff]
    %v419 = vld [vmem:[#allocation2 + $0x70] sm:$0xff]
    %v420 = vld [vmem:[#allocation2 + $0x78] sm:$0xff]
    %v421 = vld [vmem:[#allocation2 + $0x80] sm:$0xff]
    %v422 = vld [vmem:[#allocation2 + $0x88] sm:$0xff]
    %v423 = vld [vmem:[#allocation2 + $0x90] sm:$0xff]
    %v424 = vld [vmem:[#allocation2 + $0x98] sm:$0xff]
    %v425 = vld [vmem:[#allocation2 + $0xa0] sm:$0xff]
    %v426 = vld [vmem:[#allocation2 + $0xa8] sm:$0xff]
    %v427 = vld [vmem:[#allocation2 + $0xb0] sm:$0xff]
    %v428 = vld [vmem:[#allocation2 + $0xb8] sm:$0xff]
    %v429 = vld [vmem:[#allocation2 + $0xc0] sm:$0xff]
    %v430 = vld [vmem:[#allocation2 + $0xc8] sm:$0xff]
    %v431 = vld [vmem:[#allocation2 + $0xd0] sm:$0xff]
    %v432 = vld [vmem:[#allocation2 + $0xd8] sm:$0xff]
    %v433 = vld [vmem:[#allocation2 + $0xe0] sm:$0xff]
    %v434 = vld [vmem:[#allocation2 + $0xe8] sm:$0xff]
    %v435 = vld [vmem:[#allocation2 + $0xf0] sm:$0xff]
    %v436 = vld [vmem:[#allocation2 + $0xf8] sm:$0xff]
    %v437 = vld [vmem:[#allocation2 + $0x100] sm:$0xff]
    %v438 = vld [vmem:[#allocation2 + $0x108] sm:$0xff]
    %v439 = vld [vmem:[#allocation2 + $0x110] sm:$0xff]
    %v440 = vld [vmem:[#allocation2 + $0x118] sm:$0xff]
    %v441 = vld [vmem:[#allocation2 + $0x120] sm:$0xff]
    %v442 = vld [vmem:[#allocation2 + $0x128] sm:$0xff]
    %v443 = vld [vmem:[#allocation2 + $0x130] sm:$0xff]
    %v444 = vld [vmem:[#allocation2 + $0x138] sm:$0xff]
    %v445 = vld [vmem:[#allocation2 + $0x140] sm:$0xff]
    %v446 = vld [vmem:[#allocation2 + $0x148] sm:$0xff]
    %v447 = vld [vmem:[#allocation2 + $0x150] sm:$0xff]
    %v448 = vld [vmem:[#allocation2 + $0x158] sm:$0xff]
    %v449 = vld [vmem:[#allocation2 + $0x160] sm:$0xff]
    %v450 = vld [vmem:[#allocation2 + $0x168] sm:$0xff]
    %v451 = vld [vmem:[#allocation2 + $0x170] sm:$0xff]
    %v452 = vld [vmem:[#allocation2 + $0x178] sm:$0xff]
    %v453 = vld [vmem:[#allocation2 + $0x180] sm:$0xff]
    %v454 = vld [vmem:[#allocation2 + $0x188] sm:$0xff]
    %v455 = vld [vmem:[#allocation2 + $0x190] sm:$0xff]
    %v456 = vld [vmem:[#allocation2 + $0x198] sm:$0xff]
    %v457 = vld [vmem:[#allocation2 + $0x1a0] sm:$0xff]
    %v458 = vld [vmem:[#allocation2 + $0x1a8] sm:$0xff]
    %v459 = vld [vmem:[#allocation2 + $0x1b0] sm:$0xff]
    %v460 = vld [vmem:[#allocation2 + $0x1b8] sm:$0xff]
    %v461 = vld [vmem:[#allocation2 + $0x1c0] sm:$0xff]
    %v462 = vld [vmem:[#allocation2 + $0x1c8] sm:$0xff]
    %v463 = vld [vmem:[#allocation2 + $0x1d0] sm:$0xff]
    %v464 = vld [vmem:[#allocation2 + $0x1d8] sm:$0xff]
    %v465 = vld [vmem:[#allocation2 + $0x1e0] sm:$0xff]
    %v466 = vld [vmem:[#allocation2 + $0x1e8] sm:$0xff]
    %v467 = vld [vmem:[#allocation2 + $0x1f0] sm:$0xff]
    %v468 = vld [vmem:[#allocation2 + $0x1f8] sm:$0xff]
    %v469 = vld [vmem:[#allocation2 + $0x200] sm:$0xff]
    %v470 = vld [vmem:[#allocation2 + $0x208] sm:$0xff]
    %v471 = vld [vmem:[#allocation2 + $0x210] sm:$0xff]
    %v472 = vld [vmem:[#allocation2 + $0x218] sm:$0xff]
    %v473 = vld [vmem:[#allocation2 + $0x220] sm:$0xff]
    %v474 = vld [vmem:[#allocation2 + $0x228] sm:$0xff]
    %v475 = vld [vmem:[#allocation2 + $0x230] sm:$0xff]
    %v476 = vld [vmem:[#allocation2 + $0x238] sm:$0xff]
    %v477 = vld [vmem:[#allocation2 + $0x240] sm:$0xff]
    %v478 = vld [vmem:[#allocation2 + $0x248] sm:$0xff]
    %v479 = vld [vmem:[#allocation2 + $0x250] sm:$0xff]
    %v480 = vld [vmem:[#allocation2 + $0x258] sm:$0xff]
    %v481 = vld [vmem:[#allocation2 + $0x260] sm:$0xff]
    %v482 = vld [vmem:[#allocation2 + $0x268] sm:$0xff]
    %v483 = vld [vmem:[#allocation2 + $0x270] sm:$0xff]
    %v484 = vld [vmem:[#allocation2 + $0x278] sm:$0xff]
    %v485 = vld [vmem:[#allocation2 + $0x280] sm:$0xff]
    %v486 = vld [vmem:[#allocation2 + $0x288] sm:$0xff]
    %v487 = vld [vmem:[#allocation2 + $0x290] sm:$0xff]
    %v488 = vld [vmem:[#allocation2 + $0x298] sm:$0xff]
    %v489 = vld [vmem:[#allocation2 + $0x2a0] sm:$0xff]
    %v490 = vld [vmem:[#allocation2 + $0x2a8] sm:$0xff]
    %v491 = vld [vmem:[#allocation2 + $0x2b0] sm:$0xff]
    %v492 = vld [vmem:[#allocation2 + $0x2b8] sm:$0xff]
    %v493 = vld [vmem:[#allocation2 + $0x2c0] sm:$0xff]
    %v494 = vld [vmem:[#allocation2 + $0x2c8] sm:$0xff]
    %v495 = vld [vmem:[#allocation2 + $0x2d0] sm:$0xff]
    %v496 = vld [vmem:[#allocation2 + $0x2d8] sm:$0xff]
    %v497 = vld [vmem:[#allocation2 + $0x2e0] sm:$0xff]
    %v498 = vld [vmem:[#allocation2 + $0x2e8] sm:$0xff]
    %v499 = vld [vmem:[#allocation2 + $0x2f0] sm:$0xff]
    %v500 = vld [vmem:[#allocation2 + $0x2f8] sm:$0xff]
    %v501 = vld [vmem:[#allocation2 + $0x300] sm:$0xff]
    %v502 = vld [vmem:[#allocation2 + $0x308] sm:$0xff]
    %v503 = vld [vmem:[#allocation2 + $0x310] sm:$0xff]
    %v504 = vld [vmem:[#allocation2 + $0x318] sm:$0xff]
    %v505 = vld [vmem:[#allocation2 + $0x320] sm:$0xff]
    %v506 = vld [vmem:[#allocation2 + $0x328] sm:$0xff]
    %v507 = vld [vmem:[#allocation2 + $0x330] sm:$0xff]
    %v508 = vld [vmem:[#allocation2 + $0x338] sm:$0xff]
    %v509 = vld [vmem:[#allocation2 + $0x340] sm:$0xff]
    %v510 = vld [vmem:[#allocation2 + $0x348] sm:$0xff]
    %v511 = vld [vmem:[#allocation2 + $0x350] sm:$0xff]
    %v512 = vld [vmem:[#allocation2 + $0x358] sm:$0xff]
    %v513 = vld [vmem:[#allocation2 + $0x360] sm:$0xff]
    %v514 = vld [vmem:[#allocation2 + $0x368] sm:$0xff]
    %v515 = vld [vmem:[#allocation2 + $0x370] sm:$0xff]
    %v516 = vld [vmem:[#allocation2 + $0x378] sm:$0xff]
    %v517 = vld [vmem:[#allocation2 + $0x380] sm:$0xff]
    %v518 = vld [vmem:[#allocation2 + $0x388] sm:$0xff]
    %v519 = vld [vmem:[#allocation2 + $0x390] sm:$0xff]
    %v520 = vld [vmem:[#allocation2 + $0x398] sm:$0xff]
    %v521 = vld [vmem:[#allocation2 + $0x3a0] sm:$0xff]
    %v522 = vld [vmem:[#allocation2 + $0x3a8] sm:$0xff]
    %v523 = vld [vmem:[#allocation2 + $0x3b0] sm:$0xff]
    %v524 = vld [vmem:[#allocation2 + $0x3b8] sm:$0xff]
    %v525 = vld [vmem:[#allocation2 + $0x3c0] sm:$0xff]
    %v526 = vld [vmem:[#allocation2 + $0x3c8] sm:$0xff]
    %v527 = vld [vmem:[#allocation2 + $0x3d0] sm:$0xff]
    %v528 = vld [vmem:[#allocation2 + $0x3d8] sm:$0xff]
    %v529 = vld [vmem:[#allocation2 + $0x3e0] sm:$0xff]
    %v530 = vld [vmem:[#allocation2 + $0x3e8] sm:$0xff]
    %v531 = vld [vmem:[#allocation2 + $0x3f0] sm:$0xff]
    %v532 = vld [vmem:[#allocation2 + $0x3f8] sm:$0xff]
    %v533 = vpack.c.bf16 %v363, %v363
    %v534 = vpack.c.bf16 %v376, %v376
    %v535 = vpack.c.bf16 %v389, %v389
    %v536 = vpack.c.bf16 %v402, %v402
    %v537 = vld [vmem:[#allocation4] sm:$0xff]
    %v538 = vld [vmem:[#allocation4 + $0x8] sm:$0xff]
    %v539 = vld [vmem:[#allocation4 + $0x10] sm:$0xff]
    %v540 = vld [vmem:[#allocation4 + $0x18] sm:$0xff]
    %v541 = vld [vmem:[#allocation4 + $0x20] sm:$0xff]
    %v542 = vld [vmem:[#allocation4 + $0x28] sm:$0xff]
    %v543 = vld [vmem:[#allocation4 + $0x30] sm:$0xff]
    %v544 = vld [vmem:[#allocation4 + $0x38] sm:$0xff]
    %v545 = vld [vmem:[#allocation4 + $0x40] sm:$0xff]
    %v546 = vld [vmem:[#allocation4 + $0x48] sm:$0xff]
    %v547 = vld [vmem:[#allocation4 + $0x50] sm:$0xff]
    %v548 = vld [vmem:[#allocation4 + $0x58] sm:$0xff]
    %v549 = vld [vmem:[#allocation4 + $0x60] sm:$0xff]
    %v550 = vld [vmem:[#allocation4 + $0x68] sm:$0xff]
    %v551 = vld [vmem:[#allocation4 + $0x70] sm:$0xff]
    %v552 = vld [vmem:[#allocation4 + $0x78] sm:$0xff]
    %v553 = vld [vmem:[#allocation4 + $0x80] sm:$0xff]
    %v554 = vld [vmem:[#allocation4 + $0x88] sm:$0xff]
    %v555 = vld [vmem:[#allocation4 + $0x90] sm:$0xff]
    %v556 = vld [vmem:[#allocation4 + $0x98] sm:$0xff]
    %v557 = vld [vmem:[#allocation4 + $0xa0] sm:$0xff]
    %v558 = vld [vmem:[#allocation4 + $0xa8] sm:$0xff]
    %v559 = vld [vmem:[#allocation4 + $0xb0] sm:$0xff]
    %v560 = vld [vmem:[#allocation4 + $0xb8] sm:$0xff]
    %v561 = vld [vmem:[#allocation4 + $0xc0] sm:$0xff]
    %v562 = vld [vmem:[#allocation4 + $0xc8] sm:$0xff]
    %v563 = vld [vmem:[#allocation4 + $0xd0] sm:$0xff]
    %v564 = vld [vmem:[#allocation4 + $0xd8] sm:$0xff]
    %v565 = vld [vmem:[#allocation4 + $0xe0] sm:$0xff]
    %v566 = vld [vmem:[#allocation4 + $0xe8] sm:$0xff]
    %v567 = vld [vmem:[#allocation4 + $0xf0] sm:$0xff]
    %v568 = vld [vmem:[#allocation4 + $0xf8] sm:$0xff]
    %v569 = vld [vmem:[#allocation4 + $0x100] sm:$0xff]
    %v570 = vld [vmem:[#allocation4 + $0x108] sm:$0xff]
    %v571 = vld [vmem:[#allocation4 + $0x110] sm:$0xff]
    %v572 = vld [vmem:[#allocation4 + $0x118] sm:$0xff]
    %v573 = vld [vmem:[#allocation4 + $0x120] sm:$0xff]
    %v574 = vld [vmem:[#allocation4 + $0x128] sm:$0xff]
    %v575 = vld [vmem:[#allocation4 + $0x130] sm:$0xff]
    %v576 = vld [vmem:[#allocation4 + $0x138] sm:$0xff]
    %v577 = vld [vmem:[#allocation4 + $0x140] sm:$0xff]
    %v578 = vld [vmem:[#allocation4 + $0x148] sm:$0xff]
    %v579 = vld [vmem:[#allocation4 + $0x150] sm:$0xff]
    %v580 = vld [vmem:[#allocation4 + $0x158] sm:$0xff]
    %v581 = vld [vmem:[#allocation4 + $0x160] sm:$0xff]
    %v582 = vld [vmem:[#allocation4 + $0x168] sm:$0xff]
    %v583 = vld [vmem:[#allocation4 + $0x170] sm:$0xff]
    %v584 = vld [vmem:[#allocation4 + $0x178] sm:$0xff]
    %v585 = vld [vmem:[#allocation4 + $0x180] sm:$0xff]
    %v586 = vld [vmem:[#allocation4 + $0x188] sm:$0xff]
    %v587 = vld [vmem:[#allocation4 + $0x190] sm:$0xff]
    %v588 = vld [vmem:[#allocation4 + $0x198] sm:$0xff]
    %v589 = vld [vmem:[#allocation4 + $0x1a0] sm:$0xff]
    %v590 = vld [vmem:[#allocation4 + $0x1a8] sm:$0xff]
    %v591 = vld [vmem:[#allocation4 + $0x1b0] sm:$0xff]
    %v592 = vld [vmem:[#allocation4 + $0x1b8] sm:$0xff]
    %v593 = vld [vmem:[#allocation4 + $0x1c0] sm:$0xff]
    %v594 = vld [vmem:[#allocation4 + $0x1c8] sm:$0xff]
    %v595 = vld [vmem:[#allocation4 + $0x1d0] sm:$0xff]
    %v596 = vld [vmem:[#allocation4 + $0x1d8] sm:$0xff]
    %v597 = vld [vmem:[#allocation4 + $0x1e0] sm:$0xff]
    %v598 = vld [vmem:[#allocation4 + $0x1e8] sm:$0xff]
    %v599 = vld [vmem:[#allocation4 + $0x1f0] sm:$0xff]
    %v600 = vld [vmem:[#allocation4 + $0x1f8] sm:$0xff]
    %v601 = vld [vmem:[#allocation4 + $0x200] sm:$0xff]
    %v602 = vld [vmem:[#allocation4 + $0x208] sm:$0xff]
    %v603 = vld [vmem:[#allocation4 + $0x210] sm:$0xff]
    %v604 = vld [vmem:[#allocation4 + $0x218] sm:$0xff]
    %v605 = vld [vmem:[#allocation4 + $0x220] sm:$0xff]
    %v606 = vld [vmem:[#allocation4 + $0x228] sm:$0xff]
    %v607 = vld [vmem:[#allocation4 + $0x230] sm:$0xff]
    %v608 = vld [vmem:[#allocation4 + $0x238] sm:$0xff]
    %v609 = vld [vmem:[#allocation4 + $0x240] sm:$0xff]
    %v610 = vld [vmem:[#allocation4 + $0x248] sm:$0xff]
    %v611 = vld [vmem:[#allocation4 + $0x250] sm:$0xff]
    %v612 = vld [vmem:[#allocation4 + $0x258] sm:$0xff]
    %v613 = vld [vmem:[#allocation4 + $0x260] sm:$0xff]
    %v614 = vld [vmem:[#allocation4 + $0x268] sm:$0xff]
    %v615 = vld [vmem:[#allocation4 + $0x270] sm:$0xff]
    %v616 = vld [vmem:[#allocation4 + $0x278] sm:$0xff]
    %v617 = vld [vmem:[#allocation4 + $0x280] sm:$0xff]
    %v618 = vld [vmem:[#allocation4 + $0x288] sm:$0xff]
    %v619 = vld [vmem:[#allocation4 + $0x290] sm:$0xff]
    %v620 = vld [vmem:[#allocation4 + $0x298] sm:$0xff]
    %v621 = vld [vmem:[#allocation4 + $0x2a0] sm:$0xff]
    %v622 = vld [vmem:[#allocation4 + $0x2a8] sm:$0xff]
    %v623 = vld [vmem:[#allocation4 + $0x2b0] sm:$0xff]
    %v624 = vld [vmem:[#allocation4 + $0x2b8] sm:$0xff]
    %v625 = vld [vmem:[#allocation4 + $0x2c0] sm:$0xff]
    %v626 = vld [vmem:[#allocation4 + $0x2c8] sm:$0xff]
    %v627 = vld [vmem:[#allocation4 + $0x2d0] sm:$0xff]
    %v628 = vld [vmem:[#allocation4 + $0x2d8] sm:$0xff]
    %v629 = vld [vmem:[#allocation4 + $0x2e0] sm:$0xff]
    %v630 = vld [vmem:[#allocation4 + $0x2e8] sm:$0xff]
    %v631 = vld [vmem:[#allocation4 + $0x2f0] sm:$0xff]
    %v632 = vld [vmem:[#allocation4 + $0x2f8] sm:$0xff]
    %v633 = vld [vmem:[#allocation4 + $0x300] sm:$0xff]
    %v634 = vld [vmem:[#allocation4 + $0x308] sm:$0xff]
    %v635 = vld [vmem:[#allocation4 + $0x310] sm:$0xff]
    %v636 = vld [vmem:[#allocation4 + $0x318] sm:$0xff]
    %v637 = vld [vmem:[#allocation4 + $0x320] sm:$0xff]
    %v638 = vld [vmem:[#allocation4 + $0x328] sm:$0xff]
    %v639 = vld [vmem:[#allocation4 + $0x330] sm:$0xff]
    %v640 = vld [vmem:[#allocation4 + $0x338] sm:$0xff]
    %v641 = vld [vmem:[#allocation4 + $0x340] sm:$0xff]
    %v642 = vld [vmem:[#allocation4 + $0x348] sm:$0xff]
    %v643 = vld [vmem:[#allocation4 + $0x350] sm:$0xff]
    %v644 = vld [vmem:[#allocation4 + $0x358] sm:$0xff]
    %v645 = vld [vmem:[#allocation4 + $0x360] sm:$0xff]
    %v646 = vld [vmem:[#allocation4 + $0x368] sm:$0xff]
    %v647 = vld [vmem:[#allocation4 + $0x370] sm:$0xff]
    %v648 = vld [vmem:[#allocation4 + $0x378] sm:$0xff]
    %v649 = vld [vmem:[#allocation4 + $0x380] sm:$0xff]
    %v650 = vld [vmem:[#allocation4 + $0x388] sm:$0xff]
    %v651 = vld [vmem:[#allocation4 + $0x390] sm:$0xff]
    %v652 = vld [vmem:[#allocation4 + $0x398] sm:$0xff]
    %v653 = vld [vmem:[#allocation4 + $0x3a0] sm:$0xff]
    %v654 = vld [vmem:[#allocation4 + $0x3a8] sm:$0xff]
    %v655 = vld [vmem:[#allocation4 + $0x3b0] sm:$0xff]
    %v656 = vld [vmem:[#allocation4 + $0x3b8] sm:$0xff]
    %v657 = vld [vmem:[#allocation4 + $0x3c0] sm:$0xff]
    %v658 = vld [vmem:[#allocation4 + $0x3c8] sm:$0xff]
    %v659 = vld [vmem:[#allocation4 + $0x3d0] sm:$0xff]
    %v660 = vld [vmem:[#allocation4 + $0x3d8] sm:$0xff]
    %v661 = vld [vmem:[#allocation4 + $0x3e0] sm:$0xff]
    %v662 = vld [vmem:[#allocation4 + $0x3e8] sm:$0xff]
    %v663 = vld [vmem:[#allocation4 + $0x3f0] sm:$0xff]
    %v664 = vld [vmem:[#allocation4 + $0x3f8] sm:$0xff]
    %666 = vst [vmem:[#allocation1] ss:$4 sm:$0xff] %v206
    %v667 = vld.sshfl [vmem:[#allocation1] sm:$0xff pattern:$0x73625140]
    %v668 = vld.sshfl [vmem:[#allocation1 + $0x8] sm:$0xff pattern:$0x73625140]
    %v669 = vld.sshfl [vmem:[#allocation1 + $0x10] sm:$0xff pattern:$0x73625140]
    %v670 = vld.sshfl [vmem:[#allocation1 + $0x18] sm:$0xff pattern:$0x73625140]
    %v675 = vpack.c.bf16 %v667, %v667
    %v676 = vpack.c.bf16 %v668, %v668
    %v677 = vpack.c.bf16 %v669, %v669
    %v678 = vpack.c.bf16 %v670, %v670
    %v807 = vunpack.c.l.b16 %v537
    %v808 = vunpack.c.h.b16 %v537
    %v809 = vunpack.c.l.b16 %v538
    %v810 = vunpack.c.h.b16 %v538
    %v811 = vunpack.c.l.b16 %v539
    %v812 = vunpack.c.h.b16 %v539
    %v813 = vunpack.c.l.b16 %v540
    %v814 = vunpack.c.h.b16 %v540
    %v815 = vunpack.c.l.b16 %v541
    %v816 = vunpack.c.h.b16 %v541
    %v817 = vunpack.c.l.b16 %v542
    %v818 = vunpack.c.h.b16 %v542
    %v819 = vunpack.c.l.b16 %v543
    %v820 = vunpack.c.h.b16 %v543
    %v821 = vunpack.c.l.b16 %v544
    %v822 = vunpack.c.h.b16 %v544
    %v823 = vunpack.c.l.b16 %v545
    %v824 = vunpack.c.h.b16 %v545
    %v825 = vunpack.c.l.b16 %v546
    %v826 = vunpack.c.h.b16 %v546
    %v827 = vunpack.c.l.b16 %v547
    %v828 = vunpack.c.h.b16 %v547
    %v829 = vunpack.c.l.b16 %v548
    %v830 = vunpack.c.h.b16 %v548
    %v831 = vunpack.c.l.b16 %v549
    %v832 = vunpack.c.h.b16 %v549
    %v833 = vunpack.c.l.b16 %v550
    %v834 = vunpack.c.h.b16 %v550
    %v835 = vunpack.c.l.b16 %v551
    %v836 = vunpack.c.h.b16 %v551
    %v837 = vunpack.c.l.b16 %v552
    %v838 = vunpack.c.h.b16 %v552
    %v839 = vunpack.c.l.b16 %v553
    %v840 = vunpack.c.h.b16 %v553
    %v841 = vunpack.c.l.b16 %v554
    %v842 = vunpack.c.h.b16 %v554
    %v843 = vunpack.c.l.b16 %v555
    %v844 = vunpack.c.h.b16 %v555
    %v845 = vunpack.c.l.b16 %v556
    %v846 = vunpack.c.h.b16 %v556
    %v847 = vunpack.c.l.b16 %v557
    %v848 = vunpack.c.h.b16 %v557
    %v849 = vunpack.c.l.b16 %v558
    %v850 = vunpack.c.h.b16 %v558
    %v851 = vunpack.c.l.b16 %v559
    %v852 = vunpack.c.h.b16 %v559
    %v853 = vunpack.c.l.b16 %v560
    %v854 = vunpack.c.h.b16 %v560
    %v855 = vunpack.c.l.b16 %v561
    %v856 = vunpack.c.h.b16 %v561
    %v857 = vunpack.c.l.b16 %v562
    %v858 = vunpack.c.h.b16 %v562
    %v859 = vunpack.c.l.b16 %v563
    %v860 = vunpack.c.h.b16 %v563
    %v861 = vunpack.c.l.b16 %v564
    %v862 = vunpack.c.h.b16 %v564
    %v863 = vunpack.c.l.b16 %v565
    %v864 = vunpack.c.h.b16 %v565
    %v865 = vunpack.c.l.b16 %v566
    %v866 = vunpack.c.h.b16 %v566
    %v867 = vunpack.c.l.b16 %v567
    %v868 = vunpack.c.h.b16 %v567
    %v869 = vunpack.c.l.b16 %v568
    %v870 = vunpack.c.h.b16 %v568
    %v871 = vunpack.c.l.b16 %v569
    %v872 = vunpack.c.h.b16 %v569
    %v873 = vunpack.c.l.b16 %v570
    %v874 = vunpack.c.h.b16 %v570
    %v875 = vunpack.c.l.b16 %v571
    %v876 = vunpack.c.h.b16 %v571
    %v877 = vunpack.c.l.b16 %v572
    %v878 = vunpack.c.h.b16 %v572
    %v879 = vunpack.c.l.b16 %v573
    %v880 = vunpack.c.h.b16 %v573
    %v881 = vunpack.c.l.b16 %v574
    %v882 = vunpack.c.h.b16 %v574
    %v883 = vunpack.c.l.b16 %v575
    %v884 = vunpack.c.h.b16 %v575
    %v885 = vunpack.c.l.b16 %v576
    %v886 = vunpack.c.h.b16 %v576
    %v887 = vunpack.c.l.b16 %v577
    %v888 = vunpack.c.h.b16 %v577
    %v889 = vunpack.c.l.b16 %v578
    %v890 = vunpack.c.h.b16 %v578
    %v891 = vunpack.c.l.b16 %v579
    %v892 = vunpack.c.h.b16 %v579
    %v893 = vunpack.c.l.b16 %v580
    %v894 = vunpack.c.h.b16 %v580
    %v895 = vunpack.c.l.b16 %v581
    %v896 = vunpack.c.h.b16 %v581
    %v897 = vunpack.c.l.b16 %v582
    %v898 = vunpack.c.h.b16 %v582
    %v899 = vunpack.c.l.b16 %v583
    %v900 = vunpack.c.h.b16 %v583
    %v901 = vunpack.c.l.b16 %v584
    %v902 = vunpack.c.h.b16 %v584
    %v903 = vunpack.c.l.b16 %v585
    %v904 = vunpack.c.h.b16 %v585
    %v905 = vunpack.c.l.b16 %v586
    %v906 = vunpack.c.h.b16 %v586
    %v907 = vunpack.c.l.b16 %v587
    %v908 = vunpack.c.h.b16 %v587
    %v909 = vunpack.c.l.b16 %v588
    %v910 = vunpack.c.h.b16 %v588
    %v911 = vunpack.c.l.b16 %v589
    %v912 = vunpack.c.h.b16 %v589
    %v913 = vunpack.c.l.b16 %v590
    %v914 = vunpack.c.h.b16 %v590
    %v915 = vunpack.c.l.b16 %v591
    %v916 = vunpack.c.h.b16 %v591
    %v917 = vunpack.c.l.b16 %v592
    %v918 = vunpack.c.h.b16 %v592
    %v919 = vunpack.c.l.b16 %v593
    %v920 = vunpack.c.h.b16 %v593
    %v921 = vunpack.c.l.b16 %v594
    %v922 = vunpack.c.h.b16 %v594
    %v923 = vunpack.c.l.b16 %v595
    %v924 = vunpack.c.h.b16 %v595
    %v925 = vunpack.c.l.b16 %v596
    %v926 = vunpack.c.h.b16 %v596
    %v927 = vunpack.c.l.b16 %v597
    %v928 = vunpack.c.h.b16 %v597
    %v929 = vunpack.c.l.b16 %v598
    %v930 = vunpack.c.h.b16 %v598
    %v931 = vunpack.c.l.b16 %v599
    %v932 = vunpack.c.h.b16 %v599
    %v933 = vunpack.c.l.b16 %v600
    %v934 = vunpack.c.h.b16 %v600
    %v935 = vunpack.c.l.b16 %v601
    %v936 = vunpack.c.h.b16 %v601
    %v937 = vunpack.c.l.b16 %v602
    %v938 = vunpack.c.h.b16 %v602
    %v939 = vunpack.c.l.b16 %v603
    %v940 = vunpack.c.h.b16 %v603
    %v941 = vunpack.c.l.b16 %v604
    %v942 = vunpack.c.h.b16 %v604
    %v943 = vunpack.c.l.b16 %v605
    %v944 = vunpack.c.h.b16 %v605
    %v945 = vunpack.c.l.b16 %v606
    %v946 = vunpack.c.h.b16 %v606
    %v947 = vunpack.c.l.b16 %v607
    %v948 = vunpack.c.h.b16 %v607
    %v949 = vunpack.c.l.b16 %v608
    %v950 = vunpack.c.h.b16 %v608
    %v951 = vunpack.c.l.b16 %v609
    %v952 = vunpack.c.h.b16 %v609
    %v953 = vunpack.c.l.b16 %v610
    %v954 = vunpack.c.h.b16 %v610
    %v955 = vunpack.c.l.b16 %v611
    %v956 = vunpack.c.h.b16 %v611
    %v957 = vunpack.c.l.b16 %v612
    %v958 = vunpack.c.h.b16 %v612
    %v959 = vunpack.c.l.b16 %v613
    %v960 = vunpack.c.h.b16 %v613
    %v961 = vunpack.c.l.b16 %v614
    %v962 = vunpack.c.h.b16 %v614
    %v963 = vunpack.c.l.b16 %v615
    %v964 = vunpack.c.h.b16 %v615
    %v965 = vunpack.c.l.b16 %v616
    %v966 = vunpack.c.h.b16 %v616
    %v967 = vunpack.c.l.b16 %v617
    %v968 = vunpack.c.h.b16 %v617
    %v969 = vunpack.c.l.b16 %v618
    %v970 = vunpack.c.h.b16 %v618
    %v971 = vunpack.c.l.b16 %v619
    %v972 = vunpack.c.h.b16 %v619
    %v973 = vunpack.c.l.b16 %v620
    %v974 = vunpack.c.h.b16 %v620
    %v975 = vunpack.c.l.b16 %v621
    %v976 = vunpack.c.h.b16 %v621
    %v977 = vunpack.c.l.b16 %v622
    %v978 = vunpack.c.h.b16 %v622
    %v979 = vunpack.c.l.b16 %v623
    %v980 = vunpack.c.h.b16 %v623
    %v981 = vunpack.c.l.b16 %v624
    %v982 = vunpack.c.h.b16 %v624
    %v983 = vunpack.c.l.b16 %v625
    %v984 = vunpack.c.h.b16 %v625
    %v985 = vunpack.c.l.b16 %v626
    %v986 = vunpack.c.h.b16 %v626
    %v987 = vunpack.c.l.b16 %v627
    %v988 = vunpack.c.h.b16 %v627
    %v989 = vunpack.c.l.b16 %v628
    %v990 = vunpack.c.h.b16 %v628
    %v991 = vunpack.c.l.b16 %v629
    %v992 = vunpack.c.h.b16 %v629
    %v993 = vunpack.c.l.b16 %v630
    %v994 = vunpack.c.h.b16 %v630
    %v995 = vunpack.c.l.b16 %v631
    %v996 = vunpack.c.h.b16 %v631
    %v997 = vunpack.c.l.b16 %v632
    %v998 = vunpack.c.h.b16 %v632
    %v999 = vunpack.c.l.b16 %v633
    %v1000 = vunpack.c.h.b16 %v633
    %v1001 = vunpack.c.l.b16 %v634
    %v1002 = vunpack.c.h.b16 %v634
    %v1003 = vunpack.c.l.b16 %v635
    %v1004 = vunpack.c.h.b16 %v635
    %v1005 = vunpack.c.l.b16 %v636
    %v1006 = vunpack.c.h.b16 %v636
    %v1007 = vunpack.c.l.b16 %v637
    %v1008 = vunpack.c.h.b16 %v637
    %v1009 = vunpack.c.l.b16 %v638
    %v1010 = vunpack.c.h.b16 %v638
    %v1011 = vunpack.c.l.b16 %v639
    %v1012 = vunpack.c.h.b16 %v639
    %v1013 = vunpack.c.l.b16 %v640
    %v1014 = vunpack.c.h.b16 %v640
    %v1015 = vunpack.c.l.b16 %v641
    %v1016 = vunpack.c.h.b16 %v641
    %v1017 = vunpack.c.l.b16 %v642
    %v1018 = vunpack.c.h.b16 %v642
    %v1019 = vunpack.c.l.b16 %v643
    %v1020 = vunpack.c.h.b16 %v643
    %v1021 = vunpack.c.l.b16 %v644
    %v1022 = vunpack.c.h.b16 %v644
    %v1023 = vunpack.c.l.b16 %v645
    %v1024 = vunpack.c.h.b16 %v645
    %v1025 = vunpack.c.l.b16 %v646
    %v1026 = vunpack.c.h.b16 %v646
    %v1027 = vunpack.c.l.b16 %v647
    %v1028 = vunpack.c.h.b16 %v647
    %v1029 = vunpack.c.l.b16 %v648
    %v1030 = vunpack.c.h.b16 %v648
    %v1031 = vunpack.c.l.b16 %v649
    %v1032 = vunpack.c.h.b16 %v649
    %v1033 = vunpack.c.l.b16 %v650
    %v1034 = vunpack.c.h.b16 %v650
    %v1035 = vunpack.c.l.b16 %v651
    %v1036 = vunpack.c.h.b16 %v651
    %v1037 = vunpack.c.l.b16 %v652
    %v1038 = vunpack.c.h.b16 %v652
    %v1039 = vunpack.c.l.b16 %v653
    %v1040 = vunpack.c.h.b16 %v653
    %v1041 = vunpack.c.l.b16 %v654
    %v1042 = vunpack.c.h.b16 %v654
    %v1043 = vunpack.c.l.b16 %v655
    %v1044 = vunpack.c.h.b16 %v655
    %v1045 = vunpack.c.l.b16 %v656
    %v1046 = vunpack.c.h.b16 %v656
    %v1047 = vunpack.c.l.b16 %v657
    %v1048 = vunpack.c.h.b16 %v657
    %v1049 = vunpack.c.l.b16 %v658
    %v1050 = vunpack.c.h.b16 %v658
    %v1051 = vunpack.c.l.b16 %v659
    %v1052 = vunpack.c.h.b16 %v659
    %v1053 = vunpack.c.l.b16 %v660
    %v1054 = vunpack.c.h.b16 %v660
    %v1055 = vunpack.c.l.b16 %v661
    %v1056 = vunpack.c.h.b16 %v661
    %v1057 = vunpack.c.l.b16 %v662
    %v1058 = vunpack.c.h.b16 %v662
    %v1059 = vunpack.c.l.b16 %v663
    %v1060 = vunpack.c.h.b16 %v663
    %v1061 = vunpack.c.l.b16 %v664
    %v1062 = vunpack.c.h.b16 %v664
    %v1063 = vpack.c.b16 %v811, %v807
    %v1064 = vpack.c.b16 %v812, %v808
    %v1065 = vpack.c.b16 %v813, %v809
    %v1066 = vpack.c.b16 %v814, %v810
    %v1067 = vpack.c.b16 %v819, %v815
    %v1068 = vpack.c.b16 %v820, %v816
    %v1069 = vpack.c.b16 %v821, %v817
    %v1070 = vpack.c.b16 %v822, %v818
    %v1071 = vpack.c.b16 %v827, %v823
    %v1072 = vpack.c.b16 %v828, %v824
    %v1073 = vpack.c.b16 %v829, %v825
    %v1074 = vpack.c.b16 %v830, %v826
    %v1075 = vpack.c.b16 %v835, %v831
    %v1076 = vpack.c.b16 %v836, %v832
    %v1077 = vpack.c.b16 %v837, %v833
    %v1078 = vpack.c.b16 %v838, %v834
    %v1079 = vpack.c.b16 %v843, %v839
    %v1080 = vpack.c.b16 %v844, %v840
    %v1081 = vpack.c.b16 %v845, %v841
    %v1082 = vpack.c.b16 %v846, %v842
    %v1083 = vpack.c.b16 %v851, %v847
    %v1084 = vpack.c.b16 %v852, %v848
    %v1085 = vpack.c.b16 %v853, %v849
    %v1086 = vpack.c.b16 %v854, %v850
    %v1087 = vpack.c.b16 %v859, %v855
    %v1088 = vpack.c.b16 %v860, %v856
    %v1089 = vpack.c.b16 %v861, %v857
    %v1090 = vpack.c.b16 %v862, %v858
    %v1091 = vpack.c.b16 %v867, %v863
    %v1092 = vpack.c.b16 %v868, %v864
    %v1093 = vpack.c.b16 %v869, %v865
    %v1094 = vpack.c.b16 %v870, %v866
    %v1095 = vpack.c.b16 %v875, %v871
    %v1096 = vpack.c.b16 %v876, %v872
    %v1097 = vpack.c.b16 %v877, %v873
    %v1098 = vpack.c.b16 %v878, %v874
    %v1099 = vpack.c.b16 %v883, %v879
    %v1100 = vpack.c.b16 %v884, %v880
    %v1101 = vpack.c.b16 %v885, %v881
    %v1102 = vpack.c.b16 %v886, %v882
    %v1103 = vpack.c.b16 %v891, %v887
    %v1104 = vpack.c.b16 %v892, %v888
    %v1105 = vpack.c.b16 %v893, %v889
    %v1106 = vpack.c.b16 %v894, %v890
    %v1107 = vpack.c.b16 %v899, %v895
    %v1108 = vpack.c.b16 %v900, %v896
    %v1109 = vpack.c.b16 %v901, %v897
    %v1110 = vpack.c.b16 %v902, %v898
    %v1111 = vpack.c.b16 %v907, %v903
    %v1112 = vpack.c.b16 %v908, %v904
    %v1113 = vpack.c.b16 %v909, %v905
    %v1114 = vpack.c.b16 %v910, %v906
    %v1115 = vpack.c.b16 %v915, %v911
    %v1116 = vpack.c.b16 %v916, %v912
    %v1117 = vpack.c.b16 %v917, %v913
    %v1118 = vpack.c.b16 %v918, %v914
    %v1119 = vpack.c.b16 %v923, %v919
    %v1120 = vpack.c.b16 %v924, %v920
    %v1121 = vpack.c.b16 %v925, %v921
    %v1122 = vpack.c.b16 %v926, %v922
    %v1123 = vpack.c.b16 %v931, %v927
    %v1124 = vpack.c.b16 %v932, %v928
    %v1125 = vpack.c.b16 %v933, %v929
    %v1126 = vpack.c.b16 %v934, %v930
    %v1127 = vpack.c.b16 %v939, %v935
    %v1128 = vpack.c.b16 %v940, %v936
    %v1129 = vpack.c.b16 %v941, %v937
    %v1130 = vpack.c.b16 %v942, %v938
    %v1131 = vpack.c.b16 %v947, %v943
    %v1132 = vpack.c.b16 %v948, %v944
    %v1133 = vpack.c.b16 %v949, %v945
    %v1134 = vpack.c.b16 %v950, %v946
    %v1135 = vpack.c.b16 %v955, %v951
    %v1136 = vpack.c.b16 %v956, %v952
    %v1137 = vpack.c.b16 %v957, %v953
    %v1138 = vpack.c.b16 %v958, %v954
    %v1139 = vpack.c.b16 %v963, %v959
    %v1140 = vpack.c.b16 %v964, %v960
    %v1141 = vpack.c.b16 %v965, %v961
    %v1142 = vpack.c.b16 %v966, %v962
    %v1143 = vpack.c.b16 %v971, %v967
    %v1144 = vpack.c.b16 %v972, %v968
    %v1145 = vpack.c.b16 %v973, %v969
    %v1146 = vpack.c.b16 %v974, %v970
    %v1147 = vpack.c.b16 %v979, %v975
    %v1148 = vpack.c.b16 %v980, %v976
    %v1149 = vpack.c.b16 %v981, %v977
    %v1150 = vpack.c.b16 %v982, %v978
    %v1151 = vpack.c.b16 %v987, %v983
    %v1152 = vpack.c.b16 %v988, %v984
    %v1153 = vpack.c.b16 %v989, %v985
    %v1154 = vpack.c.b16 %v990, %v986
    %v1155 = vpack.c.b16 %v995, %v991
    %v1156 = vpack.c.b16 %v996, %v992
    %v1157 = vpack.c.b16 %v997, %v993
    %v1158 = vpack.c.b16 %v998, %v994
    %v1159 = vpack.c.b16 %v1003, %v999
    %v1160 = vpack.c.b16 %v1004, %v1000
    %v1161 = vpack.c.b16 %v1005, %v1001
    %v1162 = vpack.c.b16 %v1006, %v1002
    %v1163 = vpack.c.b16 %v1011, %v1007
    %v1164 = vpack.c.b16 %v1012, %v1008
    %v1165 = vpack.c.b16 %v1013, %v1009
    %v1166 = vpack.c.b16 %v1014, %v1010
    %v1167 = vpack.c.b16 %v1019, %v1015
    %v1168 = vpack.c.b16 %v1020, %v1016
    %v1169 = vpack.c.b16 %v1021, %v1017
    %v1170 = vpack.c.b16 %v1022, %v1018
    %v1171 = vpack.c.b16 %v1027, %v1023
    %v1172 = vpack.c.b16 %v1028, %v1024
    %v1173 = vpack.c.b16 %v1029, %v1025
    %v1174 = vpack.c.b16 %v1030, %v1026
    %v1175 = vpack.c.b16 %v1035, %v1031
    %v1176 = vpack.c.b16 %v1036, %v1032
    %v1177 = vpack.c.b16 %v1037, %v1033
    %v1178 = vpack.c.b16 %v1038, %v1034
    %v1179 = vpack.c.b16 %v1043, %v1039
    %v1180 = vpack.c.b16 %v1044, %v1040
    %v1181 = vpack.c.b16 %v1045, %v1041
    %v1182 = vpack.c.b16 %v1046, %v1042
    %v1183 = vpack.c.b16 %v1051, %v1047
    %v1184 = vpack.c.b16 %v1052, %v1048
    %v1185 = vpack.c.b16 %v1053, %v1049
    %v1186 = vpack.c.b16 %v1054, %v1050
    %v1187 = vpack.c.b16 %v1059, %v1055
    %v1188 = vpack.c.b16 %v1060, %v1056
    %v1189 = vpack.c.b16 %v1061, %v1057
    %v1190 = vpack.c.b16 %v1062, %v1058
    %1319 = vmatpush.bf16.msra.mxu0 %v1091
    %1320 = vmatpush.bf16.msra.mxu0 %v1087
    %1321 = vmatpush.bf16.msra.mxu0 %v1083
    %1322 = vmatpush.bf16.msra.mxu0 %v1079
    %1323 = vmatpush.bf16.msra.mxu0 %v1075
    %1324 = vmatpush.bf16.msra.mxu0 %v1071
    %1325 = vmatpush.bf16.msra.mxu0 %v1067
    %1326 = vmatpush.bf16.msra.mxu0 %v1063
    %1327 = vmatmul.bf16.gmra.mxu0 %v675
    %v1328 = vpop.f32.mrf.mxu0
    %v1329 = vadd.f32 0.0, %v1328
    %v1330 = vpop.f32.mrf.mxu0
    %1331 = vdwg.mxu0
    %1332 = vmatpush.bf16.msra.mxu0 %v1123
    %1333 = vmatpush.bf16.msra.mxu0 %v1119
    %1334 = vmatpush.bf16.msra.mxu0 %v1115
    %1335 = vmatpush.bf16.msra.mxu0 %v1111
    %1336 = vmatpush.bf16.msra.mxu0 %v1107
    %1337 = vmatpush.bf16.msra.mxu0 %v1103
    %1338 = vmatpush.bf16.msra.mxu0 %v1099
    %1339 = vmatpush.bf16.msra.mxu0 %v1095
    %1340 = vmatmul.bf16.gmra.mxu0 %v676
    %v1341 = vpop.f32.mrf.mxu0
    %v1342 = vadd.f32 %v1329, %v1341
    %v1343 = vpop.f32.mrf.mxu0
    %1344 = vdwg.mxu0
    %1345 = vmatpush.bf16.msra.mxu0 %v1155
    %1346 = vmatpush.bf16.msra.mxu0 %v1151
    %1347 = vmatpush.bf16.msra.mxu0 %v1147
    %1348 = vmatpush.bf16.msra.mxu0 %v1143
    %1349 = vmatpush.bf16.msra.mxu0 %v1139
    %1350 = vmatpush.bf16.msra.mxu0 %v1135
    %1351 = vmatpush.bf16.msra.mxu0 %v1131
    %1352 = vmatpush.bf16.msra.mxu0 %v1127
    %1353 = vmatmul.bf16.gmra.mxu0 %v677
    %v1354 = vpop.f32.mrf.mxu0
    %v1355 = vadd.f32 %v1342, %v1354
    %v1356 = vpop.f32.mrf.mxu0
    %1357 = vdwg.mxu0
    %1358 = vmatpush.bf16.msra.mxu0 %v1187
    %1359 = vmatpush.bf16.msra.mxu0 %v1183
    %1360 = vmatpush.bf16.msra.mxu0 %v1179
    %1361 = vmatpush.bf16.msra.mxu0 %v1175
    %1362 = vmatpush.bf16.msra.mxu0 %v1171
    %1363 = vmatpush.bf16.msra.mxu0 %v1167
    %1364 = vmatpush.bf16.msra.mxu0 %v1163
    %1365 = vmatpush.bf16.msra.mxu0 %v1159
    %1366 = vmatmul.bf16.gmra.mxu0 %v678
    %v1367 = vpop.f32.mrf.mxu0
    %v1368 = vadd.f32 %v1355, %v1367
    %v1369 = vpop.f32.mrf.mxu0
    %1370 = vdwg.mxu0
    %1371 = vmatpush.bf16.msra.mxu0 %v1092
    %1372 = vmatpush.bf16.msra.mxu0 %v1088
    %1373 = vmatpush.bf16.msra.mxu0 %v1084
    %1374 = vmatpush.bf16.msra.mxu0 %v1080
    %1375 = vmatpush.bf16.msra.mxu0 %v1076
    %1376 = vmatpush.bf16.msra.mxu0 %v1072
    %1377 = vmatpush.bf16.msra.mxu0 %v1068
    %1378 = vmatpush.bf16.msra.mxu0 %v1064
    %1379 = vmatmul.bf16.gmra.mxu0 %v675
    %v1380 = vpop.f32.mrf.mxu0
    %v1381 = vadd.f32 0.0, %v1380
    %v1382 = vpop.f32.mrf.mxu0
    %1383 = vdwg.mxu0
    %1384 = vmatpush.bf16.msra.mxu0 %v1124
    %1385 = vmatpush.bf16.msra.mxu0 %v1120
    %1386 = vmatpush.bf16.msra.mxu0 %v1116
    %1387 = vmatpush.bf16.msra.mxu0 %v1112
    %1388 = vmatpush.bf16.msra.mxu0 %v1108
    %1389 = vmatpush.bf16.msra.mxu0 %v1104
    %1390 = vmatpush.bf16.msra.mxu0 %v1100
    %1391 = vmatpush.bf16.msra.mxu0 %v1096
    %1392 = vmatmul.bf16.gmra.mxu0 %v676
    %v1393 = vpop.f32.mrf.mxu0
    %v1394 = vadd.f32 %v1381, %v1393
    %v1395 = vpop.f32.mrf.mxu0
    %1396 = vdwg.mxu0
    %1397 = vmatpush.bf16.msra.mxu0 %v1156
    %1398 = vmatpush.bf16.msra.mxu0 %v1152
    %1399 = vmatpush.bf16.msra.mxu0 %v1148
    %1400 = vmatpush.bf16.msra.mxu0 %v1144
    %1401 = vmatpush.bf16.msra.mxu0 %v1140
    %1402 = vmatpush.bf16.msra.mxu0 %v1136
    %1403 = vmatpush.bf16.msra.mxu0 %v1132
    %1404 = vmatpush.bf16.msra.mxu0 %v1128
    %1405 = vmatmul.bf16.gmra.mxu0 %v677
    %v1406 = vpop.f32.mrf.mxu0
    %v1407 = vadd.f32 %v1394, %v1406
    %v1408 = vpop.f32.mrf.mxu0
    %1409 = vdwg.mxu0
    %1410 = vmatpush.bf16.msra.mxu0 %v1188
    %1411 = vmatpush.bf16.msra.mxu0 %v1184
    %1412 = vmatpush.bf16.msra.mxu0 %v1180
    %1413 = vmatpush.bf16.msra.mxu0 %v1176
    %1414 = vmatpush.bf16.msra.mxu0 %v1172
    %1415 = vmatpush.bf16.msra.mxu0 %v1168
    %1416 = vmatpush.bf16.msra.mxu0 %v1164
    %1417 = vmatpush.bf16.msra.mxu0 %v1160
    %1418 = vmatmul.bf16.gmra.mxu0 %v678
    %v1419 = vpop.f32.mrf.mxu0
    %v1420 = vadd.f32 %v1407, %v1419
    %v1421 = vpop.f32.mrf.mxu0
    %1422 = vdwg.mxu0
    %1423 = vmatpush.bf16.msra.mxu0 %v1093
    %1424 = vmatpush.bf16.msra.mxu0 %v1089
    %1425 = vmatpush.bf16.msra.mxu0 %v1085
    %1426 = vmatpush.bf16.msra.mxu0 %v1081
    %1427 = vmatpush.bf16.msra.mxu0 %v1077
    %1428 = vmatpush.bf16.msra.mxu0 %v1073
    %1429 = vmatpush.bf16.msra.mxu0 %v1069
    %1430 = vmatpush.bf16.msra.mxu0 %v1065
    %1431 = vmatmul.bf16.gmra.mxu0 %v675
    %v1432 = vpop.f32.mrf.mxu0
    %v1433 = vadd.f32 0.0, %v1432
    %v1434 = vpop.f32.mrf.mxu0
    %1435 = vdwg.mxu0
    %1436 = vmatpush.bf16.msra.mxu0 %v1125
    %1437 = vmatpush.bf16.msra.mxu0 %v1121
    %1438 = vmatpush.bf16.msra.mxu0 %v1117
    %1439 = vmatpush.bf16.msra.mxu0 %v1113
    %1440 = vmatpush.bf16.msra.mxu0 %v1109
    %1441 = vmatpush.bf16.msra.mxu0 %v1105
    %1442 = vmatpush.bf16.msra.mxu0 %v1101
    %1443 = vmatpush.bf16.msra.mxu0 %v1097
    %1444 = vmatmul.bf16.gmra.mxu0 %v676
    %v1445 = vpop.f32.mrf.mxu0
    %v1446 = vadd.f32 %v1433, %v1445
    %v1447 = vpop.f32.mrf.mxu0
    %1448 = vdwg.mxu0
    %1449 = vmatpush.bf16.msra.mxu0 %v1157
    %1450 = vmatpush.bf16.msra.mxu0 %v1153
    %1451 = vmatpush.bf16.msra.mxu0 %v1149
    %1452 = vmatpush.bf16.msra.mxu0 %v1145
    %1453 = vmatpush.bf16.msra.mxu0 %v1141
    %1454 = vmatpush.bf16.msra.mxu0 %v1137
    %1455 = vmatpush.bf16.msra.mxu0 %v1133
    %1456 = vmatpush.bf16.msra.mxu0 %v1129
    %1457 = vmatmul.bf16.gmra.mxu0 %v677
    %v1458 = vpop.f32.mrf.mxu0
    %v1459 = vadd.f32 %v1446, %v1458
    %v1460 = vpop.f32.mrf.mxu0
    %1461 = vdwg.mxu0
    %1462 = vmatpush.bf16.msra.mxu0 %v1189
    %1463 = vmatpush.bf16.msra.mxu0 %v1185
    %1464 = vmatpush.bf16.msra.mxu0 %v1181
    %1465 = vmatpush.bf16.msra.mxu0 %v1177
    %1466 = vmatpush.bf16.msra.mxu0 %v1173
    %1467 = vmatpush.bf16.msra.mxu0 %v1169
    %1468 = vmatpush.bf16.msra.mxu0 %v1165
    %1469 = vmatpush.bf16.msra.mxu0 %v1161
    %1470 = vmatmul.bf16.gmra.mxu0 %v678
    %v1471 = vpop.f32.mrf.mxu0
    %v1472 = vadd.f32 %v1459, %v1471
    %v1473 = vpop.f32.mrf.mxu0
    %1474 = vdwg.mxu0
    %1475 = vmatpush.bf16.msra.mxu0 %v1094
    %1476 = vmatpush.bf16.msra.mxu0 %v1090
    %1477 = vmatpush.bf16.msra.mxu0 %v1086
    %1478 = vmatpush.bf16.msra.mxu0 %v1082
    %1479 = vmatpush.bf16.msra.mxu0 %v1078
    %1480 = vmatpush.bf16.msra.mxu0 %v1074
    %1481 = vmatpush.bf16.msra.mxu0 %v1070
    %1482 = vmatpush.bf16.msra.mxu0 %v1066
    %1483 = vmatmul.bf16.gmra.mxu0 %v675
    %v1484 = vpop.f32.mrf.mxu0
    %v1485 = vadd.f32 0.0, %v1484
    %v1486 = vpop.f32.mrf.mxu0
    %1487 = vdwg.mxu0
    %1488 = vmatpush.bf16.msra.mxu0 %v1126
    %1489 = vmatpush.bf16.msra.mxu0 %v1122
    %1490 = vmatpush.bf16.msra.mxu0 %v1118
    %1491 = vmatpush.bf16.msra.mxu0 %v1114
    %1492 = vmatpush.bf16.msra.mxu0 %v1110
    %1493 = vmatpush.bf16.msra.mxu0 %v1106
    %1494 = vmatpush.bf16.msra.mxu0 %v1102
    %1495 = vmatpush.bf16.msra.mxu0 %v1098
    %1496 = vmatmul.bf16.gmra.mxu0 %v676
    %v1497 = vpop.f32.mrf.mxu0
    %v1498 = vadd.f32 %v1485, %v1497
    %v1499 = vpop.f32.mrf.mxu0
    %1500 = vdwg.mxu0
    %1501 = vmatpush.bf16.msra.mxu0 %v1158
    %1502 = vmatpush.bf16.msra.mxu0 %v1154
    %1503 = vmatpush.bf16.msra.mxu0 %v1150
    %1504 = vmatpush.bf16.msra.mxu0 %v1146
    %1505 = vmatpush.bf16.msra.mxu0 %v1142
    %1506 = vmatpush.bf16.msra.mxu0 %v1138
    %1507 = vmatpush.bf16.msra.mxu0 %v1134
    %1508 = vmatpush.bf16.msra.mxu0 %v1130
    %1509 = vmatmul.bf16.gmra.mxu0 %v677
    %v1510 = vpop.f32.mrf.mxu0
    %v1511 = vadd.f32 %v1498, %v1510
    %v1512 = vpop.f32.mrf.mxu0
    %1513 = vdwg.mxu0
    %1514 = vmatpush.bf16.msra.mxu0 %v1190
    %1515 = vmatpush.bf16.msra.mxu0 %v1186
    %1516 = vmatpush.bf16.msra.mxu0 %v1182
    %1517 = vmatpush.bf16.msra.mxu0 %v1178
    %1518 = vmatpush.bf16.msra.mxu0 %v1174
    %1519 = vmatpush.bf16.msra.mxu0 %v1170
    %1520 = vmatpush.bf16.msra.mxu0 %v1166
    %1521 = vmatpush.bf16.msra.mxu0 %v1162
    %1522 = vmatmul.bf16.gmra.mxu0 %v678
    %v1523 = vpop.f32.mrf.mxu0
    %v1524 = vadd.f32 %v1511, %v1523
    %v1525 = vpop.f32.mrf.mxu0
    %1526 = vdwg.mxu0
    %v1655 = vunpack.c.l.b16 %v405
    %v1656 = vunpack.c.h.b16 %v405
    %v1657 = vunpack.c.l.b16 %v406
    %v1658 = vunpack.c.h.b16 %v406
    %v1659 = vunpack.c.l.b16 %v407
    %v1660 = vunpack.c.h.b16 %v407
    %v1661 = vunpack.c.l.b16 %v408
    %v1662 = vunpack.c.h.b16 %v408
    %v1663 = vunpack.c.l.b16 %v409
    %v1664 = vunpack.c.h.b16 %v409
    %v1665 = vunpack.c.l.b16 %v410
    %v1666 = vunpack.c.h.b16 %v410
    %v1667 = vunpack.c.l.b16 %v411
    %v1668 = vunpack.c.h.b16 %v411
    %v1669 = vunpack.c.l.b16 %v412
    %v1670 = vunpack.c.h.b16 %v412
    %v1671 = vunpack.c.l.b16 %v413
    %v1672 = vunpack.c.h.b16 %v413
    %v1673 = vunpack.c.l.b16 %v414
    %v1674 = vunpack.c.h.b16 %v414
    %v1675 = vunpack.c.l.b16 %v415
    %v1676 = vunpack.c.h.b16 %v415
    %v1677 = vunpack.c.l.b16 %v416
    %v1678 = vunpack.c.h.b16 %v416
    %v1679 = vunpack.c.l.b16 %v417
    %v1680 = vunpack.c.h.b16 %v417
    %v1681 = vunpack.c.l.b16 %v418
    %v1682 = vunpack.c.h.b16 %v418
    %v1683 = vunpack.c.l.b16 %v419
    %v1684 = vunpack.c.h.b16 %v419
    %v1685 = vunpack.c.l.b16 %v420
    %v1686 = vunpack.c.h.b16 %v420
    %v1687 = vunpack.c.l.b16 %v421
    %v1688 = vunpack.c.h.b16 %v421
    %v1689 = vunpack.c.l.b16 %v422
    %v1690 = vunpack.c.h.b16 %v422
    %v1691 = vunpack.c.l.b16 %v423
    %v1692 = vunpack.c.h.b16 %v423
    %v1693 = vunpack.c.l.b16 %v424
    %v1694 = vunpack.c.h.b16 %v424
    %v1695 = vunpack.c.l.b16 %v425
    %v1696 = vunpack.c.h.b16 %v425
    %v1697 = vunpack.c.l.b16 %v426
    %v1698 = vunpack.c.h.b16 %v426
    %v1699 = vunpack.c.l.b16 %v427
    %v1700 = vunpack.c.h.b16 %v427
    %v1701 = vunpack.c.l.b16 %v428
    %v1702 = vunpack.c.h.b16 %v428
    %v1703 = vunpack.c.l.b16 %v429
    %v1704 = vunpack.c.h.b16 %v429
    %v1705 = vunpack.c.l.b16 %v430
    %v1706 = vunpack.c.h.b16 %v430
    %v1707 = vunpack.c.l.b16 %v431
    %v1708 = vunpack.c.h.b16 %v431
    %v1709 = vunpack.c.l.b16 %v432
    %v1710 = vunpack.c.h.b16 %v432
    %v1711 = vunpack.c.l.b16 %v433
    %v1712 = vunpack.c.h.b16 %v433
    %v1713 = vunpack.c.l.b16 %v434
    %v1714 = vunpack.c.h.b16 %v434
    %v1715 = vunpack.c.l.b16 %v435
    %v1716 = vunpack.c.h.b16 %v435
    %v1717 = vunpack.c.l.b16 %v436
    %v1718 = vunpack.c.h.b16 %v436
    %v1719 = vunpack.c.l.b16 %v437
    %v1720 = vunpack.c.h.b16 %v437
    %v1721 = vunpack.c.l.b16 %v438
    %v1722 = vunpack.c.h.b16 %v438
    %v1723 = vunpack.c.l.b16 %v439
    %v1724 = vunpack.c.h.b16 %v439
    %v1725 = vunpack.c.l.b16 %v440
    %v1726 = vunpack.c.h.b16 %v440
    %v1727 = vunpack.c.l.b16 %v441
    %v1728 = vunpack.c.h.b16 %v441
    %v1729 = vunpack.c.l.b16 %v442
    %v1730 = vunpack.c.h.b16 %v442
    %v1731 = vunpack.c.l.b16 %v443
    %v1732 = vunpack.c.h.b16 %v443
    %v1733 = vunpack.c.l.b16 %v444
    %v1734 = vunpack.c.h.b16 %v444
    %v1735 = vunpack.c.l.b16 %v445
    %v1736 = vunpack.c.h.b16 %v445
    %v1737 = vunpack.c.l.b16 %v446
    %v1738 = vunpack.c.h.b16 %v446
    %v1739 = vunpack.c.l.b16 %v447
    %v1740 = vunpack.c.h.b16 %v447
    %v1741 = vunpack.c.l.b16 %v448
    %v1742 = vunpack.c.h.b16 %v448
    %v1743 = vunpack.c.l.b16 %v449
    %v1744 = vunpack.c.h.b16 %v449
    %v1745 = vunpack.c.l.b16 %v450
    %v1746 = vunpack.c.h.b16 %v450
    %v1747 = vunpack.c.l.b16 %v451
    %v1748 = vunpack.c.h.b16 %v451
    %v1749 = vunpack.c.l.b16 %v452
    %v1750 = vunpack.c.h.b16 %v452
    %v1751 = vunpack.c.l.b16 %v453
    %v1752 = vunpack.c.h.b16 %v453
    %v1753 = vunpack.c.l.b16 %v454
    %v1754 = vunpack.c.h.b16 %v454
    %v1755 = vunpack.c.l.b16 %v455
    %v1756 = vunpack.c.h.b16 %v455
    %v1757 = vunpack.c.l.b16 %v456
    %v1758 = vunpack.c.h.b16 %v456
    %v1759 = vunpack.c.l.b16 %v457
    %v1760 = vunpack.c.h.b16 %v457
    %v1761 = vunpack.c.l.b16 %v458
    %v1762 = vunpack.c.h.b16 %v458
    %v1763 = vunpack.c.l.b16 %v459
    %v1764 = vunpack.c.h.b16 %v459
    %v1765 = vunpack.c.l.b16 %v460
    %v1766 = vunpack.c.h.b16 %v460
    %v1767 = vunpack.c.l.b16 %v461
    %v1768 = vunpack.c.h.b16 %v461
    %v1769 = vunpack.c.l.b16 %v462
    %v1770 = vunpack.c.h.b16 %v462
    %v1771 = vunpack.c.l.b16 %v463
    %v1772 = vunpack.c.h.b16 %v463
    %v1773 = vunpack.c.l.b16 %v464
    %v1774 = vunpack.c.h.b16 %v464
    %v1775 = vunpack.c.l.b16 %v465
    %v1776 = vunpack.c.h.b16 %v465
    %v1777 = vunpack.c.l.b16 %v466
    %v1778 = vunpack.c.h.b16 %v466
    %v1779 = vunpack.c.l.b16 %v467
    %v1780 = vunpack.c.h.b16 %v467
    %v1781 = vunpack.c.l.b16 %v468
    %v1782 = vunpack.c.h.b16 %v468
    %v1783 = vunpack.c.l.b16 %v469
    %v1784 = vunpack.c.h.b16 %v469
    %v1785 = vunpack.c.l.b16 %v470
    %v1786 = vunpack.c.h.b16 %v470
    %v1787 = vunpack.c.l.b16 %v471
    %v1788 = vunpack.c.h.b16 %v471
    %v1789 = vunpack.c.l.b16 %v472
    %v1790 = vunpack.c.h.b16 %v472
    %v1791 = vunpack.c.l.b16 %v473
    %v1792 = vunpack.c.h.b16 %v473
    %v1793 = vunpack.c.l.b16 %v474
    %v1794 = vunpack.c.h.b16 %v474
    %v1795 = vunpack.c.l.b16 %v475
    %v1796 = vunpack.c.h.b16 %v475
    %v1797 = vunpack.c.l.b16 %v476
    %v1798 = vunpack.c.h.b16 %v476
    %v1799 = vunpack.c.l.b16 %v477
    %v1800 = vunpack.c.h.b16 %v477
    %v1801 = vunpack.c.l.b16 %v478
    %v1802 = vunpack.c.h.b16 %v478
    %v1803 = vunpack.c.l.b16 %v479
    %v1804 = vunpack.c.h.b16 %v479
    %v1805 = vunpack.c.l.b16 %v480
    %v1806 = vunpack.c.h.b16 %v480
    %v1807 = vunpack.c.l.b16 %v481
    %v1808 = vunpack.c.h.b16 %v481
    %v1809 = vunpack.c.l.b16 %v482
    %v1810 = vunpack.c.h.b16 %v482
    %v1811 = vunpack.c.l.b16 %v483
    %v1812 = vunpack.c.h.b16 %v483
    %v1813 = vunpack.c.l.b16 %v484
    %v1814 = vunpack.c.h.b16 %v484
    %v1815 = vunpack.c.l.b16 %v485
    %v1816 = vunpack.c.h.b16 %v485
    %v1817 = vunpack.c.l.b16 %v486
    %v1818 = vunpack.c.h.b16 %v486
    %v1819 = vunpack.c.l.b16 %v487
    %v1820 = vunpack.c.h.b16 %v487
    %v1821 = vunpack.c.l.b16 %v488
    %v1822 = vunpack.c.h.b16 %v488
    %v1823 = vunpack.c.l.b16 %v489
    %v1824 = vunpack.c.h.b16 %v489
    %v1825 = vunpack.c.l.b16 %v490
    %v1826 = vunpack.c.h.b16 %v490
    %v1827 = vunpack.c.l.b16 %v491
    %v1828 = vunpack.c.h.b16 %v491
    %v1829 = vunpack.c.l.b16 %v492
    %v1830 = vunpack.c.h.b16 %v492
    %v1831 = vunpack.c.l.b16 %v493
    %v1832 = vunpack.c.h.b16 %v493
    %v1833 = vunpack.c.l.b16 %v494
    %v1834 = vunpack.c.h.b16 %v494
    %v1835 = vunpack.c.l.b16 %v495
    %v1836 = vunpack.c.h.b16 %v495
    %v1837 = vunpack.c.l.b16 %v496
    %v1838 = vunpack.c.h.b16 %v496
    %v1839 = vunpack.c.l.b16 %v497
    %v1840 = vunpack.c.h.b16 %v497
    %v1841 = vunpack.c.l.b16 %v498
    %v1842 = vunpack.c.h.b16 %v498
    %v1843 = vunpack.c.l.b16 %v499
    %v1844 = vunpack.c.h.b16 %v499
    %v1845 = vunpack.c.l.b16 %v500
    %v1846 = vunpack.c.h.b16 %v500
    %v1847 = vunpack.c.l.b16 %v501
    %v1848 = vunpack.c.h.b16 %v501
    %v1849 = vunpack.c.l.b16 %v502
    %v1850 = vunpack.c.h.b16 %v502
    %v1851 = vunpack.c.l.b16 %v503
    %v1852 = vunpack.c.h.b16 %v503
    %v1853 = vunpack.c.l.b16 %v504
    %v1854 = vunpack.c.h.b16 %v504
    %v1855 = vunpack.c.l.b16 %v505
    %v1856 = vunpack.c.h.b16 %v505
    %v1857 = vunpack.c.l.b16 %v506
    %v1858 = vunpack.c.h.b16 %v506
    %v1859 = vunpack.c.l.b16 %v507
    %v1860 = vunpack.c.h.b16 %v507
    %v1861 = vunpack.c.l.b16 %v508
    %v1862 = vunpack.c.h.b16 %v508
    %v1863 = vunpack.c.l.b16 %v509
    %v1864 = vunpack.c.h.b16 %v509
    %v1865 = vunpack.c.l.b16 %v510
    %v1866 = vunpack.c.h.b16 %v510
    %v1867 = vunpack.c.l.b16 %v511
    %v1868 = vunpack.c.h.b16 %v511
    %v1869 = vunpack.c.l.b16 %v512
    %v1870 = vunpack.c.h.b16 %v512
    %v1871 = vunpack.c.l.b16 %v513
    %v1872 = vunpack.c.h.b16 %v513
    %v1873 = vunpack.c.l.b16 %v514
    %v1874 = vunpack.c.h.b16 %v514
    %v1875 = vunpack.c.l.b16 %v515
    %v1876 = vunpack.c.h.b16 %v515
    %v1877 = vunpack.c.l.b16 %v516
    %v1878 = vunpack.c.h.b16 %v516
    %v1879 = vunpack.c.l.b16 %v517
    %v1880 = vunpack.c.h.b16 %v517
    %v1881 = vunpack.c.l.b16 %v518
    %v1882 = vunpack.c.h.b16 %v518
    %v1883 = vunpack.c.l.b16 %v519
    %v1884 = vunpack.c.h.b16 %v519
    %v1885 = vunpack.c.l.b16 %v520
    %v1886 = vunpack.c.h.b16 %v520
    %v1887 = vunpack.c.l.b16 %v521
    %v1888 = vunpack.c.h.b16 %v521
    %v1889 = vunpack.c.l.b16 %v522
    %v1890 = vunpack.c.h.b16 %v522
    %v1891 = vunpack.c.l.b16 %v523
    %v1892 = vunpack.c.h.b16 %v523
    %v1893 = vunpack.c.l.b16 %v524
    %v1894 = vunpack.c.h.b16 %v524
    %v1895 = vunpack.c.l.b16 %v525
    %v1896 = vunpack.c.h.b16 %v525
    %v1897 = vunpack.c.l.b16 %v526
    %v1898 = vunpack.c.h.b16 %v526
    %v1899 = vunpack.c.l.b16 %v527
    %v1900 = vunpack.c.h.b16 %v527
    %v1901 = vunpack.c.l.b16 %v528
    %v1902 = vunpack.c.h.b16 %v528
    %v1903 = vunpack.c.l.b16 %v529
    %v1904 = vunpack.c.h.b16 %v529
    %v1905 = vunpack.c.l.b16 %v530
    %v1906 = vunpack.c.h.b16 %v530
    %v1907 = vunpack.c.l.b16 %v531
    %v1908 = vunpack.c.h.b16 %v531
    %v1909 = vunpack.c.l.b16 %v532
    %v1910 = vunpack.c.h.b16 %v532
    %v1911 = vpack.c.b16 %v1659, %v1655
    %v1912 = vpack.c.b16 %v1660, %v1656
    %v1913 = vpack.c.b16 %v1661, %v1657
    %v1914 = vpack.c.b16 %v1662, %v1658
    %v1915 = vpack.c.b16 %v1667, %v1663
    %v1916 = vpack.c.b16 %v1668, %v1664
    %v1917 = vpack.c.b16 %v1669, %v1665
    %v1918 = vpack.c.b16 %v1670, %v1666
    %v1919 = vpack.c.b16 %v1675, %v1671
    %v1920 = vpack.c.b16 %v1676, %v1672
    %v1921 = vpack.c.b16 %v1677, %v1673
    %v1922 = vpack.c.b16 %v1678, %v1674
    %v1923 = vpack.c.b16 %v1683, %v1679
    %v1924 = vpack.c.b16 %v1684, %v1680
    %v1925 = vpack.c.b16 %v1685, %v1681
    %v1926 = vpack.c.b16 %v1686, %v1682
    %v1927 = vpack.c.b16 %v1691, %v1687
    %v1928 = vpack.c.b16 %v1692, %v1688
    %v1929 = vpack.c.b16 %v1693, %v1689
    %v1930 = vpack.c.b16 %v1694, %v1690
    %v1931 = vpack.c.b16 %v1699, %v1695
    %v1932 = vpack.c.b16 %v1700, %v1696
    %v1933 = vpack.c.b16 %v1701, %v1697
    %v1934 = vpack.c.b16 %v1702, %v1698
    %v1935 = vpack.c.b16 %v1707, %v1703
    %v1936 = vpack.c.b16 %v1708, %v1704
    %v1937 = vpack.c.b16 %v1709, %v1705
    %v1938 = vpack.c.b16 %v1710, %v1706
    %v1939 = vpack.c.b16 %v1715, %v1711
    %v1940 = vpack.c.b16 %v1716, %v1712
    %v1941 = vpack.c.b16 %v1717, %v1713
    %v1942 = vpack.c.b16 %v1718, %v1714
    %v1943 = vpack.c.b16 %v1723, %v1719
    %v1944 = vpack.c.b16 %v1724, %v1720
    %v1945 = vpack.c.b16 %v1725, %v1721
    %v1946 = vpack.c.b16 %v1726, %v1722
    %v1947 = vpack.c.b16 %v1731, %v1727
    %v1948 = vpack.c.b16 %v1732, %v1728
    %v1949 = vpack.c.b16 %v1733, %v1729
    %v1950 = vpack.c.b16 %v1734, %v1730
    %v1951 = vpack.c.b16 %v1739, %v1735
    %v1952 = vpack.c.b16 %v1740, %v1736
    %v1953 = vpack.c.b16 %v1741, %v1737
    %v1954 = vpack.c.b16 %v1742, %v1738
    %v1955 = vpack.c.b16 %v1747, %v1743
    %v1956 = vpack.c.b16 %v1748, %v1744
    %v1957 = vpack.c.b16 %v1749, %v1745
    %v1958 = vpack.c.b16 %v1750, %v1746
    %v1959 = vpack.c.b16 %v1755, %v1751
    %v1960 = vpack.c.b16 %v1756, %v1752
    %v1961 = vpack.c.b16 %v1757, %v1753
    %v1962 = vpack.c.b16 %v1758, %v1754
    %v1963 = vpack.c.b16 %v1763, %v1759
    %v1964 = vpack.c.b16 %v1764, %v1760
    %v1965 = vpack.c.b16 %v1765, %v1761
    %v1966 = vpack.c.b16 %v1766, %v1762
    %v1967 = vpack.c.b16 %v1771, %v1767
    %v1968 = vpack.c.b16 %v1772, %v1768
    %v1969 = vpack.c.b16 %v1773, %v1769
    %v1970 = vpack.c.b16 %v1774, %v1770
    %v1971 = vpack.c.b16 %v1779, %v1775
    %v1972 = vpack.c.b16 %v1780, %v1776
    %v1973 = vpack.c.b16 %v1781, %v1777
    %v1974 = vpack.c.b16 %v1782, %v1778
    %v1975 = vpack.c.b16 %v1787, %v1783
    %v1976 = vpack.c.b16 %v1788, %v1784
    %v1977 = vpack.c.b16 %v1789, %v1785
    %v1978 = vpack.c.b16 %v1790, %v1786
    %v1979 = vpack.c.b16 %v1795, %v1791
    %v1980 = vpack.c.b16 %v1796, %v1792
    %v1981 = vpack.c.b16 %v1797, %v1793
    %v1982 = vpack.c.b16 %v1798, %v1794
    %v1983 = vpack.c.b16 %v1803, %v1799
    %v1984 = vpack.c.b16 %v1804, %v1800
    %v1985 = vpack.c.b16 %v1805, %v1801
    %v1986 = vpack.c.b16 %v1806, %v1802
    %v1987 = vpack.c.b16 %v1811, %v1807
    %v1988 = vpack.c.b16 %v1812, %v1808
    %v1989 = vpack.c.b16 %v1813, %v1809
    %v1990 = vpack.c.b16 %v1814, %v1810
    %v1991 = vpack.c.b16 %v1819, %v1815
    %v1992 = vpack.c.b16 %v1820, %v1816
    %v1993 = vpack.c.b16 %v1821, %v1817
    %v1994 = vpack.c.b16 %v1822, %v1818
    %v1995 = vpack.c.b16 %v1827, %v1823
    %v1996 = vpack.c.b16 %v1828, %v1824
    %v1997 = vpack.c.b16 %v1829, %v1825
    %v1998 = vpack.c.b16 %v1830, %v1826
    %v1999 = vpack.c.b16 %v1835, %v1831
    %v2000 = vpack.c.b16 %v1836, %v1832
    %v2001 = vpack.c.b16 %v1837, %v1833
    %v2002 = vpack.c.b16 %v1838, %v1834
    %v2003 = vpack.c.b16 %v1843, %v1839
    %v2004 = vpack.c.b16 %v1844, %v1840
    %v2005 = vpack.c.b16 %v1845, %v1841
    %v2006 = vpack.c.b16 %v1846, %v1842
    %v2007 = vpack.c.b16 %v1851, %v1847
    %v2008 = vpack.c.b16 %v1852, %v1848
    %v2009 = vpack.c.b16 %v1853, %v1849
    %v2010 = vpack.c.b16 %v1854, %v1850
    %v2011 = vpack.c.b16 %v1859, %v1855
    %v2012 = vpack.c.b16 %v1860, %v1856
    %v2013 = vpack.c.b16 %v1861, %v1857
    %v2014 = vpack.c.b16 %v1862, %v1858
    %v2015 = vpack.c.b16 %v1867, %v1863
    %v2016 = vpack.c.b16 %v1868, %v1864
    %v2017 = vpack.c.b16 %v1869, %v1865
    %v2018 = vpack.c.b16 %v1870, %v1866
    %v2019 = vpack.c.b16 %v1875, %v1871
    %v2020 = vpack.c.b16 %v1876, %v1872
    %v2021 = vpack.c.b16 %v1877, %v1873
    %v2022 = vpack.c.b16 %v1878, %v1874
    %v2023 = vpack.c.b16 %v1883, %v1879
    %v2024 = vpack.c.b16 %v1884, %v1880
    %v2025 = vpack.c.b16 %v1885, %v1881
    %v2026 = vpack.c.b16 %v1886, %v1882
    %v2027 = vpack.c.b16 %v1891, %v1887
    %v2028 = vpack.c.b16 %v1892, %v1888
    %v2029 = vpack.c.b16 %v1893, %v1889
    %v2030 = vpack.c.b16 %v1894, %v1890
    %v2031 = vpack.c.b16 %v1899, %v1895
    %v2032 = vpack.c.b16 %v1900, %v1896
    %v2033 = vpack.c.b16 %v1901, %v1897
    %v2034 = vpack.c.b16 %v1902, %v1898
    %v2035 = vpack.c.b16 %v1907, %v1903
    %v2036 = vpack.c.b16 %v1908, %v1904
    %v2037 = vpack.c.b16 %v1909, %v1905
    %v2038 = vpack.c.b16 %v1910, %v1906
    %2167 = vmatpush.bf16.msra.mxu0 %v1939
    %2168 = vmatpush.bf16.msra.mxu0 %v1935
    %2169 = vmatpush.bf16.msra.mxu0 %v1931
    %2170 = vmatpush.bf16.msra.mxu0 %v1927
    %2171 = vmatpush.bf16.msra.mxu0 %v1923
    %2172 = vmatpush.bf16.msra.mxu0 %v1919
    %2173 = vmatpush.bf16.msra.mxu0 %v1915
    %2174 = vmatpush.bf16.msra.mxu0 %v1911
    %2175 = vmatmul.bf16.gmra.mxu0 %v533
    %v2176 = vpop.f32.mrf.mxu0
    %v2177 = vadd.f32 %v1368, %v2176
    %v2178 = vpop.f32.mrf.mxu0
    %2179 = vdwg.mxu0
    %2180 = vmatpush.bf16.msra.mxu0 %v1971
    %2181 = vmatpush.bf16.msra.mxu0 %v1967
    %2182 = vmatpush.bf16.msra.mxu0 %v1963
    %2183 = vmatpush.bf16.msra.mxu0 %v1959
    %2184 = vmatpush.bf16.msra.mxu0 %v1955
    %2185 = vmatpush.bf16.msra.mxu0 %v1951
    %2186 = vmatpush.bf16.msra.mxu0 %v1947
    %2187 = vmatpush.bf16.msra.mxu0 %v1943
    %2188 = vmatmul.bf16.gmra.mxu0 %v534
    %v2189 = vpop.f32.mrf.mxu0
    %v2190 = vadd.f32 %v2177, %v2189
    %v2191 = vpop.f32.mrf.mxu0
    %2192 = vdwg.mxu0
    %2193 = vmatpush.bf16.msra.mxu0 %v2003
    %2194 = vmatpush.bf16.msra.mxu0 %v1999
    %2195 = vmatpush.bf16.msra.mxu0 %v1995
    %2196 = vmatpush.bf16.msra.mxu0 %v1991
    %2197 = vmatpush.bf16.msra.mxu0 %v1987
    %2198 = vmatpush.bf16.msra.mxu0 %v1983
    %2199 = vmatpush.bf16.msra.mxu0 %v1979
    %2200 = vmatpush.bf16.msra.mxu0 %v1975
    %2201 = vmatmul.bf16.gmra.mxu0 %v535
    %v2202 = vpop.f32.mrf.mxu0
    %v2203 = vadd.f32 %v2190, %v2202
    %v2204 = vpop.f32.mrf.mxu0
    %2205 = vdwg.mxu0
    %2206 = vmatpush.bf16.msra.mxu0 %v2035
    %2207 = vmatpush.bf16.msra.mxu0 %v2031
    %2208 = vmatpush.bf16.msra.mxu0 %v2027
    %2209 = vmatpush.bf16.msra.mxu0 %v2023
    %2210 = vmatpush.bf16.msra.mxu0 %v2019
    %2211 = vmatpush.bf16.msra.mxu0 %v2015
    %2212 = vmatpush.bf16.msra.mxu0 %v2011
    %2213 = vmatpush.bf16.msra.mxu0 %v2007
    %2214 = vmatmul.bf16.gmra.mxu0 %v536
    %v2215 = vpop.f32.mrf.mxu0
    %v2216 = vadd.f32 %v2203, %v2215
    %v2217 = vpop.f32.mrf.mxu0
    %2218 = vdwg.mxu0
    %2219 = vmatpush.bf16.msra.mxu0 %v1940
    %2220 = vmatpush.bf16.msra.mxu0 %v1936
    %2221 = vmatpush.bf16.msra.mxu0 %v1932
    %2222 = vmatpush.bf16.msra.mxu0 %v1928
    %2223 = vmatpush.bf16.msra.mxu0 %v1924
    %2224 = vmatpush.bf16.msra.mxu0 %v1920
    %2225 = vmatpush.bf16.msra.mxu0 %v1916
    %2226 = vmatpush.bf16.msra.mxu0 %v1912
    %2227 = vmatmul.bf16.gmra.mxu0 %v533
    %v2228 = vpop.f32.mrf.mxu0
    %v2229 = vadd.f32 %v1420, %v2228
    %v2230 = vpop.f32.mrf.mxu0
    %2231 = vdwg.mxu0
    %2232 = vmatpush.bf16.msra.mxu0 %v1972
    %2233 = vmatpush.bf16.msra.mxu0 %v1968
    %2234 = vmatpush.bf16.msra.mxu0 %v1964
    %2235 = vmatpush.bf16.msra.mxu0 %v1960
    %2236 = vmatpush.bf16.msra.mxu0 %v1956
    %2237 = vmatpush.bf16.msra.mxu0 %v1952
    %2238 = vmatpush.bf16.msra.mxu0 %v1948
    %2239 = vmatpush.bf16.msra.mxu0 %v1944
    %2240 = vmatmul.bf16.gmra.mxu0 %v534
    %v2241 = vpop.f32.mrf.mxu0
    %v2242 = vadd.f32 %v2229, %v2241
    %v2243 = vpop.f32.mrf.mxu0
    %2244 = vdwg.mxu0
    %2245 = vmatpush.bf16.msra.mxu0 %v2004
    %2246 = vmatpush.bf16.msra.mxu0 %v2000
    %2247 = vmatpush.bf16.msra.mxu0 %v1996
    %2248 = vmatpush.bf16.msra.mxu0 %v1992
    %2249 = vmatpush.bf16.msra.mxu0 %v1988
    %2250 = vmatpush.bf16.msra.mxu0 %v1984
    %2251 = vmatpush.bf16.msra.mxu0 %v1980
    %2252 = vmatpush.bf16.msra.mxu0 %v1976
    %2253 = vmatmul.bf16.gmra.mxu0 %v535
    %v2254 = vpop.f32.mrf.mxu0
    %v2255 = vadd.f32 %v2242, %v2254
    %v2256 = vpop.f32.mrf.mxu0
    %2257 = vdwg.mxu0
    %2258 = vmatpush.bf16.msra.mxu0 %v2036
    %2259 = vmatpush.bf16.msra.mxu0 %v2032
    %2260 = vmatpush.bf16.msra.mxu0 %v2028
    %2261 = vmatpush.bf16.msra.mxu0 %v2024
    %2262 = vmatpush.bf16.msra.mxu0 %v2020
    %2263 = vmatpush.bf16.msra.mxu0 %v2016
    %2264 = vmatpush.bf16.msra.mxu0 %v2012
    %2265 = vmatpush.bf16.msra.mxu0 %v2008
    %2266 = vmatmul.bf16.gmra.mxu0 %v536
    %v2267 = vpop.f32.mrf.mxu0
    %v2268 = vadd.f32 %v2255, %v2267
    %v2269 = vpop.f32.mrf.mxu0
    %2270 = vdwg.mxu0
    %2271 = vmatpush.bf16.msra.mxu0 %v1941
    %2272 = vmatpush.bf16.msra.mxu0 %v1937
    %2273 = vmatpush.bf16.msra.mxu0 %v1933
    %2274 = vmatpush.bf16.msra.mxu0 %v1929
    %2275 = vmatpush.bf16.msra.mxu0 %v1925
    %2276 = vmatpush.bf16.msra.mxu0 %v1921
    %2277 = vmatpush.bf16.msra.mxu0 %v1917
    %2278 = vmatpush.bf16.msra.mxu0 %v1913
    %2279 = vmatmul.bf16.gmra.mxu0 %v533
    %v2280 = vpop.f32.mrf.mxu0
    %v2281 = vadd.f32 %v1472, %v2280
    %v2282 = vpop.f32.mrf.mxu0
    %2283 = vdwg.mxu0
    %2284 = vmatpush.bf16.msra.mxu0 %v1973
    %2285 = vmatpush.bf16.msra.mxu0 %v1969
    %2286 = vmatpush.bf16.msra.mxu0 %v1965
    %2287 = vmatpush.bf16.msra.mxu0 %v1961
    %2288 = vmatpush.bf16.msra.mxu0 %v1957
    %2289 = vmatpush.bf16.msra.mxu0 %v1953
    %2290 = vmatpush.bf16.msra.mxu0 %v1949
    %2291 = vmatpush.bf16.msra.mxu0 %v1945
    %2292 = vmatmul.bf16.gmra.mxu0 %v534
    %v2293 = vpop.f32.mrf.mxu0
    %v2294 = vadd.f32 %v2281, %v2293
    %v2295 = vpop.f32.mrf.mxu0
    %2296 = vdwg.mxu0
    %2297 = vmatpush.bf16.msra.mxu0 %v2005
    %2298 = vmatpush.bf16.msra.mxu0 %v2001
    %2299 = vmatpush.bf16.msra.mxu0 %v1997
    %2300 = vmatpush.bf16.msra.mxu0 %v1993
    %2301 = vmatpush.bf16.msra.mxu0 %v1989
    %2302 = vmatpush.bf16.msra.mxu0 %v1985
    %2303 = vmatpush.bf16.msra.mxu0 %v1981
    %2304 = vmatpush.bf16.msra.mxu0 %v1977
    %2305 = vmatmul.bf16.gmra.mxu0 %v535
    %v2306 = vpop.f32.mrf.mxu0
    %v2307 = vadd.f32 %v2294, %v2306
    %v2308 = vpop.f32.mrf.mxu0
    %2309 = vdwg.mxu0
    %2310 = vmatpush.bf16.msra.mxu0 %v2037
    %2311 = vmatpush.bf16.msra.mxu0 %v2033
    %2312 = vmatpush.bf16.msra.mxu0 %v2029
    %2313 = vmatpush.bf16.msra.mxu0 %v2025
    %2314 = vmatpush.bf16.msra.mxu0 %v2021
    %2315 = vmatpush.bf16.msra.mxu0 %v2017
    %2316 = vmatpush.bf16.msra.mxu0 %v2013
    %2317 = vmatpush.bf16.msra.mxu0 %v2009
    %2318 = vmatmul.bf16.gmra.mxu0 %v536
    %v2319 = vpop.f32.mrf.mxu0
    %v2320 = vadd.f32 %v2307, %v2319
    %v2321 = vpop.f32.mrf.mxu0
    %2322 = vdwg.mxu0
    %2323 = vmatpush.bf16.msra.mxu0 %v1942
    %2324 = vmatpush.bf16.msra.mxu0 %v1938
    %2325 = vmatpush.bf16.msra.mxu0 %v1934
    %2326 = vmatpush.bf16.msra.mxu0 %v1930
    %2327 = vmatpush.bf16.msra.mxu0 %v1926
    %2328 = vmatpush.bf16.msra.mxu0 %v1922
    %2329 = vmatpush.bf16.msra.mxu0 %v1918
    %2330 = vmatpush.bf16.msra.mxu0 %v1914
    %2331 = vmatmul.bf16.gmra.mxu0 %v533
    %v2332 = vpop.f32.mrf.mxu0
    %v2333 = vadd.f32 %v1524, %v2332
    %v2334 = vpop.f32.mrf.mxu0
    %2335 = vdwg.mxu0
    %2336 = vmatpush.bf16.msra.mxu0 %v1974
    %2337 = vmatpush.bf16.msra.mxu0 %v1970
    %2338 = vmatpush.bf16.msra.mxu0 %v1966
    %2339 = vmatpush.bf16.msra.mxu0 %v1962
    %2340 = vmatpush.bf16.msra.mxu0 %v1958
    %2341 = vmatpush.bf16.msra.mxu0 %v1954
    %2342 = vmatpush.bf16.msra.mxu0 %v1950
    %2343 = vmatpush.bf16.msra.mxu0 %v1946
    %2344 = vmatmul.bf16.gmra.mxu0 %v534
    %v2345 = vpop.f32.mrf.mxu0
    %v2346 = vadd.f32 %v2333, %v2345
    %v2347 = vpop.f32.mrf.mxu0
    %2348 = vdwg.mxu0
    %2349 = vmatpush.bf16.msra.mxu0 %v2006
    %2350 = vmatpush.bf16.msra.mxu0 %v2002
    %2351 = vmatpush.bf16.msra.mxu0 %v1998
    %2352 = vmatpush.bf16.msra.mxu0 %v1994
    %2353 = vmatpush.bf16.msra.mxu0 %v1990
    %2354 = vmatpush.bf16.msra.mxu0 %v1986
    %2355 = vmatpush.bf16.msra.mxu0 %v1982
    %2356 = vmatpush.bf16.msra.mxu0 %v1978
    %2357 = vmatmul.bf16.gmra.mxu0 %v535
    %v2358 = vpop.f32.mrf.mxu0
    %v2359 = vadd.f32 %v2346, %v2358
    %v2360 = vpop.f32.mrf.mxu0
    %2361 = vdwg.mxu0
    %2362 = vmatpush.bf16.msra.mxu0 %v2038
    %2363 = vmatpush.bf16.msra.mxu0 %v2034
    %2364 = vmatpush.bf16.msra.mxu0 %v2030
    %2365 = vmatpush.bf16.msra.mxu0 %v2026
    %2366 = vmatpush.bf16.msra.mxu0 %v2022
    %2367 = vmatpush.bf16.msra.mxu0 %v2018
    %2368 = vmatpush.bf16.msra.mxu0 %v2014
    %2369 = vmatpush.bf16.msra.mxu0 %v2010
    %2370 = vmatmul.bf16.gmra.mxu0 %v536
    %v2371 = vpop.f32.mrf.mxu0
    %v2372 = vadd.f32 %v2359, %v2371
    %v2373 = vpop.f32.mrf.mxu0
    %2374 = vdwg.mxu0
    %v2375 = vld [vmem:[%s9] sm:$0xf]
    %v2377 = vperm.slane %v2375, 0
    %v2378 = vperm.slane %v2375, 1
    %v2379 = vperm.slane %v2375, 2
    %v2380 = vperm.slane %v2375, 3
    %v2385 = vadd.f32 %v2216, %v2377
    %v2386 = vadd.f32 %v2268, %v2378
    %v2387 = vadd.f32 %v2320, %v2379
    %v2388 = vadd.f32 %v2372, %v2380
    %v2389 = vmax.f32 %v2385, 0.0
    %v2390 = vmax.f32 %v2386, 0.0
    %v2391 = vmax.f32 %v2387, 0.0
    %v2392 = vmax.f32 %v2388, 0.0
    %v2393 = vld [vmem:[#allocation6] sm:$0xff]
    %v2394 = vld [vmem:[#allocation6 + $0x8] sm:$0xff]
    %v2395 = vld [vmem:[#allocation6 + $0x10] sm:$0xff]
    %v2396 = vld [vmem:[#allocation6 + $0x18] sm:$0xff]
    %v2397 = vld [vmem:[#allocation6 + $0x20] sm:$0xff]
    %v2398 = vld [vmem:[#allocation6 + $0x28] sm:$0xff]
    %v2399 = vld [vmem:[#allocation6 + $0x30] sm:$0xff]
    %v2400 = vld [vmem:[#allocation6 + $0x38] sm:$0xff]
    %v2401 = vld [vmem:[#allocation6 + $0x40] sm:$0xff]
    %v2402 = vld [vmem:[#allocation6 + $0x48] sm:$0xff]
    %v2403 = vld [vmem:[#allocation6 + $0x50] sm:$0xff]
    %v2404 = vld [vmem:[#allocation6 + $0x58] sm:$0xff]
    %v2405 = vld [vmem:[#allocation6 + $0x60] sm:$0xff]
    %v2406 = vld [vmem:[#allocation6 + $0x68] sm:$0xff]
    %v2407 = vld [vmem:[#allocation6 + $0x70] sm:$0xff]
    %v2408 = vld [vmem:[#allocation6 + $0x78] sm:$0xff]
    %v2409 = vld [vmem:[#allocation6 + $0x80] sm:$0xff]
    %v2410 = vld [vmem:[#allocation6 + $0x88] sm:$0xff]
    %v2411 = vld [vmem:[#allocation6 + $0x90] sm:$0xff]
    %v2412 = vld [vmem:[#allocation6 + $0x98] sm:$0xff]
    %v2413 = vld [vmem:[#allocation6 + $0xa0] sm:$0xff]
    %v2414 = vld [vmem:[#allocation6 + $0xa8] sm:$0xff]
    %v2415 = vld [vmem:[#allocation6 + $0xb0] sm:$0xff]
    %v2416 = vld [vmem:[#allocation6 + $0xb8] sm:$0xff]
    %v2417 = vld [vmem:[#allocation6 + $0xc0] sm:$0xff]
    %v2418 = vld [vmem:[#allocation6 + $0xc8] sm:$0xff]
    %v2419 = vld [vmem:[#allocation6 + $0xd0] sm:$0xff]
    %v2420 = vld [vmem:[#allocation6 + $0xd8] sm:$0xff]
    %v2421 = vld [vmem:[#allocation6 + $0xe0] sm:$0xff]
    %v2422 = vld [vmem:[#allocation6 + $0xe8] sm:$0xff]
    %v2423 = vld [vmem:[#allocation6 + $0xf0] sm:$0xff]
    %v2424 = vld [vmem:[#allocation6 + $0xf8] sm:$0xff]
    %v2425 = vld [vmem:[#allocation6 + $0x100] sm:$0xff]
    %v2426 = vld [vmem:[#allocation6 + $0x108] sm:$0xff]
    %v2427 = vld [vmem:[#allocation6 + $0x110] sm:$0xff]
    %v2428 = vld [vmem:[#allocation6 + $0x118] sm:$0xff]
    %v2429 = vld [vmem:[#allocation6 + $0x120] sm:$0xff]
    %v2430 = vld [vmem:[#allocation6 + $0x128] sm:$0xff]
    %v2431 = vld [vmem:[#allocation6 + $0x130] sm:$0xff]
    %v2432 = vld [vmem:[#allocation6 + $0x138] sm:$0xff]
    %v2433 = vld [vmem:[#allocation6 + $0x140] sm:$0xff]
    %v2434 = vld [vmem:[#allocation6 + $0x148] sm:$0xff]
    %v2435 = vld [vmem:[#allocation6 + $0x150] sm:$0xff]
    %v2436 = vld [vmem:[#allocation6 + $0x158] sm:$0xff]
    %v2437 = vld [vmem:[#allocation6 + $0x160] sm:$0xff]
    %v2438 = vld [vmem:[#allocation6 + $0x168] sm:$0xff]
    %v2439 = vld [vmem:[#allocation6 + $0x170] sm:$0xff]
    %v2440 = vld [vmem:[#allocation6 + $0x178] sm:$0xff]
    %v2441 = vld [vmem:[#allocation6 + $0x180] sm:$0xff]
    %v2442 = vld [vmem:[#allocation6 + $0x188] sm:$0xff]
    %v2443 = vld [vmem:[#allocation6 + $0x190] sm:$0xff]
    %v2444 = vld [vmem:[#allocation6 + $0x198] sm:$0xff]
    %v2445 = vld [vmem:[#allocation6 + $0x1a0] sm:$0xff]
    %v2446 = vld [vmem:[#allocation6 + $0x1a8] sm:$0xff]
    %v2447 = vld [vmem:[#allocation6 + $0x1b0] sm:$0xff]
    %v2448 = vld [vmem:[#allocation6 + $0x1b8] sm:$0xff]
    %v2449 = vld [vmem:[#allocation6 + $0x1c0] sm:$0xff]
    %v2450 = vld [vmem:[#allocation6 + $0x1c8] sm:$0xff]
    %v2451 = vld [vmem:[#allocation6 + $0x1d0] sm:$0xff]
    %v2452 = vld [vmem:[#allocation6 + $0x1d8] sm:$0xff]
    %v2453 = vld [vmem:[#allocation6 + $0x1e0] sm:$0xff]
    %v2454 = vld [vmem:[#allocation6 + $0x1e8] sm:$0xff]
    %v2455 = vld [vmem:[#allocation6 + $0x1f0] sm:$0xff]
    %v2456 = vld [vmem:[#allocation6 + $0x1f8] sm:$0xff]
    %v2457 = vpack.c.bf16 %v2389, %v2389
    %v2458 = vpack.c.bf16 %v2390, %v2390
    %v2459 = vpack.c.bf16 %v2391, %v2391
    %v2460 = vpack.c.bf16 %v2392, %v2392
    %v2461 = vld [vmem:[%s11] sm:$0x3]
    %v2463 = vperm.slane %v2461, 0
    %v2464 = vperm.slane %v2461, 1
    %v2531 = vunpack.c.l.b16 %v2393
    %v2532 = vunpack.c.h.b16 %v2393
    %v2533 = vunpack.c.l.b16 %v2394
    %v2534 = vunpack.c.h.b16 %v2394
    %v2535 = vunpack.c.l.b16 %v2395
    %v2536 = vunpack.c.h.b16 %v2395
    %v2537 = vunpack.c.l.b16 %v2396
    %v2538 = vunpack.c.h.b16 %v2396
    %v2539 = vunpack.c.l.b16 %v2397
    %v2540 = vunpack.c.h.b16 %v2397
    %v2541 = vunpack.c.l.b16 %v2398
    %v2542 = vunpack.c.h.b16 %v2398
    %v2543 = vunpack.c.l.b16 %v2399
    %v2544 = vunpack.c.h.b16 %v2399
    %v2545 = vunpack.c.l.b16 %v2400
    %v2546 = vunpack.c.h.b16 %v2400
    %v2547 = vunpack.c.l.b16 %v2401
    %v2548 = vunpack.c.h.b16 %v2401
    %v2549 = vunpack.c.l.b16 %v2402
    %v2550 = vunpack.c.h.b16 %v2402
    %v2551 = vunpack.c.l.b16 %v2403
    %v2552 = vunpack.c.h.b16 %v2403
    %v2553 = vunpack.c.l.b16 %v2404
    %v2554 = vunpack.c.h.b16 %v2404
    %v2555 = vunpack.c.l.b16 %v2405
    %v2556 = vunpack.c.h.b16 %v2405
    %v2557 = vunpack.c.l.b16 %v2406
    %v2558 = vunpack.c.h.b16 %v2406
    %v2559 = vunpack.c.l.b16 %v2407
    %v2560 = vunpack.c.h.b16 %v2407
    %v2561 = vunpack.c.l.b16 %v2408
    %v2562 = vunpack.c.h.b16 %v2408
    %v2563 = vunpack.c.l.b16 %v2409
    %v2564 = vunpack.c.h.b16 %v2409
    %v2565 = vunpack.c.l.b16 %v2410
    %v2566 = vunpack.c.h.b16 %v2410
    %v2567 = vunpack.c.l.b16 %v2411
    %v2568 = vunpack.c.h.b16 %v2411
    %v2569 = vunpack.c.l.b16 %v2412
    %v2570 = vunpack.c.h.b16 %v2412
    %v2571 = vunpack.c.l.b16 %v2413
    %v2572 = vunpack.c.h.b16 %v2413
    %v2573 = vunpack.c.l.b16 %v2414
    %v2574 = vunpack.c.h.b16 %v2414
    %v2575 = vunpack.c.l.b16 %v2415
    %v2576 = vunpack.c.h.b16 %v2415
    %v2577 = vunpack.c.l.b16 %v2416
    %v2578 = vunpack.c.h.b16 %v2416
    %v2579 = vunpack.c.l.b16 %v2417
    %v2580 = vunpack.c.h.b16 %v2417
    %v2581 = vunpack.c.l.b16 %v2418
    %v2582 = vunpack.c.h.b16 %v2418
    %v2583 = vunpack.c.l.b16 %v2419
    %v2584 = vunpack.c.h.b16 %v2419
    %v2585 = vunpack.c.l.b16 %v2420
    %v2586 = vunpack.c.h.b16 %v2420
    %v2587 = vunpack.c.l.b16 %v2421
    %v2588 = vunpack.c.h.b16 %v2421
    %v2589 = vunpack.c.l.b16 %v2422
    %v2590 = vunpack.c.h.b16 %v2422
    %v2591 = vunpack.c.l.b16 %v2423
    %v2592 = vunpack.c.h.b16 %v2423
    %v2593 = vunpack.c.l.b16 %v2424
    %v2594 = vunpack.c.h.b16 %v2424
    %v2595 = vunpack.c.l.b16 %v2425
    %v2596 = vunpack.c.h.b16 %v2425
    %v2597 = vunpack.c.l.b16 %v2426
    %v2598 = vunpack.c.h.b16 %v2426
    %v2599 = vunpack.c.l.b16 %v2427
    %v2600 = vunpack.c.h.b16 %v2427
    %v2601 = vunpack.c.l.b16 %v2428
    %v2602 = vunpack.c.h.b16 %v2428
    %v2603 = vunpack.c.l.b16 %v2429
    %v2604 = vunpack.c.h.b16 %v2429
    %v2605 = vunpack.c.l.b16 %v2430
    %v2606 = vunpack.c.h.b16 %v2430
    %v2607 = vunpack.c.l.b16 %v2431
    %v2608 = vunpack.c.h.b16 %v2431
    %v2609 = vunpack.c.l.b16 %v2432
    %v2610 = vunpack.c.h.b16 %v2432
    %v2611 = vunpack.c.l.b16 %v2433
    %v2612 = vunpack.c.h.b16 %v2433
    %v2613 = vunpack.c.l.b16 %v2434
    %v2614 = vunpack.c.h.b16 %v2434
    %v2615 = vunpack.c.l.b16 %v2435
    %v2616 = vunpack.c.h.b16 %v2435
    %v2617 = vunpack.c.l.b16 %v2436
    %v2618 = vunpack.c.h.b16 %v2436
    %v2619 = vunpack.c.l.b16 %v2437
    %v2620 = vunpack.c.h.b16 %v2437
    %v2621 = vunpack.c.l.b16 %v2438
    %v2622 = vunpack.c.h.b16 %v2438
    %v2623 = vunpack.c.l.b16 %v2439
    %v2624 = vunpack.c.h.b16 %v2439
    %v2625 = vunpack.c.l.b16 %v2440
    %v2626 = vunpack.c.h.b16 %v2440
    %v2627 = vunpack.c.l.b16 %v2441
    %v2628 = vunpack.c.h.b16 %v2441
    %v2629 = vunpack.c.l.b16 %v2442
    %v2630 = vunpack.c.h.b16 %v2442
    %v2631 = vunpack.c.l.b16 %v2443
    %v2632 = vunpack.c.h.b16 %v2443
    %v2633 = vunpack.c.l.b16 %v2444
    %v2634 = vunpack.c.h.b16 %v2444
    %v2635 = vunpack.c.l.b16 %v2445
    %v2636 = vunpack.c.h.b16 %v2445
    %v2637 = vunpack.c.l.b16 %v2446
    %v2638 = vunpack.c.h.b16 %v2446
    %v2639 = vunpack.c.l.b16 %v2447
    %v2640 = vunpack.c.h.b16 %v2447
    %v2641 = vunpack.c.l.b16 %v2448
    %v2642 = vunpack.c.h.b16 %v2448
    %v2643 = vunpack.c.l.b16 %v2449
    %v2644 = vunpack.c.h.b16 %v2449
    %v2645 = vunpack.c.l.b16 %v2450
    %v2646 = vunpack.c.h.b16 %v2450
    %v2647 = vunpack.c.l.b16 %v2451
    %v2648 = vunpack.c.h.b16 %v2451
    %v2649 = vunpack.c.l.b16 %v2452
    %v2650 = vunpack.c.h.b16 %v2452
    %v2651 = vunpack.c.l.b16 %v2453
    %v2652 = vunpack.c.h.b16 %v2453
    %v2653 = vunpack.c.l.b16 %v2454
    %v2654 = vunpack.c.h.b16 %v2454
    %v2655 = vunpack.c.l.b16 %v2455
    %v2656 = vunpack.c.h.b16 %v2455
    %v2657 = vunpack.c.l.b16 %v2456
    %v2658 = vunpack.c.h.b16 %v2456
    %v2659 = vpack.c.b16 %v2533, %v2531
    %v2660 = vpack.c.b16 %v2534, %v2532
    %v2661 = vpack.c.b16 %v2537, %v2535
    %v2662 = vpack.c.b16 %v2538, %v2536
    %v2663 = vpack.c.b16 %v2541, %v2539
    %v2664 = vpack.c.b16 %v2542, %v2540
    %v2665 = vpack.c.b16 %v2545, %v2543
    %v2666 = vpack.c.b16 %v2546, %v2544
    %v2667 = vpack.c.b16 %v2549, %v2547
    %v2668 = vpack.c.b16 %v2550, %v2548
    %v2669 = vpack.c.b16 %v2553, %v2551
    %v2670 = vpack.c.b16 %v2554, %v2552
    %v2671 = vpack.c.b16 %v2557, %v2555
    %v2672 = vpack.c.b16 %v2558, %v2556
    %v2673 = vpack.c.b16 %v2561, %v2559
    %v2674 = vpack.c.b16 %v2562, %v2560
    %v2675 = vpack.c.b16 %v2565, %v2563
    %v2676 = vpack.c.b16 %v2566, %v2564
    %v2677 = vpack.c.b16 %v2569, %v2567
    %v2678 = vpack.c.b16 %v2570, %v2568
    %v2679 = vpack.c.b16 %v2573, %v2571
    %v2680 = vpack.c.b16 %v2574, %v2572
    %v2681 = vpack.c.b16 %v2577, %v2575
    %v2682 = vpack.c.b16 %v2578, %v2576
    %v2683 = vpack.c.b16 %v2581, %v2579
    %v2684 = vpack.c.b16 %v2582, %v2580
    %v2685 = vpack.c.b16 %v2585, %v2583
    %v2686 = vpack.c.b16 %v2586, %v2584
    %v2687 = vpack.c.b16 %v2589, %v2587
    %v2688 = vpack.c.b16 %v2590, %v2588
    %v2689 = vpack.c.b16 %v2593, %v2591
    %v2690 = vpack.c.b16 %v2594, %v2592
    %v2691 = vpack.c.b16 %v2597, %v2595
    %v2692 = vpack.c.b16 %v2598, %v2596
    %v2693 = vpack.c.b16 %v2601, %v2599
    %v2694 = vpack.c.b16 %v2602, %v2600
    %v2695 = vpack.c.b16 %v2605, %v2603
    %v2696 = vpack.c.b16 %v2606, %v2604
    %v2697 = vpack.c.b16 %v2609, %v2607
    %v2698 = vpack.c.b16 %v2610, %v2608
    %v2699 = vpack.c.b16 %v2613, %v2611
    %v2700 = vpack.c.b16 %v2614, %v2612
    %v2701 = vpack.c.b16 %v2617, %v2615
    %v2702 = vpack.c.b16 %v2618, %v2616
    %v2703 = vpack.c.b16 %v2621, %v2619
    %v2704 = vpack.c.b16 %v2622, %v2620
    %v2705 = vpack.c.b16 %v2625, %v2623
    %v2706 = vpack.c.b16 %v2626, %v2624
    %v2707 = vpack.c.b16 %v2629, %v2627
    %v2708 = vpack.c.b16 %v2630, %v2628
    %v2709 = vpack.c.b16 %v2633, %v2631
    %v2710 = vpack.c.b16 %v2634, %v2632
    %v2711 = vpack.c.b16 %v2637, %v2635
    %v2712 = vpack.c.b16 %v2638, %v2636
    %v2713 = vpack.c.b16 %v2641, %v2639
    %v2714 = vpack.c.b16 %v2642, %v2640
    %v2715 = vpack.c.b16 %v2645, %v2643
    %v2716 = vpack.c.b16 %v2646, %v2644
    %v2717 = vpack.c.b16 %v2649, %v2647
    %v2718 = vpack.c.b16 %v2650, %v2648
    %v2719 = vpack.c.b16 %v2653, %v2651
    %v2720 = vpack.c.b16 %v2654, %v2652
    %v2721 = vpack.c.b16 %v2657, %v2655
    %v2722 = vpack.c.b16 %v2658, %v2656
    %2787 = vmatpush.bf16.msra.mxu0 %v2673
    %2788 = vmatpush.bf16.msra.mxu0 %v2671
    %2789 = vmatpush.bf16.msra.mxu0 %v2669
    %2790 = vmatpush.bf16.msra.mxu0 %v2667
    %2791 = vmatpush.bf16.msra.mxu0 %v2665
    %2792 = vmatpush.bf16.msra.mxu0 %v2663
    %2793 = vmatpush.bf16.msra.mxu0 %v2661
    %2794 = vmatpush.bf16.msra.mxu0 %v2659
    %2795 = vmatmul.bf16.gmra.mxu0 %v2457
    %v2796 = vpop.f32.mrf.mxu0
    %v2797 = vadd.f32 %v2463, %v2796
    %v2798 = vpop.f32.mrf.mxu0
    %2799 = vdwg.mxu0
    %2800 = vmatpush.bf16.msra.mxu0 %v2689
    %2801 = vmatpush.bf16.msra.mxu0 %v2687
    %2802 = vmatpush.bf16.msra.mxu0 %v2685
    %2803 = vmatpush.bf16.msra.mxu0 %v2683
    %2804 = vmatpush.bf16.msra.mxu0 %v2681
    %2805 = vmatpush.bf16.msra.mxu0 %v2679
    %2806 = vmatpush.bf16.msra.mxu0 %v2677
    %2807 = vmatpush.bf16.msra.mxu0 %v2675
    %2808 = vmatmul.bf16.gmra.mxu0 %v2458
    %v2809 = vpop.f32.mrf.mxu0
    %v2810 = vadd.f32 %v2797, %v2809
    %v2811 = vpop.f32.mrf.mxu0
    %2812 = vdwg.mxu0
    %2813 = vmatpush.bf16.msra.mxu0 %v2705
    %2814 = vmatpush.bf16.msra.mxu0 %v2703
    %2815 = vmatpush.bf16.msra.mxu0 %v2701
    %2816 = vmatpush.bf16.msra.mxu0 %v2699
    %2817 = vmatpush.bf16.msra.mxu0 %v2697
    %2818 = vmatpush.bf16.msra.mxu0 %v2695
    %2819 = vmatpush.bf16.msra.mxu0 %v2693
    %2820 = vmatpush.bf16.msra.mxu0 %v2691
    %2821 = vmatmul.bf16.gmra.mxu0 %v2459
    %v2822 = vpop.f32.mrf.mxu0
    %v2823 = vadd.f32 %v2810, %v2822
    %v2824 = vpop.f32.mrf.mxu0
    %2825 = vdwg.mxu0
    %2826 = vmatpush.bf16.msra.mxu0 %v2721
    %2827 = vmatpush.bf16.msra.mxu0 %v2719
    %2828 = vmatpush.bf16.msra.mxu0 %v2717
    %2829 = vmatpush.bf16.msra.mxu0 %v2715
    %2830 = vmatpush.bf16.msra.mxu0 %v2713
    %2831 = vmatpush.bf16.msra.mxu0 %v2711
    %2832 = vmatpush.bf16.msra.mxu0 %v2709
    %2833 = vmatpush.bf16.msra.mxu0 %v2707
    %2834 = vmatmul.bf16.gmra.mxu0 %v2460
    %v2835 = vpop.f32.mrf.mxu0
    %v2836 = vadd.f32 %v2823, %v2835
    %v2837 = vpop.f32.mrf.mxu0
    %2838 = vdwg.mxu0
    %2839 = vmatpush.bf16.msra.mxu0 %v2674
    %2840 = vmatpush.bf16.msra.mxu0 %v2672
    %2841 = vmatpush.bf16.msra.mxu0 %v2670
    %2842 = vmatpush.bf16.msra.mxu0 %v2668
    %2843 = vmatpush.bf16.msra.mxu0 %v2666
    %2844 = vmatpush.bf16.msra.mxu0 %v2664
    %2845 = vmatpush.bf16.msra.mxu0 %v2662
    %2846 = vmatpush.bf16.msra.mxu0 %v2660
    %2847 = vmatmul.bf16.gmra.mxu0 %v2457
    %v2848 = vpop.f32.mrf.mxu0
    %v2849 = vadd.f32 %v2464, %v2848
    %v2850 = vpop.f32.mrf.mxu0
    %2851 = vdwg.mxu0
    %2852 = vmatpush.bf16.msra.mxu0 %v2690
    %2853 = vmatpush.bf16.msra.mxu0 %v2688
    %2854 = vmatpush.bf16.msra.mxu0 %v2686
    %2855 = vmatpush.bf16.msra.mxu0 %v2684
    %2856 = vmatpush.bf16.msra.mxu0 %v2682
    %2857 = vmatpush.bf16.msra.mxu0 %v2680
    %2858 = vmatpush.bf16.msra.mxu0 %v2678
    %2859 = vmatpush.bf16.msra.mxu0 %v2676
    %2860 = vmatmul.bf16.gmra.mxu0 %v2458
    %v2861 = vpop.f32.mrf.mxu0
    %v2862 = vadd.f32 %v2849, %v2861
    %v2863 = vpop.f32.mrf.mxu0
    %2864 = vdwg.mxu0
    %2865 = vmatpush.bf16.msra.mxu0 %v2706
    %2866 = vmatpush.bf16.msra.mxu0 %v2704
    %2867 = vmatpush.bf16.msra.mxu0 %v2702
    %2868 = vmatpush.bf16.msra.mxu0 %v2700
    %2869 = vmatpush.bf16.msra.mxu0 %v2698
    %2870 = vmatpush.bf16.msra.mxu0 %v2696
    %2871 = vmatpush.bf16.msra.mxu0 %v2694
    %2872 = vmatpush.bf16.msra.mxu0 %v2692
    %2873 = vmatmul.bf16.gmra.mxu0 %v2459
    %v2874 = vpop.f32.mrf.mxu0
    %v2875 = vadd.f32 %v2862, %v2874
    %v2876 = vpop.f32.mrf.mxu0
    %2877 = vdwg.mxu0
    %2878 = vmatpush.bf16.msra.mxu0 %v2722
    %2879 = vmatpush.bf16.msra.mxu0 %v2720
    %2880 = vmatpush.bf16.msra.mxu0 %v2718
    %2881 = vmatpush.bf16.msra.mxu0 %v2716
    %2882 = vmatpush.bf16.msra.mxu0 %v2714
    %2883 = vmatpush.bf16.msra.mxu0 %v2712
    %2884 = vmatpush.bf16.msra.mxu0 %v2710
    %2885 = vmatpush.bf16.msra.mxu0 %v2708
    %2886 = vmatmul.bf16.gmra.mxu0 %v2460
    %v2887 = vpop.f32.mrf.mxu0
    %v2888 = vadd.f32 %v2875, %v2887
    %v2889 = vpop.f32.mrf.mxu0
    %2890 = vdwg.mxu0
    %v2891 = vmax.f32 %v2836, 0.0
    %v2892 = vmax.f32 %v2888, 0.0
    %v2893 = vld [vmem:[#allocation7] sm:$0xf]
    %v2894 = vld [vmem:[#allocation7 + $0x4] sm:$0xf]
    %v2895 = vld [vmem:[#allocation7 + $0x8] sm:$0xf]
    %v2896 = vld [vmem:[#allocation7 + $0xc] sm:$0xf]
    %v2897 = vld [vmem:[#allocation7 + $0x10] sm:$0xf]
    %v2898 = vld [vmem:[#allocation7 + $0x14] sm:$0xf]
    %v2899 = vld [vmem:[#allocation7 + $0x18] sm:$0xf]
    %v2900 = vld [vmem:[#allocation7 + $0x1c] sm:$0xf]
    %v2901 = vld [vmem:[#allocation7 + $0x20] sm:$0xf]
    %v2902 = vld [vmem:[#allocation7 + $0x24] sm:$0xf]
    %v2903 = vld [vmem:[#allocation7 + $0x28] sm:$0xf]
    %v2904 = vld [vmem:[#allocation7 + $0x2c] sm:$0xf]
    %v2905 = vld [vmem:[#allocation7 + $0x30] sm:$0xf]
    %v2906 = vld [vmem:[#allocation7 + $0x34] sm:$0xf]
    %v2907 = vld [vmem:[#allocation7 + $0x38] sm:$0xf]
    %v2908 = vld [vmem:[#allocation7 + $0x3c] sm:$0xf]
    %v2909 = vld [vmem:[#allocation7 + $0x40] sm:$0xf]
    %v2910 = vld [vmem:[#allocation7 + $0x44] sm:$0xf]
    %v2911 = vld [vmem:[#allocation7 + $0x48] sm:$0xf]
    %v2912 = vld [vmem:[#allocation7 + $0x4c] sm:$0xf]
    %v2913 = vld [vmem:[#allocation7 + $0x50] sm:$0xf]
    %v2914 = vld [vmem:[#allocation7 + $0x54] sm:$0xf]
    %v2915 = vld [vmem:[#allocation7 + $0x58] sm:$0xf]
    %v2916 = vld [vmem:[#allocation7 + $0x5c] sm:$0xf]
    %v2917 = vld [vmem:[#allocation7 + $0x60] sm:$0xf]
    %v2918 = vld [vmem:[#allocation7 + $0x64] sm:$0xf]
    %v2919 = vld [vmem:[#allocation7 + $0x68] sm:$0xf]
    %v2920 = vld [vmem:[#allocation7 + $0x6c] sm:$0xf]
    %v2921 = vld [vmem:[#allocation7 + $0x70] sm:$0xf]
    %v2922 = vld [vmem:[#allocation7 + $0x74] sm:$0xf]
    %v2923 = vld [vmem:[#allocation7 + $0x78] sm:$0xf]
    %v2924 = vld [vmem:[#allocation7 + $0x7c] sm:$0xf]
    %v2925 = vpack.c.bf16 %v2891, %v2891
    %v2926 = vpack.c.bf16 %v2892, %v2892
    %v2927 = vld [vmem:[%s13] sm:$0x1]
    %v2929 = vperm.slane %v2927, 0
    %v2963 = vunpack.c.l.b16 %v2893
    %v2964 = vunpack.c.l.b16 %v2894
    %v2965 = vunpack.c.l.b16 %v2895
    %v2966 = vunpack.c.l.b16 %v2896
    %v2967 = vunpack.c.l.b16 %v2897
    %v2968 = vunpack.c.l.b16 %v2898
    %v2969 = vunpack.c.l.b16 %v2899
    %v2970 = vunpack.c.l.b16 %v2900
    %v2971 = vunpack.c.l.b16 %v2901
    %v2972 = vunpack.c.l.b16 %v2902
    %v2973 = vunpack.c.l.b16 %v2903
    %v2974 = vunpack.c.l.b16 %v2904
    %v2975 = vunpack.c.l.b16 %v2905
    %v2976 = vunpack.c.l.b16 %v2906
    %v2977 = vunpack.c.l.b16 %v2907
    %v2978 = vunpack.c.l.b16 %v2908
    %v2979 = vunpack.c.l.b16 %v2909
    %v2980 = vunpack.c.l.b16 %v2910
    %v2981 = vunpack.c.l.b16 %v2911
    %v2982 = vunpack.c.l.b16 %v2912
    %v2983 = vunpack.c.l.b16 %v2913
    %v2984 = vunpack.c.l.b16 %v2914
    %v2985 = vunpack.c.l.b16 %v2915
    %v2986 = vunpack.c.l.b16 %v2916
    %v2987 = vunpack.c.l.b16 %v2917
    %v2988 = vunpack.c.l.b16 %v2918
    %v2989 = vunpack.c.l.b16 %v2919
    %v2990 = vunpack.c.l.b16 %v2920
    %v2991 = vunpack.c.l.b16 %v2921
    %v2992 = vunpack.c.l.b16 %v2922
    %v2993 = vunpack.c.l.b16 %v2923
    %v2994 = vunpack.c.l.b16 %v2924
    %v2995 = vpack.c.b16 %v2964, %v2963
    %v2996 = vpack.c.b16 %v2966, %v2965
    %v2997 = vpack.c.b16 %v2968, %v2967
    %v2998 = vpack.c.b16 %v2970, %v2969
    %v2999 = vpack.c.b16 %v2972, %v2971
    %v3000 = vpack.c.b16 %v2974, %v2973
    %v3001 = vpack.c.b16 %v2976, %v2975
    %v3002 = vpack.c.b16 %v2978, %v2977
    %v3003 = vpack.c.b16 %v2980, %v2979
    %v3004 = vpack.c.b16 %v2982, %v2981
    %v3005 = vpack.c.b16 %v2984, %v2983
    %v3006 = vpack.c.b16 %v2986, %v2985
    %v3007 = vpack.c.b16 %v2988, %v2987
    %v3008 = vpack.c.b16 %v2990, %v2989
    %v3009 = vpack.c.b16 %v2992, %v2991
    %v3010 = vpack.c.b16 %v2994, %v2993
    %3027 = vmatpush.bf16.msra.mxu0 %v3002
    %3028 = vmatpush.bf16.msra.mxu0 %v3001
    %3029 = vmatpush.bf16.msra.mxu0 %v3000
    %3030 = vmatpush.bf16.msra.mxu0 %v2999
    %3031 = vmatpush.bf16.msra.mxu0 %v2998
    %3032 = vmatpush.bf16.msra.mxu0 %v2997
    %3033 = vmatpush.bf16.msra.mxu0 %v2996
    %3034 = vmatpush.bf16.msra.mxu0 %v2995
    %3035 = vmatmul.bf16.gmra.mxu0 %v2925
    %v3036 = vpop.f32.mrf.mxu0
    %v3037 = vadd.f32 %v2929, %v3036
    %v3038 = vpop.f32.mrf.mxu0
    %3039 = vdwg.mxu0
    %3040 = vmatpush.bf16.msra.mxu0 %v3010
    %3041 = vmatpush.bf16.msra.mxu0 %v3009
    %3042 = vmatpush.bf16.msra.mxu0 %v3008
    %3043 = vmatpush.bf16.msra.mxu0 %v3007
    %3044 = vmatpush.bf16.msra.mxu0 %v3006
    %3045 = vmatpush.bf16.msra.mxu0 %v3005
    %3046 = vmatpush.bf16.msra.mxu0 %v3004
    %3047 = vmatpush.bf16.msra.mxu0 %v3003
    %3048 = vmatmul.bf16.gmra.mxu0 %v2926
    %v3049 = vpop.f32.mrf.mxu0
    %v3050 = vadd.f32 %v3037, %v3049
    %v3051 = vpop.f32.mrf.mxu0
    %3052 = vdwg.mxu0
    %v3053 = vmul.f32 %v3050, 0.5
    %v3054 = vmul.f32 %v3053, 1.442695
    %v3055 = vpow.pop %v3054
    %3057 = vrot.lane.b32.xlu0 %v3055, 64
    %v3058 = vpop.permute.xlu0 %3057
    %v3060 = vmul.f32 %v207, %v3058
    %v3061 = vadd.f32 %v3060, %v3050
    %v3062 = vld [vmem:[#allocation9] sm:$0xff]
    %v3063 = vld [vmem:[#allocation9 + $0x8] sm:$0xff]
    %v3064 = vld [vmem:[#allocation9 + $0x10] sm:$0xff]
    %v3065 = vld [vmem:[#allocation9 + $0x18] sm:$0xff]
    %v3066 = vld [vmem:[#allocation9 + $0x20] sm:$0xff]
    %v3067 = vld [vmem:[#allocation9 + $0x28] sm:$0xff]
    %v3068 = vld [vmem:[#allocation9 + $0x30] sm:$0xff]
    %v3069 = vld [vmem:[#allocation9 + $0x38] sm:$0xff]
    %v3070 = vld [vmem:[#allocation9 + $0x40] sm:$0xff]
    %v3071 = vld [vmem:[#allocation9 + $0x48] sm:$0xff]
    %v3072 = vld [vmem:[#allocation9 + $0x50] sm:$0xff]
    %v3073 = vld [vmem:[#allocation9 + $0x58] sm:$0xff]
    %v3074 = vld [vmem:[#allocation9 + $0x60] sm:$0xff]
    %v3075 = vld [vmem:[#allocation9 + $0x68] sm:$0xff]
    %v3076 = vld [vmem:[#allocation9 + $0x70] sm:$0xff]
    %v3077 = vld [vmem:[#allocation9 + $0x78] sm:$0xff]
    %v3078 = vpack.c.bf16 %v3061, %v3061
    %v3079 = vld [vmem:[#allocation10] sm:$0xff]
    %v3080 = vld [vmem:[#allocation10 + $0x8] sm:$0xff]
    %v3081 = vld [vmem:[#allocation10 + $0x10] sm:$0xff]
    %v3082 = vld [vmem:[#allocation10 + $0x18] sm:$0xff]
    %v3083 = vld [vmem:[#allocation10 + $0x20] sm:$0xff]
    %v3084 = vld [vmem:[#allocation10 + $0x28] sm:$0xff]
    %v3085 = vld [vmem:[#allocation10 + $0x30] sm:$0xff]
    %v3086 = vld [vmem:[#allocation10 + $0x38] sm:$0xff]
    %v3087 = vld [vmem:[#allocation10 + $0x40] sm:$0xff]
    %v3088 = vld [vmem:[#allocation10 + $0x48] sm:$0xff]
    %v3089 = vld [vmem:[#allocation10 + $0x50] sm:$0xff]
    %v3090 = vld [vmem:[#allocation10 + $0x58] sm:$0xff]
    %v3091 = vld [vmem:[#allocation10 + $0x60] sm:$0xff]
    %v3092 = vld [vmem:[#allocation10 + $0x68] sm:$0xff]
    %v3093 = vld [vmem:[#allocation10 + $0x70] sm:$0xff]
    %v3094 = vld [vmem:[#allocation10 + $0x78] sm:$0xff]
    %v3095 = vld [vmem:[#allocation10 + $0x80] sm:$0xff]
    %v3096 = vld [vmem:[#allocation10 + $0x88] sm:$0xff]
    %v3097 = vld [vmem:[#allocation10 + $0x90] sm:$0xff]
    %v3098 = vld [vmem:[#allocation10 + $0x98] sm:$0xff]
    %v3099 = vld [vmem:[#allocation10 + $0xa0] sm:$0xff]
    %v3100 = vld [vmem:[#allocation10 + $0xa8] sm:$0xff]
    %v3101 = vld [vmem:[#allocation10 + $0xb0] sm:$0xff]
    %v3102 = vld [vmem:[#allocation10 + $0xb8] sm:$0xff]
    %v3103 = vld [vmem:[#allocation10 + $0xc0] sm:$0xff]
    %v3104 = vld [vmem:[#allocation10 + $0xc8] sm:$0xff]
    %v3105 = vld [vmem:[#allocation10 + $0xd0] sm:$0xff]
    %v3106 = vld [vmem:[#allocation10 + $0xd8] sm:$0xff]
    %v3107 = vld [vmem:[#allocation10 + $0xe0] sm:$0xff]
    %v3108 = vld [vmem:[#allocation10 + $0xe8] sm:$0xff]
    %v3109 = vld [vmem:[#allocation10 + $0xf0] sm:$0xff]
    %v3110 = vld [vmem:[#allocation10 + $0xf8] sm:$0xff]
    %v3111 = vld [vmem:[#allocation10 + $0x100] sm:$0xff]
    %v3112 = vld [vmem:[#allocation10 + $0x108] sm:$0xff]
    %v3113 = vld [vmem:[#allocation10 + $0x110] sm:$0xff]
    %v3114 = vld [vmem:[#allocation10 + $0x118] sm:$0xff]
    %v3115 = vld [vmem:[#allocation10 + $0x120] sm:$0xff]
    %v3116 = vld [vmem:[#allocation10 + $0x128] sm:$0xff]
    %v3117 = vld [vmem:[#allocation10 + $0x130] sm:$0xff]
    %v3118 = vld [vmem:[#allocation10 + $0x138] sm:$0xff]
    %v3119 = vld [vmem:[#allocation10 + $0x140] sm:$0xff]
    %v3120 = vld [vmem:[#allocation10 + $0x148] sm:$0xff]
    %v3121 = vld [vmem:[#allocation10 + $0x150] sm:$0xff]
    %v3122 = vld [vmem:[#allocation10 + $0x158] sm:$0xff]
    %v3123 = vld [vmem:[#allocation10 + $0x160] sm:$0xff]
    %v3124 = vld [vmem:[#allocation10 + $0x168] sm:$0xff]
    %v3125 = vld [vmem:[#allocation10 + $0x170] sm:$0xff]
    %v3126 = vld [vmem:[#allocation10 + $0x178] sm:$0xff]
    %v3127 = vld [vmem:[#allocation10 + $0x180] sm:$0xff]
    %v3128 = vld [vmem:[#allocation10 + $0x188] sm:$0xff]
    %v3129 = vld [vmem:[#allocation10 + $0x190] sm:$0xff]
    %v3130 = vld [vmem:[#allocation10 + $0x198] sm:$0xff]
    %v3131 = vld [vmem:[#allocation10 + $0x1a0] sm:$0xff]
    %v3132 = vld [vmem:[#allocation10 + $0x1a8] sm:$0xff]
    %v3133 = vld [vmem:[#allocation10 + $0x1b0] sm:$0xff]
    %v3134 = vld [vmem:[#allocation10 + $0x1b8] sm:$0xff]
    %v3135 = vld [vmem:[#allocation10 + $0x1c0] sm:$0xff]
    %v3136 = vld [vmem:[#allocation10 + $0x1c8] sm:$0xff]
    %v3137 = vld [vmem:[#allocation10 + $0x1d0] sm:$0xff]
    %v3138 = vld [vmem:[#allocation10 + $0x1d8] sm:$0xff]
    %v3139 = vld [vmem:[#allocation10 + $0x1e0] sm:$0xff]
    %v3140 = vld [vmem:[#allocation10 + $0x1e8] sm:$0xff]
    %v3141 = vld [vmem:[#allocation10 + $0x1f0] sm:$0xff]
    %v3142 = vld [vmem:[#allocation10 + $0x1f8] sm:$0xff]
    %v3143 = vld [vmem:[#allocation10 + $0x200] sm:$0xff]
    %v3144 = vld [vmem:[#allocation10 + $0x208] sm:$0xff]
    %v3145 = vld [vmem:[#allocation10 + $0x210] sm:$0xff]
    %v3146 = vld [vmem:[#allocation10 + $0x218] sm:$0xff]
    %v3147 = vld [vmem:[#allocation10 + $0x220] sm:$0xff]
    %v3148 = vld [vmem:[#allocation10 + $0x228] sm:$0xff]
    %v3149 = vld [vmem:[#allocation10 + $0x230] sm:$0xff]
    %v3150 = vld [vmem:[#allocation10 + $0x238] sm:$0xff]
    %v3151 = vld [vmem:[#allocation10 + $0x240] sm:$0xff]
    %v3152 = vld [vmem:[#allocation10 + $0x248] sm:$0xff]
    %v3153 = vld [vmem:[#allocation10 + $0x250] sm:$0xff]
    %v3154 = vld [vmem:[#allocation10 + $0x258] sm:$0xff]
    %v3155 = vld [vmem:[#allocation10 + $0x260] sm:$0xff]
    %v3156 = vld [vmem:[#allocation10 + $0x268] sm:$0xff]
    %v3157 = vld [vmem:[#allocation10 + $0x270] sm:$0xff]
    %v3158 = vld [vmem:[#allocation10 + $0x278] sm:$0xff]
    %v3159 = vld [vmem:[#allocation10 + $0x280] sm:$0xff]
    %v3160 = vld [vmem:[#allocation10 + $0x288] sm:$0xff]
    %v3161 = vld [vmem:[#allocation10 + $0x290] sm:$0xff]
    %v3162 = vld [vmem:[#allocation10 + $0x298] sm:$0xff]
    %v3163 = vld [vmem:[#allocation10 + $0x2a0] sm:$0xff]
    %v3164 = vld [vmem:[#allocation10 + $0x2a8] sm:$0xff]
    %v3165 = vld [vmem:[#allocation10 + $0x2b0] sm:$0xff]
    %v3166 = vld [vmem:[#allocation10 + $0x2b8] sm:$0xff]
    %v3167 = vld [vmem:[#allocation10 + $0x2c0] sm:$0xff]
    %v3168 = vld [vmem:[#allocation10 + $0x2c8] sm:$0xff]
    %v3169 = vld [vmem:[#allocation10 + $0x2d0] sm:$0xff]
    %v3170 = vld [vmem:[#allocation10 + $0x2d8] sm:$0xff]
    %v3171 = vld [vmem:[#allocation10 + $0x2e0] sm:$0xff]
    %v3172 = vld [vmem:[#allocation10 + $0x2e8] sm:$0xff]
    %v3173 = vld [vmem:[#allocation10 + $0x2f0] sm:$0xff]
    %v3174 = vld [vmem:[#allocation10 + $0x2f8] sm:$0xff]
    %v3175 = vld [vmem:[#allocation10 + $0x300] sm:$0xff]
    %v3176 = vld [vmem:[#allocation10 + $0x308] sm:$0xff]
    %v3177 = vld [vmem:[#allocation10 + $0x310] sm:$0xff]
    %v3178 = vld [vmem:[#allocation10 + $0x318] sm:$0xff]
    %v3179 = vld [vmem:[#allocation10 + $0x320] sm:$0xff]
    %v3180 = vld [vmem:[#allocation10 + $0x328] sm:$0xff]
    %v3181 = vld [vmem:[#allocation10 + $0x330] sm:$0xff]
    %v3182 = vld [vmem:[#allocation10 + $0x338] sm:$0xff]
    %v3183 = vld [vmem:[#allocation10 + $0x340] sm:$0xff]
    %v3184 = vld [vmem:[#allocation10 + $0x348] sm:$0xff]
    %v3185 = vld [vmem:[#allocation10 + $0x350] sm:$0xff]
    %v3186 = vld [vmem:[#allocation10 + $0x358] sm:$0xff]
    %v3187 = vld [vmem:[#allocation10 + $0x360] sm:$0xff]
    %v3188 = vld [vmem:[#allocation10 + $0x368] sm:$0xff]
    %v3189 = vld [vmem:[#allocation10 + $0x370] sm:$0xff]
    %v3190 = vld [vmem:[#allocation10 + $0x378] sm:$0xff]
    %v3191 = vld [vmem:[#allocation10 + $0x380] sm:$0xff]
    %v3192 = vld [vmem:[#allocation10 + $0x388] sm:$0xff]
    %v3193 = vld [vmem:[#allocation10 + $0x390] sm:$0xff]
    %v3194 = vld [vmem:[#allocation10 + $0x398] sm:$0xff]
    %v3195 = vld [vmem:[#allocation10 + $0x3a0] sm:$0xff]
    %v3196 = vld [vmem:[#allocation10 + $0x3a8] sm:$0xff]
    %v3197 = vld [vmem:[#allocation10 + $0x3b0] sm:$0xff]
    %v3198 = vld [vmem:[#allocation10 + $0x3b8] sm:$0xff]
    %v3199 = vld [vmem:[#allocation10 + $0x3c0] sm:$0xff]
    %v3200 = vld [vmem:[#allocation10 + $0x3c8] sm:$0xff]
    %v3201 = vld [vmem:[#allocation10 + $0x3d0] sm:$0xff]
    %v3202 = vld [vmem:[#allocation10 + $0x3d8] sm:$0xff]
    %v3203 = vld [vmem:[#allocation10 + $0x3e0] sm:$0xff]
    %v3204 = vld [vmem:[#allocation10 + $0x3e8] sm:$0xff]
    %v3205 = vld [vmem:[#allocation10 + $0x3f0] sm:$0xff]
    %v3206 = vld [vmem:[#allocation10 + $0x3f8] sm:$0xff]
    %v3335 = vunpack.c.l.b16 %v3079
    %v3336 = vunpack.c.h.b16 %v3079
    %v3337 = vunpack.c.l.b16 %v3080
    %v3338 = vunpack.c.h.b16 %v3080
    %v3339 = vunpack.c.l.b16 %v3081
    %v3340 = vunpack.c.h.b16 %v3081
    %v3341 = vunpack.c.l.b16 %v3082
    %v3342 = vunpack.c.h.b16 %v3082
    %v3343 = vunpack.c.l.b16 %v3083
    %v3344 = vunpack.c.h.b16 %v3083
    %v3345 = vunpack.c.l.b16 %v3084
    %v3346 = vunpack.c.h.b16 %v3084
    %v3347 = vunpack.c.l.b16 %v3085
    %v3348 = vunpack.c.h.b16 %v3085
    %v3349 = vunpack.c.l.b16 %v3086
    %v3350 = vunpack.c.h.b16 %v3086
    %v3351 = vunpack.c.l.b16 %v3087
    %v3352 = vunpack.c.h.b16 %v3087
    %v3353 = vunpack.c.l.b16 %v3088
    %v3354 = vunpack.c.h.b16 %v3088
    %v3355 = vunpack.c.l.b16 %v3089
    %v3356 = vunpack.c.h.b16 %v3089
    %v3357 = vunpack.c.l.b16 %v3090
    %v3358 = vunpack.c.h.b16 %v3090
    %v3359 = vunpack.c.l.b16 %v3091
    %v3360 = vunpack.c.h.b16 %v3091
    %v3361 = vunpack.c.l.b16 %v3092
    %v3362 = vunpack.c.h.b16 %v3092
    %v3363 = vunpack.c.l.b16 %v3093
    %v3364 = vunpack.c.h.b16 %v3093
    %v3365 = vunpack.c.l.b16 %v3094
    %v3366 = vunpack.c.h.b16 %v3094
    %v3367 = vunpack.c.l.b16 %v3095
    %v3368 = vunpack.c.h.b16 %v3095
    %v3369 = vunpack.c.l.b16 %v3096
    %v3370 = vunpack.c.h.b16 %v3096
    %v3371 = vunpack.c.l.b16 %v3097
    %v3372 = vunpack.c.h.b16 %v3097
    %v3373 = vunpack.c.l.b16 %v3098
    %v3374 = vunpack.c.h.b16 %v3098
    %v3375 = vunpack.c.l.b16 %v3099
    %v3376 = vunpack.c.h.b16 %v3099
    %v3377 = vunpack.c.l.b16 %v3100
    %v3378 = vunpack.c.h.b16 %v3100
    %v3379 = vunpack.c.l.b16 %v3101
    %v3380 = vunpack.c.h.b16 %v3101
    %v3381 = vunpack.c.l.b16 %v3102
    %v3382 = vunpack.c.h.b16 %v3102
    %v3383 = vunpack.c.l.b16 %v3103
    %v3384 = vunpack.c.h.b16 %v3103
    %v3385 = vunpack.c.l.b16 %v3104
    %v3386 = vunpack.c.h.b16 %v3104
    %v3387 = vunpack.c.l.b16 %v3105
    %v3388 = vunpack.c.h.b16 %v3105
    %v3389 = vunpack.c.l.b16 %v3106
    %v3390 = vunpack.c.h.b16 %v3106
    %v3391 = vunpack.c.l.b16 %v3107
    %v3392 = vunpack.c.h.b16 %v3107
    %v3393 = vunpack.c.l.b16 %v3108
    %v3394 = vunpack.c.h.b16 %v3108
    %v3395 = vunpack.c.l.b16 %v3109
    %v3396 = vunpack.c.h.b16 %v3109
    %v3397 = vunpack.c.l.b16 %v3110
    %v3398 = vunpack.c.h.b16 %v3110
    %v3399 = vunpack.c.l.b16 %v3111
    %v3400 = vunpack.c.h.b16 %v3111
    %v3401 = vunpack.c.l.b16 %v3112
    %v3402 = vunpack.c.h.b16 %v3112
    %v3403 = vunpack.c.l.b16 %v3113
    %v3404 = vunpack.c.h.b16 %v3113
    %v3405 = vunpack.c.l.b16 %v3114
    %v3406 = vunpack.c.h.b16 %v3114
    %v3407 = vunpack.c.l.b16 %v3115
    %v3408 = vunpack.c.h.b16 %v3115
    %v3409 = vunpack.c.l.b16 %v3116
    %v3410 = vunpack.c.h.b16 %v3116
    %v3411 = vunpack.c.l.b16 %v3117
    %v3412 = vunpack.c.h.b16 %v3117
    %v3413 = vunpack.c.l.b16 %v3118
    %v3414 = vunpack.c.h.b16 %v3118
    %v3415 = vunpack.c.l.b16 %v3119
    %v3416 = vunpack.c.h.b16 %v3119
    %v3417 = vunpack.c.l.b16 %v3120
    %v3418 = vunpack.c.h.b16 %v3120
    %v3419 = vunpack.c.l.b16 %v3121
    %v3420 = vunpack.c.h.b16 %v3121
    %v3421 = vunpack.c.l.b16 %v3122
    %v3422 = vunpack.c.h.b16 %v3122
    %v3423 = vunpack.c.l.b16 %v3123
    %v3424 = vunpack.c.h.b16 %v3123
    %v3425 = vunpack.c.l.b16 %v3124
    %v3426 = vunpack.c.h.b16 %v3124
    %v3427 = vunpack.c.l.b16 %v3125
    %v3428 = vunpack.c.h.b16 %v3125
    %v3429 = vunpack.c.l.b16 %v3126
    %v3430 = vunpack.c.h.b16 %v3126
    %v3431 = vunpack.c.l.b16 %v3127
    %v3432 = vunpack.c.h.b16 %v3127
    %v3433 = vunpack.c.l.b16 %v3128
    %v3434 = vunpack.c.h.b16 %v3128
    %v3435 = vunpack.c.l.b16 %v3129
    %v3436 = vunpack.c.h.b16 %v3129
    %v3437 = vunpack.c.l.b16 %v3130
    %v3438 = vunpack.c.h.b16 %v3130
    %v3439 = vunpack.c.l.b16 %v3131
    %v3440 = vunpack.c.h.b16 %v3131
    %v3441 = vunpack.c.l.b16 %v3132
    %v3442 = vunpack.c.h.b16 %v3132
    %v3443 = vunpack.c.l.b16 %v3133
    %v3444 = vunpack.c.h.b16 %v3133
    %v3445 = vunpack.c.l.b16 %v3134
    %v3446 = vunpack.c.h.b16 %v3134
    %v3447 = vunpack.c.l.b16 %v3135
    %v3448 = vunpack.c.h.b16 %v3135
    %v3449 = vunpack.c.l.b16 %v3136
    %v3450 = vunpack.c.h.b16 %v3136
    %v3451 = vunpack.c.l.b16 %v3137
    %v3452 = vunpack.c.h.b16 %v3137
    %v3453 = vunpack.c.l.b16 %v3138
    %v3454 = vunpack.c.h.b16 %v3138
    %v3455 = vunpack.c.l.b16 %v3139
    %v3456 = vunpack.c.h.b16 %v3139
    %v3457 = vunpack.c.l.b16 %v3140
    %v3458 = vunpack.c.h.b16 %v3140
    %v3459 = vunpack.c.l.b16 %v3141
    %v3460 = vunpack.c.h.b16 %v3141
    %v3461 = vunpack.c.l.b16 %v3142
    %v3462 = vunpack.c.h.b16 %v3142
    %v3463 = vunpack.c.l.b16 %v3143
    %v3464 = vunpack.c.h.b16 %v3143
    %v3465 = vunpack.c.l.b16 %v3144
    %v3466 = vunpack.c.h.b16 %v3144
    %v3467 = vunpack.c.l.b16 %v3145
    %v3468 = vunpack.c.h.b16 %v3145
    %v3469 = vunpack.c.l.b16 %v3146
    %v3470 = vunpack.c.h.b16 %v3146
    %v3471 = vunpack.c.l.b16 %v3147
    %v3472 = vunpack.c.h.b16 %v3147
    %v3473 = vunpack.c.l.b16 %v3148
    %v3474 = vunpack.c.h.b16 %v3148
    %v3475 = vunpack.c.l.b16 %v3149
    %v3476 = vunpack.c.h.b16 %v3149
    %v3477 = vunpack.c.l.b16 %v3150
    %v3478 = vunpack.c.h.b16 %v3150
    %v3479 = vunpack.c.l.b16 %v3151
    %v3480 = vunpack.c.h.b16 %v3151
    %v3481 = vunpack.c.l.b16 %v3152
    %v3482 = vunpack.c.h.b16 %v3152
    %v3483 = vunpack.c.l.b16 %v3153
    %v3484 = vunpack.c.h.b16 %v3153
    %v3485 = vunpack.c.l.b16 %v3154
    %v3486 = vunpack.c.h.b16 %v3154
    %v3487 = vunpack.c.l.b16 %v3155
    %v3488 = vunpack.c.h.b16 %v3155
    %v3489 = vunpack.c.l.b16 %v3156
    %v3490 = vunpack.c.h.b16 %v3156
    %v3491 = vunpack.c.l.b16 %v3157
    %v3492 = vunpack.c.h.b16 %v3157
    %v3493 = vunpack.c.l.b16 %v3158
    %v3494 = vunpack.c.h.b16 %v3158
    %v3495 = vunpack.c.l.b16 %v3159
    %v3496 = vunpack.c.h.b16 %v3159
    %v3497 = vunpack.c.l.b16 %v3160
    %v3498 = vunpack.c.h.b16 %v3160
    %v3499 = vunpack.c.l.b16 %v3161
    %v3500 = vunpack.c.h.b16 %v3161
    %v3501 = vunpack.c.l.b16 %v3162
    %v3502 = vunpack.c.h.b16 %v3162
    %v3503 = vunpack.c.l.b16 %v3163
    %v3504 = vunpack.c.h.b16 %v3163
    %v3505 = vunpack.c.l.b16 %v3164
    %v3506 = vunpack.c.h.b16 %v3164
    %v3507 = vunpack.c.l.b16 %v3165
    %v3508 = vunpack.c.h.b16 %v3165
    %v3509 = vunpack.c.l.b16 %v3166
    %v3510 = vunpack.c.h.b16 %v3166
    %v3511 = vunpack.c.l.b16 %v3167
    %v3512 = vunpack.c.h.b16 %v3167
    %v3513 = vunpack.c.l.b16 %v3168
    %v3514 = vunpack.c.h.b16 %v3168
    %v3515 = vunpack.c.l.b16 %v3169
    %v3516 = vunpack.c.h.b16 %v3169
    %v3517 = vunpack.c.l.b16 %v3170
    %v3518 = vunpack.c.h.b16 %v3170
    %v3519 = vunpack.c.l.b16 %v3171
    %v3520 = vunpack.c.h.b16 %v3171
    %v3521 = vunpack.c.l.b16 %v3172
    %v3522 = vunpack.c.h.b16 %v3172
    %v3523 = vunpack.c.l.b16 %v3173
    %v3524 = vunpack.c.h.b16 %v3173
    %v3525 = vunpack.c.l.b16 %v3174
    %v3526 = vunpack.c.h.b16 %v3174
    %v3527 = vunpack.c.l.b16 %v3175
    %v3528 = vunpack.c.h.b16 %v3175
    %v3529 = vunpack.c.l.b16 %v3176
    %v3530 = vunpack.c.h.b16 %v3176
    %v3531 = vunpack.c.l.b16 %v3177
    %v3532 = vunpack.c.h.b16 %v3177
    %v3533 = vunpack.c.l.b16 %v3178
    %v3534 = vunpack.c.h.b16 %v3178
    %v3535 = vunpack.c.l.b16 %v3179
    %v3536 = vunpack.c.h.b16 %v3179
    %v3537 = vunpack.c.l.b16 %v3180
    %v3538 = vunpack.c.h.b16 %v3180
    %v3539 = vunpack.c.l.b16 %v3181
    %v3540 = vunpack.c.h.b16 %v3181
    %v3541 = vunpack.c.l.b16 %v3182
    %v3542 = vunpack.c.h.b16 %v3182
    %v3543 = vunpack.c.l.b16 %v3183
    %v3544 = vunpack.c.h.b16 %v3183
    %v3545 = vunpack.c.l.b16 %v3184
    %v3546 = vunpack.c.h.b16 %v3184
    %v3547 = vunpack.c.l.b16 %v3185
    %v3548 = vunpack.c.h.b16 %v3185
    %v3549 = vunpack.c.l.b16 %v3186
    %v3550 = vunpack.c.h.b16 %v3186
    %v3551 = vunpack.c.l.b16 %v3187
    %v3552 = vunpack.c.h.b16 %v3187
    %v3553 = vunpack.c.l.b16 %v3188
    %v3554 = vunpack.c.h.b16 %v3188
    %v3555 = vunpack.c.l.b16 %v3189
    %v3556 = vunpack.c.h.b16 %v3189
    %v3557 = vunpack.c.l.b16 %v3190
    %v3558 = vunpack.c.h.b16 %v3190
    %v3559 = vunpack.c.l.b16 %v3191
    %v3560 = vunpack.c.h.b16 %v3191
    %v3561 = vunpack.c.l.b16 %v3192
    %v3562 = vunpack.c.h.b16 %v3192
    %v3563 = vunpack.c.l.b16 %v3193
    %v3564 = vunpack.c.h.b16 %v3193
    %v3565 = vunpack.c.l.b16 %v3194
    %v3566 = vunpack.c.h.b16 %v3194
    %v3567 = vunpack.c.l.b16 %v3195
    %v3568 = vunpack.c.h.b16 %v3195
    %v3569 = vunpack.c.l.b16 %v3196
    %v3570 = vunpack.c.h.b16 %v3196
    %v3571 = vunpack.c.l.b16 %v3197
    %v3572 = vunpack.c.h.b16 %v3197
    %v3573 = vunpack.c.l.b16 %v3198
    %v3574 = vunpack.c.h.b16 %v3198
    %v3575 = vunpack.c.l.b16 %v3199
    %v3576 = vunpack.c.h.b16 %v3199
    %v3577 = vunpack.c.l.b16 %v3200
    %v3578 = vunpack.c.h.b16 %v3200
    %v3579 = vunpack.c.l.b16 %v3201
    %v3580 = vunpack.c.h.b16 %v3201
    %v3581 = vunpack.c.l.b16 %v3202
    %v3582 = vunpack.c.h.b16 %v3202
    %v3583 = vunpack.c.l.b16 %v3203
    %v3584 = vunpack.c.h.b16 %v3203
    %v3585 = vunpack.c.l.b16 %v3204
    %v3586 = vunpack.c.h.b16 %v3204
    %v3587 = vunpack.c.l.b16 %v3205
    %v3588 = vunpack.c.h.b16 %v3205
    %v3589 = vunpack.c.l.b16 %v3206
    %v3590 = vunpack.c.h.b16 %v3206
    %v3591 = vpack.c.b16 %v3339, %v3335
    %v3592 = vpack.c.b16 %v3340, %v3336
    %v3593 = vpack.c.b16 %v3341, %v3337
    %v3594 = vpack.c.b16 %v3342, %v3338
    %v3595 = vpack.c.b16 %v3347, %v3343
    %v3596 = vpack.c.b16 %v3348, %v3344
    %v3597 = vpack.c.b16 %v3349, %v3345
    %v3598 = vpack.c.b16 %v3350, %v3346
    %v3599 = vpack.c.b16 %v3355, %v3351
    %v3600 = vpack.c.b16 %v3356, %v3352
    %v3601 = vpack.c.b16 %v3357, %v3353
    %v3602 = vpack.c.b16 %v3358, %v3354
    %v3603 = vpack.c.b16 %v3363, %v3359
    %v3604 = vpack.c.b16 %v3364, %v3360
    %v3605 = vpack.c.b16 %v3365, %v3361
    %v3606 = vpack.c.b16 %v3366, %v3362
    %v3607 = vpack.c.b16 %v3371, %v3367
    %v3608 = vpack.c.b16 %v3372, %v3368
    %v3609 = vpack.c.b16 %v3373, %v3369
    %v3610 = vpack.c.b16 %v3374, %v3370
    %v3611 = vpack.c.b16 %v3379, %v3375
    %v3612 = vpack.c.b16 %v3380, %v3376
    %v3613 = vpack.c.b16 %v3381, %v3377
    %v3614 = vpack.c.b16 %v3382, %v3378
    %v3615 = vpack.c.b16 %v3387, %v3383
    %v3616 = vpack.c.b16 %v3388, %v3384
    %v3617 = vpack.c.b16 %v3389, %v3385
    %v3618 = vpack.c.b16 %v3390, %v3386
    %v3619 = vpack.c.b16 %v3395, %v3391
    %v3620 = vpack.c.b16 %v3396, %v3392
    %v3621 = vpack.c.b16 %v3397, %v3393
    %v3622 = vpack.c.b16 %v3398, %v3394
    %v3623 = vpack.c.b16 %v3403, %v3399
    %v3624 = vpack.c.b16 %v3404, %v3400
    %v3625 = vpack.c.b16 %v3405, %v3401
    %v3626 = vpack.c.b16 %v3406, %v3402
    %v3627 = vpack.c.b16 %v3411, %v3407
    %v3628 = vpack.c.b16 %v3412, %v3408
    %v3629 = vpack.c.b16 %v3413, %v3409
    %v3630 = vpack.c.b16 %v3414, %v3410
    %v3631 = vpack.c.b16 %v3419, %v3415
    %v3632 = vpack.c.b16 %v3420, %v3416
    %v3633 = vpack.c.b16 %v3421, %v3417
    %v3634 = vpack.c.b16 %v3422, %v3418
    %v3635 = vpack.c.b16 %v3427, %v3423
    %v3636 = vpack.c.b16 %v3428, %v3424
    %v3637 = vpack.c.b16 %v3429, %v3425
    %v3638 = vpack.c.b16 %v3430, %v3426
    %v3639 = vpack.c.b16 %v3435, %v3431
    %v3640 = vpack.c.b16 %v3436, %v3432
    %v3641 = vpack.c.b16 %v3437, %v3433
    %v3642 = vpack.c.b16 %v3438, %v3434
    %v3643 = vpack.c.b16 %v3443, %v3439
    %v3644 = vpack.c.b16 %v3444, %v3440
    %v3645 = vpack.c.b16 %v3445, %v3441
    %v3646 = vpack.c.b16 %v3446, %v3442
    %v3647 = vpack.c.b16 %v3451, %v3447
    %v3648 = vpack.c.b16 %v3452, %v3448
    %v3649 = vpack.c.b16 %v3453, %v3449
    %v3650 = vpack.c.b16 %v3454, %v3450
    %v3651 = vpack.c.b16 %v3459, %v3455
    %v3652 = vpack.c.b16 %v3460, %v3456
    %v3653 = vpack.c.b16 %v3461, %v3457
    %v3654 = vpack.c.b16 %v3462, %v3458
    %v3655 = vpack.c.b16 %v3467, %v3463
    %v3656 = vpack.c.b16 %v3468, %v3464
    %v3657 = vpack.c.b16 %v3469, %v3465
    %v3658 = vpack.c.b16 %v3470, %v3466
    %v3659 = vpack.c.b16 %v3475, %v3471
    %v3660 = vpack.c.b16 %v3476, %v3472
    %v3661 = vpack.c.b16 %v3477, %v3473
    %v3662 = vpack.c.b16 %v3478, %v3474
    %v3663 = vpack.c.b16 %v3483, %v3479
    %v3664 = vpack.c.b16 %v3484, %v3480
    %v3665 = vpack.c.b16 %v3485, %v3481
    %v3666 = vpack.c.b16 %v3486, %v3482
    %v3667 = vpack.c.b16 %v3491, %v3487
    %v3668 = vpack.c.b16 %v3492, %v3488
    %v3669 = vpack.c.b16 %v3493, %v3489
    %v3670 = vpack.c.b16 %v3494, %v3490
    %v3671 = vpack.c.b16 %v3499, %v3495
    %v3672 = vpack.c.b16 %v3500, %v3496
    %v3673 = vpack.c.b16 %v3501, %v3497
    %v3674 = vpack.c.b16 %v3502, %v3498
    %v3675 = vpack.c.b16 %v3507, %v3503
    %v3676 = vpack.c.b16 %v3508, %v3504
    %v3677 = vpack.c.b16 %v3509, %v3505
    %v3678 = vpack.c.b16 %v3510, %v3506
    %v3679 = vpack.c.b16 %v3515, %v3511
    %v3680 = vpack.c.b16 %v3516, %v3512
    %v3681 = vpack.c.b16 %v3517, %v3513
    %v3682 = vpack.c.b16 %v3518, %v3514
    %v3683 = vpack.c.b16 %v3523, %v3519
    %v3684 = vpack.c.b16 %v3524, %v3520
    %v3685 = vpack.c.b16 %v3525, %v3521
    %v3686 = vpack.c.b16 %v3526, %v3522
    %v3687 = vpack.c.b16 %v3531, %v3527
    %v3688 = vpack.c.b16 %v3532, %v3528
    %v3689 = vpack.c.b16 %v3533, %v3529
    %v3690 = vpack.c.b16 %v3534, %v3530
    %v3691 = vpack.c.b16 %v3539, %v3535
    %v3692 = vpack.c.b16 %v3540, %v3536
    %v3693 = vpack.c.b16 %v3541, %v3537
    %v3694 = vpack.c.b16 %v3542, %v3538
    %v3695 = vpack.c.b16 %v3547, %v3543
    %v3696 = vpack.c.b16 %v3548, %v3544
    %v3697 = vpack.c.b16 %v3549, %v3545
    %v3698 = vpack.c.b16 %v3550, %v3546
    %v3699 = vpack.c.b16 %v3555, %v3551
    %v3700 = vpack.c.b16 %v3556, %v3552
    %v3701 = vpack.c.b16 %v3557, %v3553
    %v3702 = vpack.c.b16 %v3558, %v3554
    %v3703 = vpack.c.b16 %v3563, %v3559
    %v3704 = vpack.c.b16 %v3564, %v3560
    %v3705 = vpack.c.b16 %v3565, %v3561
    %v3706 = vpack.c.b16 %v3566, %v3562
    %v3707 = vpack.c.b16 %v3571, %v3567
    %v3708 = vpack.c.b16 %v3572, %v3568
    %v3709 = vpack.c.b16 %v3573, %v3569
    %v3710 = vpack.c.b16 %v3574, %v3570
    %v3711 = vpack.c.b16 %v3579, %v3575
    %v3712 = vpack.c.b16 %v3580, %v3576
    %v3713 = vpack.c.b16 %v3581, %v3577
    %v3714 = vpack.c.b16 %v3582, %v3578
    %v3715 = vpack.c.b16 %v3587, %v3583
    %v3716 = vpack.c.b16 %v3588, %v3584
    %v3717 = vpack.c.b16 %v3589, %v3585
    %v3718 = vpack.c.b16 %v3590, %v3586
    %3847 = vmatpush.bf16.msra.mxu0 %v3619
    %3848 = vmatpush.bf16.msra.mxu0 %v3615
    %3849 = vmatpush.bf16.msra.mxu0 %v3611
    %3850 = vmatpush.bf16.msra.mxu0 %v3607
    %3851 = vmatpush.bf16.msra.mxu0 %v3603
    %3852 = vmatpush.bf16.msra.mxu0 %v3599
    %3853 = vmatpush.bf16.msra.mxu0 %v3595
    %3854 = vmatpush.bf16.msra.mxu0 %v3591
    %3855 = vmatmul.bf16.gmra.mxu0 %v675
    %v3856 = vpop.f32.mrf.mxu0
    %v3857 = vadd.f32 0.0, %v3856
    %v3858 = vpop.f32.mrf.mxu0
    %3859 = vdwg.mxu0
    %3860 = vmatpush.bf16.msra.mxu0 %v3651
    %3861 = vmatpush.bf16.msra.mxu0 %v3647
    %3862 = vmatpush.bf16.msra.mxu0 %v3643
    %3863 = vmatpush.bf16.msra.mxu0 %v3639
    %3864 = vmatpush.bf16.msra.mxu0 %v3635
    %3865 = vmatpush.bf16.msra.mxu0 %v3631
    %3866 = vmatpush.bf16.msra.mxu0 %v3627
    %3867 = vmatpush.bf16.msra.mxu0 %v3623
    %3868 = vmatmul.bf16.gmra.mxu0 %v676
    %v3869 = vpop.f32.mrf.mxu0
    %v3870 = vadd.f32 %v3857, %v3869
    %v3871 = vpop.f32.mrf.mxu0
    %3872 = vdwg.mxu0
    %3873 = vmatpush.bf16.msra.mxu0 %v3683
    %3874 = vmatpush.bf16.msra.mxu0 %v3679
    %3875 = vmatpush.bf16.msra.mxu0 %v3675
    %3876 = vmatpush.bf16.msra.mxu0 %v3671
    %3877 = vmatpush.bf16.msra.mxu0 %v3667
    %3878 = vmatpush.bf16.msra.mxu0 %v3663
    %3879 = vmatpush.bf16.msra.mxu0 %v3659
    %3880 = vmatpush.bf16.msra.mxu0 %v3655
    %3881 = vmatmul.bf16.gmra.mxu0 %v677
    %v3882 = vpop.f32.mrf.mxu0
    %v3883 = vadd.f32 %v3870, %v3882
    %v3884 = vpop.f32.mrf.mxu0
    %3885 = vdwg.mxu0
    %3886 = vmatpush.bf16.msra.mxu0 %v3715
    %3887 = vmatpush.bf16.msra.mxu0 %v3711
    %3888 = vmatpush.bf16.msra.mxu0 %v3707
    %3889 = vmatpush.bf16.msra.mxu0 %v3703
    %3890 = vmatpush.bf16.msra.mxu0 %v3699
    %3891 = vmatpush.bf16.msra.mxu0 %v3695
    %3892 = vmatpush.bf16.msra.mxu0 %v3691
    %3893 = vmatpush.bf16.msra.mxu0 %v3687
    %3894 = vmatmul.bf16.gmra.mxu0 %v678
    %v3895 = vpop.f32.mrf.mxu0
    %v3896 = vadd.f32 %v3883, %v3895
    %v3897 = vpop.f32.mrf.mxu0
    %3898 = vdwg.mxu0
    %3899 = vmatpush.bf16.msra.mxu0 %v3620
    %3900 = vmatpush.bf16.msra.mxu0 %v3616
    %3901 = vmatpush.bf16.msra.mxu0 %v3612
    %3902 = vmatpush.bf16.msra.mxu0 %v3608
    %3903 = vmatpush.bf16.msra.mxu0 %v3604
    %3904 = vmatpush.bf16.msra.mxu0 %v3600
    %3905 = vmatpush.bf16.msra.mxu0 %v3596
    %3906 = vmatpush.bf16.msra.mxu0 %v3592
    %3907 = vmatmul.bf16.gmra.mxu0 %v675
    %v3908 = vpop.f32.mrf.mxu0
    %v3909 = vadd.f32 0.0, %v3908
    %v3910 = vpop.f32.mrf.mxu0
    %3911 = vdwg.mxu0
    %3912 = vmatpush.bf16.msra.mxu0 %v3652
    %3913 = vmatpush.bf16.msra.mxu0 %v3648
    %3914 = vmatpush.bf16.msra.mxu0 %v3644
    %3915 = vmatpush.bf16.msra.mxu0 %v3640
    %3916 = vmatpush.bf16.msra.mxu0 %v3636
    %3917 = vmatpush.bf16.msra.mxu0 %v3632
    %3918 = vmatpush.bf16.msra.mxu0 %v3628
    %3919 = vmatpush.bf16.msra.mxu0 %v3624
    %3920 = vmatmul.bf16.gmra.mxu0 %v676
    %v3921 = vpop.f32.mrf.mxu0
    %v3922 = vadd.f32 %v3909, %v3921
    %v3923 = vpop.f32.mrf.mxu0
    %3924 = vdwg.mxu0
    %3925 = vmatpush.bf16.msra.mxu0 %v3684
    %3926 = vmatpush.bf16.msra.mxu0 %v3680
    %3927 = vmatpush.bf16.msra.mxu0 %v3676
    %3928 = vmatpush.bf16.msra.mxu0 %v3672
    %3929 = vmatpush.bf16.msra.mxu0 %v3668
    %3930 = vmatpush.bf16.msra.mxu0 %v3664
    %3931 = vmatpush.bf16.msra.mxu0 %v3660
    %3932 = vmatpush.bf16.msra.mxu0 %v3656
    %3933 = vmatmul.bf16.gmra.mxu0 %v677
    %v3934 = vpop.f32.mrf.mxu0
    %v3935 = vadd.f32 %v3922, %v3934
    %v3936 = vpop.f32.mrf.mxu0
    %3937 = vdwg.mxu0
    %3938 = vmatpush.bf16.msra.mxu0 %v3716
    %3939 = vmatpush.bf16.msra.mxu0 %v3712
    %3940 = vmatpush.bf16.msra.mxu0 %v3708
    %3941 = vmatpush.bf16.msra.mxu0 %v3704
    %3942 = vmatpush.bf16.msra.mxu0 %v3700
    %3943 = vmatpush.bf16.msra.mxu0 %v3696
    %3944 = vmatpush.bf16.msra.mxu0 %v3692
    %3945 = vmatpush.bf16.msra.mxu0 %v3688
    %3946 = vmatmul.bf16.gmra.mxu0 %v678
    %v3947 = vpop.f32.mrf.mxu0
    %v3948 = vadd.f32 %v3935, %v3947
    %v3949 = vpop.f32.mrf.mxu0
    %3950 = vdwg.mxu0
    %3951 = vmatpush.bf16.msra.mxu0 %v3621
    %3952 = vmatpush.bf16.msra.mxu0 %v3617
    %3953 = vmatpush.bf16.msra.mxu0 %v3613
    %3954 = vmatpush.bf16.msra.mxu0 %v3609
    %3955 = vmatpush.bf16.msra.mxu0 %v3605
    %3956 = vmatpush.bf16.msra.mxu0 %v3601
    %3957 = vmatpush.bf16.msra.mxu0 %v3597
    %3958 = vmatpush.bf16.msra.mxu0 %v3593
    %3959 = vmatmul.bf16.gmra.mxu0 %v675
    %v3960 = vpop.f32.mrf.mxu0
    %v3961 = vadd.f32 0.0, %v3960
    %v3962 = vpop.f32.mrf.mxu0
    %3963 = vdwg.mxu0
    %3964 = vmatpush.bf16.msra.mxu0 %v3653
    %3965 = vmatpush.bf16.msra.mxu0 %v3649
    %3966 = vmatpush.bf16.msra.mxu0 %v3645
    %3967 = vmatpush.bf16.msra.mxu0 %v3641
    %3968 = vmatpush.bf16.msra.mxu0 %v3637
    %3969 = vmatpush.bf16.msra.mxu0 %v3633
    %3970 = vmatpush.bf16.msra.mxu0 %v3629
    %3971 = vmatpush.bf16.msra.mxu0 %v3625
    %3972 = vmatmul.bf16.gmra.mxu0 %v676
    %v3973 = vpop.f32.mrf.mxu0
    %v3974 = vadd.f32 %v3961, %v3973
    %v3975 = vpop.f32.mrf.mxu0
    %3976 = vdwg.mxu0
    %3977 = vmatpush.bf16.msra.mxu0 %v3685
    %3978 = vmatpush.bf16.msra.mxu0 %v3681
    %3979 = vmatpush.bf16.msra.mxu0 %v3677
    %3980 = vmatpush.bf16.msra.mxu0 %v3673
    %3981 = vmatpush.bf16.msra.mxu0 %v3669
    %3982 = vmatpush.bf16.msra.mxu0 %v3665
    %3983 = vmatpush.bf16.msra.mxu0 %v3661
    %3984 = vmatpush.bf16.msra.mxu0 %v3657
    %3985 = vmatmul.bf16.gmra.mxu0 %v677
    %v3986 = vpop.f32.mrf.mxu0
    %v3987 = vadd.f32 %v3974, %v3986
    %v3988 = vpop.f32.mrf.mxu0
    %3989 = vdwg.mxu0
    %3990 = vmatpush.bf16.msra.mxu0 %v3717
    %3991 = vmatpush.bf16.msra.mxu0 %v3713
    %3992 = vmatpush.bf16.msra.mxu0 %v3709
    %3993 = vmatpush.bf16.msra.mxu0 %v3705
    %3994 = vmatpush.bf16.msra.mxu0 %v3701
    %3995 = vmatpush.bf16.msra.mxu0 %v3697
    %3996 = vmatpush.bf16.msra.mxu0 %v3693
    %3997 = vmatpush.bf16.msra.mxu0 %v3689
    %3998 = vmatmul.bf16.gmra.mxu0 %v678
    %v3999 = vpop.f32.mrf.mxu0
    %v4000 = vadd.f32 %v3987, %v3999
    %v4001 = vpop.f32.mrf.mxu0
    %4002 = vdwg.mxu0
    %4003 = vmatpush.bf16.msra.mxu0 %v3622
    %4004 = vmatpush.bf16.msra.mxu0 %v3618
    %4005 = vmatpush.bf16.msra.mxu0 %v3614
    %4006 = vmatpush.bf16.msra.mxu0 %v3610
    %4007 = vmatpush.bf16.msra.mxu0 %v3606
    %4008 = vmatpush.bf16.msra.mxu0 %v3602
    %4009 = vmatpush.bf16.msra.mxu0 %v3598
    %4010 = vmatpush.bf16.msra.mxu0 %v3594
    %4011 = vmatmul.bf16.gmra.mxu0 %v675
    %v4012 = vpop.f32.mrf.mxu0
    %v4013 = vadd.f32 0.0, %v4012
    %v4014 = vpop.f32.mrf.mxu0
    %4015 = vdwg.mxu0
    %4016 = vmatpush.bf16.msra.mxu0 %v3654
    %4017 = vmatpush.bf16.msra.mxu0 %v3650
    %4018 = vmatpush.bf16.msra.mxu0 %v3646
    %4019 = vmatpush.bf16.msra.mxu0 %v3642
    %4020 = vmatpush.bf16.msra.mxu0 %v3638
    %4021 = vmatpush.bf16.msra.mxu0 %v3634
    %4022 = vmatpush.bf16.msra.mxu0 %v3630
    %4023 = vmatpush.bf16.msra.mxu0 %v3626
    %4024 = vmatmul.bf16.gmra.mxu0 %v676
    %v4025 = vpop.f32.mrf.mxu0
    %v4026 = vadd.f32 %v4013, %v4025
    %v4027 = vpop.f32.mrf.mxu0
    %4028 = vdwg.mxu0
    %4029 = vmatpush.bf16.msra.mxu0 %v3686
    %4030 = vmatpush.bf16.msra.mxu0 %v3682
    %4031 = vmatpush.bf16.msra.mxu0 %v3678
    %4032 = vmatpush.bf16.msra.mxu0 %v3674
    %4033 = vmatpush.bf16.msra.mxu0 %v3670
    %4034 = vmatpush.bf16.msra.mxu0 %v3666
    %4035 = vmatpush.bf16.msra.mxu0 %v3662
    %4036 = vmatpush.bf16.msra.mxu0 %v3658
    %4037 = vmatmul.bf16.gmra.mxu0 %v677
    %v4038 = vpop.f32.mrf.mxu0
    %v4039 = vadd.f32 %v4026, %v4038
    %v4040 = vpop.f32.mrf.mxu0
    %4041 = vdwg.mxu0
    %4042 = vmatpush.bf16.msra.mxu0 %v3718
    %4043 = vmatpush.bf16.msra.mxu0 %v3714
    %4044 = vmatpush.bf16.msra.mxu0 %v3710
    %4045 = vmatpush.bf16.msra.mxu0 %v3706
    %4046 = vmatpush.bf16.msra.mxu0 %v3702
    %4047 = vmatpush.bf16.msra.mxu0 %v3698
    %4048 = vmatpush.bf16.msra.mxu0 %v3694
    %4049 = vmatpush.bf16.msra.mxu0 %v3690
    %4050 = vmatmul.bf16.gmra.mxu0 %v678
    %v4051 = vpop.f32.mrf.mxu0
    %v4052 = vadd.f32 %v4039, %v4051
    %v4053 = vpop.f32.mrf.mxu0
    %4054 = vdwg.mxu0
    %v4071 = vunpack.c.l.b16 %v3062
    %v4072 = vunpack.c.h.b16 %v3062
    %v4073 = vunpack.c.l.b16 %v3063
    %v4074 = vunpack.c.h.b16 %v3063
    %v4075 = vunpack.c.l.b16 %v3064
    %v4076 = vunpack.c.h.b16 %v3064
    %v4077 = vunpack.c.l.b16 %v3065
    %v4078 = vunpack.c.h.b16 %v3065
    %v4079 = vunpack.c.l.b16 %v3066
    %v4080 = vunpack.c.h.b16 %v3066
    %v4081 = vunpack.c.l.b16 %v3067
    %v4082 = vunpack.c.h.b16 %v3067
    %v4083 = vunpack.c.l.b16 %v3068
    %v4084 = vunpack.c.h.b16 %v3068
    %v4085 = vunpack.c.l.b16 %v3069
    %v4086 = vunpack.c.h.b16 %v3069
    %v4087 = vunpack.c.l.b16 %v3070
    %v4088 = vunpack.c.h.b16 %v3070
    %v4089 = vunpack.c.l.b16 %v3071
    %v4090 = vunpack.c.h.b16 %v3071
    %v4091 = vunpack.c.l.b16 %v3072
    %v4092 = vunpack.c.h.b16 %v3072
    %v4093 = vunpack.c.l.b16 %v3073
    %v4094 = vunpack.c.h.b16 %v3073
    %v4095 = vunpack.c.l.b16 %v3074
    %v4096 = vunpack.c.h.b16 %v3074
    %v4097 = vunpack.c.l.b16 %v3075
    %v4098 = vunpack.c.h.b16 %v3075
    %v4099 = vunpack.c.l.b16 %v3076
    %v4100 = vunpack.c.h.b16 %v3076
    %v4101 = vunpack.c.l.b16 %v3077
    %v4102 = vunpack.c.h.b16 %v3077
    %v4103 = vpack.c.b16 %v4075, %v4071
    %v4104 = vpack.c.b16 %v4076, %v4072
    %v4105 = vpack.c.b16 %v4077, %v4073
    %v4106 = vpack.c.b16 %v4078, %v4074
    %v4107 = vpack.c.b16 %v4083, %v4079
    %v4108 = vpack.c.b16 %v4084, %v4080
    %v4109 = vpack.c.b16 %v4085, %v4081
    %v4110 = vpack.c.b16 %v4086, %v4082
    %v4111 = vpack.c.b16 %v4091, %v4087
    %v4112 = vpack.c.b16 %v4092, %v4088
    %v4113 = vpack.c.b16 %v4093, %v4089
    %v4114 = vpack.c.b16 %v4094, %v4090
    %v4115 = vpack.c.b16 %v4099, %v4095
    %v4116 = vpack.c.b16 %v4100, %v4096
    %v4117 = vpack.c.b16 %v4101, %v4097
    %v4118 = vpack.c.b16 %v4102, %v4098
    %v4136 = vsel %vm349, %v3078, 0
    %4138 = vmatpush.bf16.msra.mxu0 0
    %4139 = vmatpush.bf16.msra.mxu0 0
    %4140 = vmatpush.bf16.msra.mxu0 0
    %4141 = vmatpush.bf16.msra.mxu0 0
    %4142 = vmatpush.bf16.msra.mxu0 %v4115
    %4143 = vmatpush.bf16.msra.mxu0 %v4111
    %4144 = vmatpush.bf16.msra.mxu0 %v4107
    %4145 = vmatpush.bf16.msra.mxu0 %v4103
    %4146 = vmatmul.bf16.gmra.mxu0 %v4136
    %v4147 = vpop.f32.mrf.mxu0
    %v4148 = vadd.f32 %v3896, %v4147
    %v4149 = vpop.f32.mrf.mxu0
    %4150 = vdwg.mxu0
    %4151 = vmatpush.bf16.msra.mxu0 0
    %4152 = vmatpush.bf16.msra.mxu0 0
    %4153 = vmatpush.bf16.msra.mxu0 0
    %4154 = vmatpush.bf16.msra.mxu0 0
    %4155 = vmatpush.bf16.msra.mxu0 %v4116
    %4156 = vmatpush.bf16.msra.mxu0 %v4112
    %4157 = vmatpush.bf16.msra.mxu0 %v4108
    %4158 = vmatpush.bf16.msra.mxu0 %v4104
    %4159 = vmatmul.bf16.gmra.mxu0 %v4136
    %v4160 = vpop.f32.mrf.mxu0
    %v4161 = vadd.f32 %v3948, %v4160
    %v4162 = vpop.f32.mrf.mxu0
    %4163 = vdwg.mxu0
    %4164 = vmatpush.bf16.msra.mxu0 0
    %4165 = vmatpush.bf16.msra.mxu0 0
    %4166 = vmatpush.bf16.msra.mxu0 0
    %4167 = vmatpush.bf16.msra.mxu0 0
    %4168 = vmatpush.bf16.msra.mxu0 %v4117
    %4169 = vmatpush.bf16.msra.mxu0 %v4113
    %4170 = vmatpush.bf16.msra.mxu0 %v4109
    %4171 = vmatpush.bf16.msra.mxu0 %v4105
    %4172 = vmatmul.bf16.gmra.mxu0 %v4136
    %v4173 = vpop.f32.mrf.mxu0
    %v4174 = vadd.f32 %v4000, %v4173
    %v4175 = vpop.f32.mrf.mxu0
    %4176 = vdwg.mxu0
    %4177 = vmatpush.bf16.msra.mxu0 0
    %4178 = vmatpush.bf16.msra.mxu0 0
    %4179 = vmatpush.bf16.msra.mxu0 0
    %4180 = vmatpush.bf16.msra.mxu0 0
    %4181 = vmatpush.bf16.msra.mxu0 %v4118
    %4182 = vmatpush.bf16.msra.mxu0 %v4114
    %4183 = vmatpush.bf16.msra.mxu0 %v4110
    %4184 = vmatpush.bf16.msra.mxu0 %v4106
    %4185 = vmatmul.bf16.gmra.mxu0 %v4136
    %v4186 = vpop.f32.mrf.mxu0
    %v4187 = vadd.f32 %v4052, %v4186
    %v4188 = vpop.f32.mrf.mxu0
    %4189 = vdwg.mxu0
    %v4190 = vld [vmem:[%s16] sm:$0xf]
    %v4192 = vperm.slane %v4190, 0
    %v4193 = vperm.slane %v4190, 1
    %v4194 = vperm.slane %v4190, 2
    %v4195 = vperm.slane %v4190, 3
    %v4200 = vadd.f32 %v4148, %v4192
    %v4201 = vadd.f32 %v4161, %v4193
    %v4202 = vadd.f32 %v4174, %v4194
    %v4203 = vadd.f32 %v4187, %v4195
    %v4204 = vmax.f32 %v4200, 0.0
    %v4205 = vmax.f32 %v4201, 0.0
    %v4206 = vmax.f32 %v4202, 0.0
    %v4207 = vmax.f32 %v4203, 0.0
    %v4208 = vld [vmem:[#allocation12] sm:$0xff]
    %v4209 = vld [vmem:[#allocation12 + $0x8] sm:$0xff]
    %v4210 = vld [vmem:[#allocation12 + $0x10] sm:$0xff]
    %v4211 = vld [vmem:[#allocation12 + $0x18] sm:$0xff]
    %v4212 = vld [vmem:[#allocation12 + $0x20] sm:$0xff]
    %v4213 = vld [vmem:[#allocation12 + $0x28] sm:$0xff]
    %v4214 = vld [vmem:[#allocation12 + $0x30] sm:$0xff]
    %v4215 = vld [vmem:[#allocation12 + $0x38] sm:$0xff]
    %v4216 = vld [vmem:[#allocation12 + $0x40] sm:$0xff]
    %v4217 = vld [vmem:[#allocation12 + $0x48] sm:$0xff]
    %v4218 = vld [vmem:[#allocation12 + $0x50] sm:$0xff]
    %v4219 = vld [vmem:[#allocation12 + $0x58] sm:$0xff]
    %v4220 = vld [vmem:[#allocation12 + $0x60] sm:$0xff]
    %v4221 = vld [vmem:[#allocation12 + $0x68] sm:$0xff]
    %v4222 = vld [vmem:[#allocation12 + $0x70] sm:$0xff]
    %v4223 = vld [vmem:[#allocation12 + $0x78] sm:$0xff]
    %v4224 = vld [vmem:[#allocation12 + $0x80] sm:$0xff]
    %v4225 = vld [vmem:[#allocation12 + $0x88] sm:$0xff]
    %v4226 = vld [vmem:[#allocation12 + $0x90] sm:$0xff]
    %v4227 = vld [vmem:[#allocation12 + $0x98] sm:$0xff]
    %v4228 = vld [vmem:[#allocation12 + $0xa0] sm:$0xff]
    %v4229 = vld [vmem:[#allocation12 + $0xa8] sm:$0xff]
    %v4230 = vld [vmem:[#allocation12 + $0xb0] sm:$0xff]
    %v4231 = vld [vmem:[#allocation12 + $0xb8] sm:$0xff]
    %v4232 = vld [vmem:[#allocation12 + $0xc0] sm:$0xff]
    %v4233 = vld [vmem:[#allocation12 + $0xc8] sm:$0xff]
    %v4234 = vld [vmem:[#allocation12 + $0xd0] sm:$0xff]
    %v4235 = vld [vmem:[#allocation12 + $0xd8] sm:$0xff]
    %v4236 = vld [vmem:[#allocation12 + $0xe0] sm:$0xff]
    %v4237 = vld [vmem:[#allocation12 + $0xe8] sm:$0xff]
    %v4238 = vld [vmem:[#allocation12 + $0xf0] sm:$0xff]
    %v4239 = vld [vmem:[#allocation12 + $0xf8] sm:$0xff]
    %v4240 = vld [vmem:[#allocation12 + $0x100] sm:$0xff]
    %v4241 = vld [vmem:[#allocation12 + $0x108] sm:$0xff]
    %v4242 = vld [vmem:[#allocation12 + $0x110] sm:$0xff]
    %v4243 = vld [vmem:[#allocation12 + $0x118] sm:$0xff]
    %v4244 = vld [vmem:[#allocation12 + $0x120] sm:$0xff]
    %v4245 = vld [vmem:[#allocation12 + $0x128] sm:$0xff]
    %v4246 = vld [vmem:[#allocation12 + $0x130] sm:$0xff]
    %v4247 = vld [vmem:[#allocation12 + $0x138] sm:$0xff]
    %v4248 = vld [vmem:[#allocation12 + $0x140] sm:$0xff]
    %v4249 = vld [vmem:[#allocation12 + $0x148] sm:$0xff]
    %v4250 = vld [vmem:[#allocation12 + $0x150] sm:$0xff]
    %v4251 = vld [vmem:[#allocation12 + $0x158] sm:$0xff]
    %v4252 = vld [vmem:[#allocation12 + $0x160] sm:$0xff]
    %v4253 = vld [vmem:[#allocation12 + $0x168] sm:$0xff]
    %v4254 = vld [vmem:[#allocation12 + $0x170] sm:$0xff]
    %v4255 = vld [vmem:[#allocation12 + $0x178] sm:$0xff]
    %v4256 = vld [vmem:[#allocation12 + $0x180] sm:$0xff]
    %v4257 = vld [vmem:[#allocation12 + $0x188] sm:$0xff]
    %v4258 = vld [vmem:[#allocation12 + $0x190] sm:$0xff]
    %v4259 = vld [vmem:[#allocation12 + $0x198] sm:$0xff]
    %v4260 = vld [vmem:[#allocation12 + $0x1a0] sm:$0xff]
    %v4261 = vld [vmem:[#allocation12 + $0x1a8] sm:$0xff]
    %v4262 = vld [vmem:[#allocation12 + $0x1b0] sm:$0xff]
    %v4263 = vld [vmem:[#allocation12 + $0x1b8] sm:$0xff]
    %v4264 = vld [vmem:[#allocation12 + $0x1c0] sm:$0xff]
    %v4265 = vld [vmem:[#allocation12 + $0x1c8] sm:$0xff]
    %v4266 = vld [vmem:[#allocation12 + $0x1d0] sm:$0xff]
    %v4267 = vld [vmem:[#allocation12 + $0x1d8] sm:$0xff]
    %v4268 = vld [vmem:[#allocation12 + $0x1e0] sm:$0xff]
    %v4269 = vld [vmem:[#allocation12 + $0x1e8] sm:$0xff]
    %v4270 = vld [vmem:[#allocation12 + $0x1f0] sm:$0xff]
    %v4271 = vld [vmem:[#allocation12 + $0x1f8] sm:$0xff]
    %v4272 = vpack.c.bf16 %v4204, %v4204
    %v4273 = vpack.c.bf16 %v4205, %v4205
    %v4274 = vpack.c.bf16 %v4206, %v4206
    %v4275 = vpack.c.bf16 %v4207, %v4207
    %v4276 = vld [vmem:[#allocation13] sm:$0x3]
    %v4278 = vperm.slane %v4276, 0
    %v4279 = vperm.slane %v4276, 1
    %v4346 = vunpack.c.l.b16 %v4208
    %v4347 = vunpack.c.h.b16 %v4208
    %v4348 = vunpack.c.l.b16 %v4209
    %v4349 = vunpack.c.h.b16 %v4209
    %v4350 = vunpack.c.l.b16 %v4210
    %v4351 = vunpack.c.h.b16 %v4210
    %v4352 = vunpack.c.l.b16 %v4211
    %v4353 = vunpack.c.h.b16 %v4211
    %v4354 = vunpack.c.l.b16 %v4212
    %v4355 = vunpack.c.h.b16 %v4212
    %v4356 = vunpack.c.l.b16 %v4213
    %v4357 = vunpack.c.h.b16 %v4213
    %v4358 = vunpack.c.l.b16 %v4214
    %v4359 = vunpack.c.h.b16 %v4214
    %v4360 = vunpack.c.l.b16 %v4215
    %v4361 = vunpack.c.h.b16 %v4215
    %v4362 = vunpack.c.l.b16 %v4216
    %v4363 = vunpack.c.h.b16 %v4216
    %v4364 = vunpack.c.l.b16 %v4217
    %v4365 = vunpack.c.h.b16 %v4217
    %v4366 = vunpack.c.l.b16 %v4218
    %v4367 = vunpack.c.h.b16 %v4218
    %v4368 = vunpack.c.l.b16 %v4219
    %v4369 = vunpack.c.h.b16 %v4219
    %v4370 = vunpack.c.l.b16 %v4220
    %v4371 = vunpack.c.h.b16 %v4220
    %v4372 = vunpack.c.l.b16 %v4221
    %v4373 = vunpack.c.h.b16 %v4221
    %v4374 = vunpack.c.l.b16 %v4222
    %v4375 = vunpack.c.h.b16 %v4222
    %v4376 = vunpack.c.l.b16 %v4223
    %v4377 = vunpack.c.h.b16 %v4223
    %v4378 = vunpack.c.l.b16 %v4224
    %v4379 = vunpack.c.h.b16 %v4224
    %v4380 = vunpack.c.l.b16 %v4225
    %v4381 = vunpack.c.h.b16 %v4225
    %v4382 = vunpack.c.l.b16 %v4226
    %v4383 = vunpack.c.h.b16 %v4226
    %v4384 = vunpack.c.l.b16 %v4227
    %v4385 = vunpack.c.h.b16 %v4227
    %v4386 = vunpack.c.l.b16 %v4228
    %v4387 = vunpack.c.h.b16 %v4228
    %v4388 = vunpack.c.l.b16 %v4229
    %v4389 = vunpack.c.h.b16 %v4229
    %v4390 = vunpack.c.l.b16 %v4230
    %v4391 = vunpack.c.h.b16 %v4230
    %v4392 = vunpack.c.l.b16 %v4231
    %v4393 = vunpack.c.h.b16 %v4231
    %v4394 = vunpack.c.l.b16 %v4232
    %v4395 = vunpack.c.h.b16 %v4232
    %v4396 = vunpack.c.l.b16 %v4233
    %v4397 = vunpack.c.h.b16 %v4233
    %v4398 = vunpack.c.l.b16 %v4234
    %v4399 = vunpack.c.h.b16 %v4234
    %v4400 = vunpack.c.l.b16 %v4235
    %v4401 = vunpack.c.h.b16 %v4235
    %v4402 = vunpack.c.l.b16 %v4236
    %v4403 = vunpack.c.h.b16 %v4236
    %v4404 = vunpack.c.l.b16 %v4237
    %v4405 = vunpack.c.h.b16 %v4237
    %v4406 = vunpack.c.l.b16 %v4238
    %v4407 = vunpack.c.h.b16 %v4238
    %v4408 = vunpack.c.l.b16 %v4239
    %v4409 = vunpack.c.h.b16 %v4239
    %v4410 = vunpack.c.l.b16 %v4240
    %v4411 = vunpack.c.h.b16 %v4240
    %v4412 = vunpack.c.l.b16 %v4241
    %v4413 = vunpack.c.h.b16 %v4241
    %v4414 = vunpack.c.l.b16 %v4242
    %v4415 = vunpack.c.h.b16 %v4242
    %v4416 = vunpack.c.l.b16 %v4243
    %v4417 = vunpack.c.h.b16 %v4243
    %v4418 = vunpack.c.l.b16 %v4244
    %v4419 = vunpack.c.h.b16 %v4244
    %v4420 = vunpack.c.l.b16 %v4245
    %v4421 = vunpack.c.h.b16 %v4245
    %v4422 = vunpack.c.l.b16 %v4246
    %v4423 = vunpack.c.h.b16 %v4246
    %v4424 = vunpack.c.l.b16 %v4247
    %v4425 = vunpack.c.h.b16 %v4247
    %v4426 = vunpack.c.l.b16 %v4248
    %v4427 = vunpack.c.h.b16 %v4248
    %v4428 = vunpack.c.l.b16 %v4249
    %v4429 = vunpack.c.h.b16 %v4249
    %v4430 = vunpack.c.l.b16 %v4250
    %v4431 = vunpack.c.h.b16 %v4250
    %v4432 = vunpack.c.l.b16 %v4251
    %v4433 = vunpack.c.h.b16 %v4251
    %v4434 = vunpack.c.l.b16 %v4252
    %v4435 = vunpack.c.h.b16 %v4252
    %v4436 = vunpack.c.l.b16 %v4253
    %v4437 = vunpack.c.h.b16 %v4253
    %v4438 = vunpack.c.l.b16 %v4254
    %v4439 = vunpack.c.h.b16 %v4254
    %v4440 = vunpack.c.l.b16 %v4255
    %v4441 = vunpack.c.h.b16 %v4255
    %v4442 = vunpack.c.l.b16 %v4256
    %v4443 = vunpack.c.h.b16 %v4256
    %v4444 = vunpack.c.l.b16 %v4257
    %v4445 = vunpack.c.h.b16 %v4257
    %v4446 = vunpack.c.l.b16 %v4258
    %v4447 = vunpack.c.h.b16 %v4258
    %v4448 = vunpack.c.l.b16 %v4259
    %v4449 = vunpack.c.h.b16 %v4259
    %v4450 = vunpack.c.l.b16 %v4260
    %v4451 = vunpack.c.h.b16 %v4260
    %v4452 = vunpack.c.l.b16 %v4261
    %v4453 = vunpack.c.h.b16 %v4261
    %v4454 = vunpack.c.l.b16 %v4262
    %v4455 = vunpack.c.h.b16 %v4262
    %v4456 = vunpack.c.l.b16 %v4263
    %v4457 = vunpack.c.h.b16 %v4263
    %v4458 = vunpack.c.l.b16 %v4264
    %v4459 = vunpack.c.h.b16 %v4264
    %v4460 = vunpack.c.l.b16 %v4265
    %v4461 = vunpack.c.h.b16 %v4265
    %v4462 = vunpack.c.l.b16 %v4266
    %v4463 = vunpack.c.h.b16 %v4266
    %v4464 = vunpack.c.l.b16 %v4267
    %v4465 = vunpack.c.h.b16 %v4267
    %v4466 = vunpack.c.l.b16 %v4268
    %v4467 = vunpack.c.h.b16 %v4268
    %v4468 = vunpack.c.l.b16 %v4269
    %v4469 = vunpack.c.h.b16 %v4269
    %v4470 = vunpack.c.l.b16 %v4270
    %v4471 = vunpack.c.h.b16 %v4270
    %v4472 = vunpack.c.l.b16 %v4271
    %v4473 = vunpack.c.h.b16 %v4271
    %v4474 = vpack.c.b16 %v4348, %v4346
    %v4475 = vpack.c.b16 %v4349, %v4347
    %v4476 = vpack.c.b16 %v4352, %v4350
    %v4477 = vpack.c.b16 %v4353, %v4351
    %v4478 = vpack.c.b16 %v4356, %v4354
    %v4479 = vpack.c.b16 %v4357, %v4355
    %v4480 = vpack.c.b16 %v4360, %v4358
    %v4481 = vpack.c.b16 %v4361, %v4359
    %v4482 = vpack.c.b16 %v4364, %v4362
    %v4483 = vpack.c.b16 %v4365, %v4363
    %v4484 = vpack.c.b16 %v4368, %v4366
    %v4485 = vpack.c.b16 %v4369, %v4367
    %v4486 = vpack.c.b16 %v4372, %v4370
    %v4487 = vpack.c.b16 %v4373, %v4371
    %v4488 = vpack.c.b16 %v4376, %v4374
    %v4489 = vpack.c.b16 %v4377, %v4375
    %v4490 = vpack.c.b16 %v4380, %v4378
    %v4491 = vpack.c.b16 %v4381, %v4379
    %v4492 = vpack.c.b16 %v4384, %v4382
    %v4493 = vpack.c.b16 %v4385, %v4383
    %v4494 = vpack.c.b16 %v4388, %v4386
    %v4495 = vpack.c.b16 %v4389, %v4387
    %v4496 = vpack.c.b16 %v4392, %v4390
    %v4497 = vpack.c.b16 %v4393, %v4391
    %v4498 = vpack.c.b16 %v4396, %v4394
    %v4499 = vpack.c.b16 %v4397, %v4395
    %v4500 = vpack.c.b16 %v4400, %v4398
    %v4501 = vpack.c.b16 %v4401, %v4399
    %v4502 = vpack.c.b16 %v4404, %v4402
    %v4503 = vpack.c.b16 %v4405, %v4403
    %v4504 = vpack.c.b16 %v4408, %v4406
    %v4505 = vpack.c.b16 %v4409, %v4407
    %v4506 = vpack.c.b16 %v4412, %v4410
    %v4507 = vpack.c.b16 %v4413, %v4411
    %v4508 = vpack.c.b16 %v4416, %v4414
    %v4509 = vpack.c.b16 %v4417, %v4415
    %v4510 = vpack.c.b16 %v4420, %v4418
    %v4511 = vpack.c.b16 %v4421, %v4419
    %v4512 = vpack.c.b16 %v4424, %v4422
    %v4513 = vpack.c.b16 %v4425, %v4423
    %v4514 = vpack.c.b16 %v4428, %v4426
    %v4515 = vpack.c.b16 %v4429, %v4427
    %v4516 = vpack.c.b16 %v4432, %v4430
    %v4517 = vpack.c.b16 %v4433, %v4431
    %v4518 = vpack.c.b16 %v4436, %v4434
    %v4519 = vpack.c.b16 %v4437, %v4435
    %v4520 = vpack.c.b16 %v4440, %v4438
    %v4521 = vpack.c.b16 %v4441, %v4439
    %v4522 = vpack.c.b16 %v4444, %v4442
    %v4523 = vpack.c.b16 %v4445, %v4443
    %v4524 = vpack.c.b16 %v4448, %v4446
    %v4525 = vpack.c.b16 %v4449, %v4447
    %v4526 = vpack.c.b16 %v4452, %v4450
    %v4527 = vpack.c.b16 %v4453, %v4451
    %v4528 = vpack.c.b16 %v4456, %v4454
    %v4529 = vpack.c.b16 %v4457, %v4455
    %v4530 = vpack.c.b16 %v4460, %v4458
    %v4531 = vpack.c.b16 %v4461, %v4459
    %v4532 = vpack.c.b16 %v4464, %v4462
    %v4533 = vpack.c.b16 %v4465, %v4463
    %v4534 = vpack.c.b16 %v4468, %v4466
    %v4535 = vpack.c.b16 %v4469, %v4467
    %v4536 = vpack.c.b16 %v4472, %v4470
    %v4537 = vpack.c.b16 %v4473, %v4471
    %4602 = vmatpush.bf16.msra.mxu0 %v4488
    %4603 = vmatpush.bf16.msra.mxu0 %v4486
    %4604 = vmatpush.bf16.msra.mxu0 %v4484
    %4605 = vmatpush.bf16.msra.mxu0 %v4482
    %4606 = vmatpush.bf16.msra.mxu0 %v4480
    %4607 = vmatpush.bf16.msra.mxu0 %v4478
    %4608 = vmatpush.bf16.msra.mxu0 %v4476
    %4609 = vmatpush.bf16.msra.mxu0 %v4474
    %4610 = vmatmul.bf16.gmra.mxu0 %v4272
    %v4611 = vpop.f32.mrf.mxu0
    %v4612 = vadd.f32 %v4278, %v4611
    %v4613 = vpop.f32.mrf.mxu0
    %4614 = vdwg.mxu0
    %4615 = vmatpush.bf16.msra.mxu0 %v4504
    %4616 = vmatpush.bf16.msra.mxu0 %v4502
    %4617 = vmatpush.bf16.msra.mxu0 %v4500
    %4618 = vmatpush.bf16.msra.mxu0 %v4498
    %4619 = vmatpush.bf16.msra.mxu0 %v4496
    %4620 = vmatpush.bf16.msra.mxu0 %v4494
    %4621 = vmatpush.bf16.msra.mxu0 %v4492
    %4622 = vmatpush.bf16.msra.mxu0 %v4490
    %4623 = vmatmul.bf16.gmra.mxu0 %v4273
    %v4624 = vpop.f32.mrf.mxu0
    %v4625 = vadd.f32 %v4612, %v4624
    %v4626 = vpop.f32.mrf.mxu0
    %4627 = vdwg.mxu0
    %4628 = vmatpush.bf16.msra.mxu0 %v4520
    %4629 = vmatpush.bf16.msra.mxu0 %v4518
    %4630 = vmatpush.bf16.msra.mxu0 %v4516
    %4631 = vmatpush.bf16.msra.mxu0 %v4514
    %4632 = vmatpush.bf16.msra.mxu0 %v4512
    %4633 = vmatpush.bf16.msra.mxu0 %v4510
    %4634 = vmatpush.bf16.msra.mxu0 %v4508
    %4635 = vmatpush.bf16.msra.mxu0 %v4506
    %4636 = vmatmul.bf16.gmra.mxu0 %v4274
    %v4637 = vpop.f32.mrf.mxu0
    %v4638 = vadd.f32 %v4625, %v4637
    %v4639 = vpop.f32.mrf.mxu0
    %4640 = vdwg.mxu0
    %4641 = vmatpush.bf16.msra.mxu0 %v4536
    %4642 = vmatpush.bf16.msra.mxu0 %v4534
    %4643 = vmatpush.bf16.msra.mxu0 %v4532
    %4644 = vmatpush.bf16.msra.mxu0 %v4530
    %4645 = vmatpush.bf16.msra.mxu0 %v4528
    %4646 = vmatpush.bf16.msra.mxu0 %v4526
    %4647 = vmatpush.bf16.msra.mxu0 %v4524
    %4648 = vmatpush.bf16.msra.mxu0 %v4522
    %4649 = vmatmul.bf16.gmra.mxu0 %v4275
    %v4650 = vpop.f32.mrf.mxu0
    %v4651 = vadd.f32 %v4638, %v4650
    %v4652 = vpop.f32.mrf.mxu0
    %4653 = vdwg.mxu0
    %4654 = vmatpush.bf16.msra.mxu0 %v4489
    %4655 = vmatpush.bf16.msra.mxu0 %v4487
    %4656 = vmatpush.bf16.msra.mxu0 %v4485
    %4657 = vmatpush.bf16.msra.mxu0 %v4483
    %4658 = vmatpush.bf16.msra.mxu0 %v4481
    %4659 = vmatpush.bf16.msra.mxu0 %v4479
    %4660 = vmatpush.bf16.msra.mxu0 %v4477
    %4661 = vmatpush.bf16.msra.mxu0 %v4475
    %4662 = vmatmul.bf16.gmra.mxu0 %v4272
    %v4663 = vpop.f32.mrf.mxu0
    %v4664 = vadd.f32 %v4279, %v4663
    %v4665 = vpop.f32.mrf.mxu0
    %4666 = vdwg.mxu0
    %4667 = vmatpush.bf16.msra.mxu0 %v4505
    %4668 = vmatpush.bf16.msra.mxu0 %v4503
    %4669 = vmatpush.bf16.msra.mxu0 %v4501
    %4670 = vmatpush.bf16.msra.mxu0 %v4499
    %4671 = vmatpush.bf16.msra.mxu0 %v4497
    %4672 = vmatpush.bf16.msra.mxu0 %v4495
    %4673 = vmatpush.bf16.msra.mxu0 %v4493
    %4674 = vmatpush.bf16.msra.mxu0 %v4491
    %4675 = vmatmul.bf16.gmra.mxu0 %v4273
    %v4676 = vpop.f32.mrf.mxu0
    %v4677 = vadd.f32 %v4664, %v4676
    %v4678 = vpop.f32.mrf.mxu0
    %4679 = vdwg.mxu0
    %4680 = vmatpush.bf16.msra.mxu0 %v4521
    %4681 = vmatpush.bf16.msra.mxu0 %v4519
    %4682 = vmatpush.bf16.msra.mxu0 %v4517
    %4683 = vmatpush.bf16.msra.mxu0 %v4515
    %4684 = vmatpush.bf16.msra.mxu0 %v4513
    %4685 = vmatpush.bf16.msra.mxu0 %v4511
    %4686 = vmatpush.bf16.msra.mxu0 %v4509
    %4687 = vmatpush.bf16.msra.mxu0 %v4507
    %4688 = vmatmul.bf16.gmra.mxu0 %v4274
    %v4689 = vpop.f32.mrf.mxu0
    %v4690 = vadd.f32 %v4677, %v4689
    %v4691 = vpop.f32.mrf.mxu0
    %4692 = vdwg.mxu0
    %4693 = vmatpush.bf16.msra.mxu0 %v4537
    %4694 = vmatpush.bf16.msra.mxu0 %v4535
    %4695 = vmatpush.bf16.msra.mxu0 %v4533
    %4696 = vmatpush.bf16.msra.mxu0 %v4531
    %4697 = vmatpush.bf16.msra.mxu0 %v4529
    %4698 = vmatpush.bf16.msra.mxu0 %v4527
    %4699 = vmatpush.bf16.msra.mxu0 %v4525
    %4700 = vmatpush.bf16.msra.mxu0 %v4523
    %4701 = vmatmul.bf16.gmra.mxu0 %v4275
    %v4702 = vpop.f32.mrf.mxu0
    %v4703 = vadd.f32 %v4690, %v4702
    %v4704 = vpop.f32.mrf.mxu0
    %4705 = vdwg.mxu0
    %v4706 = vmax.f32 %v4651, 0.0
    %v4707 = vmax.f32 %v4703, 0.0
    %v4708 = vld [vmem:[%s19] sm:$0xf]
    %v4709 = vld [vmem:[%s19 + $0x4] sm:$0xf]
    %v4710 = vld [vmem:[%s19 + $0x8] sm:$0xf]
    %v4711 = vld [vmem:[%s19 + $0xc] sm:$0xf]
    %v4712 = vld [vmem:[%s19 + $0x10] sm:$0xf]
    %v4713 = vld [vmem:[%s19 + $0x14] sm:$0xf]
    %v4714 = vld [vmem:[%s19 + $0x18] sm:$0xf]
    %v4715 = vld [vmem:[%s19 + $0x1c] sm:$0xf]
    %v4716 = vld [vmem:[%s19 + $0x20] sm:$0xf]
    %v4717 = vld [vmem:[%s19 + $0x24] sm:$0xf]
    %v4718 = vld [vmem:[%s19 + $0x28] sm:$0xf]
    %v4719 = vld [vmem:[%s19 + $0x2c] sm:$0xf]
    %v4720 = vld [vmem:[%s19 + $0x30] sm:$0xf]
    %v4721 = vld [vmem:[%s19 + $0x34] sm:$0xf]
    %v4722 = vld [vmem:[%s19 + $0x38] sm:$0xf]
    %v4723 = vld [vmem:[%s19 + $0x3c] sm:$0xf]
    %v4724 = vld [vmem:[%s19 + $0x40] sm:$0xf]
    %v4725 = vld [vmem:[%s19 + $0x44] sm:$0xf]
    %v4726 = vld [vmem:[%s19 + $0x48] sm:$0xf]
    %v4727 = vld [vmem:[%s19 + $0x4c] sm:$0xf]
    %v4728 = vld [vmem:[%s19 + $0x50] sm:$0xf]
    %v4729 = vld [vmem:[%s19 + $0x54] sm:$0xf]
    %v4730 = vld [vmem:[%s19 + $0x58] sm:$0xf]
    %v4731 = vld [vmem:[%s19 + $0x5c] sm:$0xf]
    %v4732 = vld [vmem:[%s19 + $0x60] sm:$0xf]
    %v4733 = vld [vmem:[%s19 + $0x64] sm:$0xf]
    %v4734 = vld [vmem:[%s19 + $0x68] sm:$0xf]
    %v4735 = vld [vmem:[%s19 + $0x6c] sm:$0xf]
    %v4736 = vld [vmem:[%s19 + $0x70] sm:$0xf]
    %v4737 = vld [vmem:[%s19 + $0x74] sm:$0xf]
    %v4738 = vld [vmem:[%s19 + $0x78] sm:$0xf]
    %v4739 = vld [vmem:[%s19 + $0x7c] sm:$0xf]
    %v4740 = vpack.c.bf16 %v4706, %v4706
    %v4741 = vpack.c.bf16 %v4707, %v4707
    %v4742 = vld [vmem:[#allocation15] sm:$0x1]
    %v4744 = vperm.slane %v4742, 0
    %v4778 = vunpack.c.l.b16 %v4708
    %v4779 = vunpack.c.l.b16 %v4709
    %v4780 = vunpack.c.l.b16 %v4710
    %v4781 = vunpack.c.l.b16 %v4711
    %v4782 = vunpack.c.l.b16 %v4712
    %v4783 = vunpack.c.l.b16 %v4713
    %v4784 = vunpack.c.l.b16 %v4714
    %v4785 = vunpack.c.l.b16 %v4715
    %v4786 = vunpack.c.l.b16 %v4716
    %v4787 = vunpack.c.l.b16 %v4717
    %v4788 = vunpack.c.l.b16 %v4718
    %v4789 = vunpack.c.l.b16 %v4719
    %v4790 = vunpack.c.l.b16 %v4720
    %v4791 = vunpack.c.l.b16 %v4721
    %v4792 = vunpack.c.l.b16 %v4722
    %v4793 = vunpack.c.l.b16 %v4723
    %v4794 = vunpack.c.l.b16 %v4724
    %v4795 = vunpack.c.l.b16 %v4725
    %v4796 = vunpack.c.l.b16 %v4726
    %v4797 = vunpack.c.l.b16 %v4727
    %v4798 = vunpack.c.l.b16 %v4728
    %v4799 = vunpack.c.l.b16 %v4729
    %v4800 = vunpack.c.l.b16 %v4730
    %v4801 = vunpack.c.l.b16 %v4731
    %v4802 = vunpack.c.l.b16 %v4732
    %v4803 = vunpack.c.l.b16 %v4733
    %v4804 = vunpack.c.l.b16 %v4734
    %v4805 = vunpack.c.l.b16 %v4735
    %v4806 = vunpack.c.l.b16 %v4736
    %v4807 = vunpack.c.l.b16 %v4737
    %v4808 = vunpack.c.l.b16 %v4738
    %v4809 = vunpack.c.l.b16 %v4739
    %v4810 = vpack.c.b16 %v4779, %v4778
    %v4811 = vpack.c.b16 %v4781, %v4780
    %v4812 = vpack.c.b16 %v4783, %v4782
    %v4813 = vpack.c.b16 %v4785, %v4784
    %v4814 = vpack.c.b16 %v4787, %v4786
    %v4815 = vpack.c.b16 %v4789, %v4788
    %v4816 = vpack.c.b16 %v4791, %v4790
    %v4817 = vpack.c.b16 %v4793, %v4792
    %v4818 = vpack.c.b16 %v4795, %v4794
    %v4819 = vpack.c.b16 %v4797, %v4796
    %v4820 = vpack.c.b16 %v4799, %v4798
    %v4821 = vpack.c.b16 %v4801, %v4800
    %v4822 = vpack.c.b16 %v4803, %v4802
    %v4823 = vpack.c.b16 %v4805, %v4804
    %v4824 = vpack.c.b16 %v4807, %v4806
    %v4825 = vpack.c.b16 %v4809, %v4808
    %4842 = vmatpush.bf16.msra.mxu0 %v4817
    %4843 = vmatpush.bf16.msra.mxu0 %v4816
    %4844 = vmatpush.bf16.msra.mxu0 %v4815
    %4845 = vmatpush.bf16.msra.mxu0 %v4814
    %4846 = vmatpush.bf16.msra.mxu0 %v4813
    %4847 = vmatpush.bf16.msra.mxu0 %v4812
    %4848 = vmatpush.bf16.msra.mxu0 %v4811
    %4849 = vmatpush.bf16.msra.mxu0 %v4810
    %4850 = vmatmul.bf16.gmra.mxu0 %v4740
    %v4851 = vpop.f32.mrf.mxu0
    %v4852 = vadd.f32 %v4744, %v4851
    %v4853 = vpop.f32.mrf.mxu0
    %4854 = vdwg.mxu0
    %4855 = vmatpush.bf16.msra.mxu0 %v4825
    %4856 = vmatpush.bf16.msra.mxu0 %v4824
    %4857 = vmatpush.bf16.msra.mxu0 %v4823
    %4858 = vmatpush.bf16.msra.mxu0 %v4822
    %4859 = vmatpush.bf16.msra.mxu0 %v4821
    %4860 = vmatpush.bf16.msra.mxu0 %v4820
    %4861 = vmatpush.bf16.msra.mxu0 %v4819
    %4862 = vmatpush.bf16.msra.mxu0 %v4818
    %4863 = vmatmul.bf16.gmra.mxu0 %v4741
    %v4864 = vpop.f32.mrf.mxu0
    %v4865 = vadd.f32 %v4852, %v4864
    %v4866 = vpop.f32.mrf.mxu0
    %4867 = vdwg.mxu0
    %v4868 = vsub.f32 %v4865, %v205
    %v4869 = vand.u32 2147483647, %v4868
    %v4870 = vlaneseq
    %v4871 = vand.u32 %v4870, 127
    %vm4872 = vcmp.lt.s32.totalorder %v4871, 3
    %v4873 = vsel %vm4872, %v4869, 0.0
    %vm4874 = vcmask 91136
    %v4875 = vsel %vm4874, %v4873, 0.0
    %4876 = vadd.xlane.f32.xlu0 %v4875
    %v4877 = vpop.xlane.xlu0 %4876
    %v4878 = vrot.slane %v4877, 4
    %v4879 = vadd.f32 %v4877, %v4878
    %v4880 = vrot.slane %v4879, 2
    %v4881 = vadd.f32 %v4879, %v4880
    %v4882 = vrot.slane %v4881, 1
    %v4883 = vadd.f32 %v4881, %v4882
    %s4884 = vtos %v4883
    %v4885 = vsel %vm4874, %v4869, 0.0
    %4886 = vadd.xlane.f32.xlu0 %v4885
    %v4887 = vpop.xlane.xlu0 %4886
    %v4888 = vrot.slane %v4887, 4
    %v4889 = vadd.f32 %v4887, %v4888
    %v4890 = vrot.slane %v4889, 2
    %v4891 = vadd.f32 %v4889, %v4890
    %v4892 = vrot.slane %v4891, 1
    %v4893 = vadd.f32 %v4891, %v4892
    %s4894 = vtos %v4893
    %s4895 = ssub.f32 %s4894, %s4884
    %v4896 = vrcp.pop 6.0
    %v4897 = vmul.f32 6.0, %v4896
    %v4898 = vsub.f32 1.0, %v4897
    %v4899 = vmul.f32 %v4896, %v4898
    %v4900 = vadd.f32 %v4896, %v4899
    %vm4901 = vweird.f32 %v4896
    %v4902 = vsel %vm4901, %v4896, %v4900
    %s4903 = vtos %v4902
    %s4904 = smul.f32 %s4884, %s4903
    %v4905 = vrcp.pop 18.0
    %v4906 = vmul.f32 18.0, %v4905
    %v4907 = vsub.f32 1.0, %v4906
    %v4908 = vmul.f32 %v4905, %v4907
    %v4909 = vadd.f32 %v4905, %v4908
    %vm4910 = vweird.f32 %v4905
    %v4911 = vsel %vm4910, %v4905, %v4909
    %s4912 = vtos %v4911
    %s4913 = smul.f32 %s4895, %s4912
    %v4914 = vadd.f32 %v3050, 1.0
    %v4915 = vmul.f32 %v3050, %v3050
    %4917 = vrot.lane.b32.xlu0 %v4915, 64
    %v4918 = vpop.permute.xlu0 %4917
    %v4920 = vsub.f32 %v4914, %v4918
    %v4921 = vmul.f32 %v3050, 1.442695
    %v4922 = vpow.pop %v4921
    %v4923 = vsub.f32 %v4920, %v4922
    %4925 = vrot.lane.b32.xlu0 %v4923, 64
    %v4926 = vpop.permute.xlu0 %4925
    %vm4928 = vcmask 517120
    %v4929 = vsel %vm4928, %v4926, 0.0
    %4930 = vadd.xlane.f32.xlu0 %v4929
    %v4931 = vpop.xlane.xlu0 %4930
    %v4932 = vrot.slane %v4931, 4
    %v4933 = vadd.f32 %v4931, %v4932
    %v4934 = vrot.slane %v4933, 2
    %v4935 = vadd.f32 %v4933, %v4934
    %v4936 = vrot.slane %v4935, 1
    %v4937 = vadd.f32 %v4935, %v4936
    %s4938 = vtos %v4937
    %s4939 = smul.f32 %s4938, -0.5
    %vm4940 = vcmp.eq.s32.totalorder %v4871, 0
    %vm4941 = vcmp.eq.s32.totalorder %v4871, 1
    %vm4942 = vcmp.eq.s32.totalorder %v4871, 2
    %v4943 = vstv %s4939
    %v4944 = vsel %vm4942, %v4943, 0.0
    %v4945 = vstv %s4913
    %v4946 = vsel %vm4941, %v4945, %v4944
    %v4947 = vstv %s4904
    %v4948 = vsel %vm4940, %v4947, %v4946
    %4949 = vst [vmem:[%s21] sm:$0x1] %v4948
    // Predicated region
    $region122: #{grasp_cvae_forward.1} parent=1 // pred_check
      _
    $region123: #{grasp_cvae_forward.1} parent=1 // pred_check_branch
      %4951 = sbr.rel (0) target = $region125
    $region124: #{grasp_cvae_forward.1} parent=1 // pred_region
      _
    $region125: #{grasp_cvae_forward.1} parent=1 // pred_fallthru
      _
    // Predicated region
    $region126: #{grasp_cvae_forward.1} parent=1 // pred_check
      _
    $region127: #{grasp_cvae_forward.1} parent=1 // pred_check_branch
      %4953 = sbr.rel (0) target = $region129
    $region128: #{grasp_cvae_forward.1} parent=1 // pred_region
      _
    $region129: #{grasp_cvae_forward.1} parent=1 // pred_fallthru
      _
    %4954 = vsyncpa [#allocation3], 1
    %4955 = vsyncpa [#allocation5], 1
    %4956 = vsyncpa [#allocation8], 1
    %4957 = vsyncpa [#allocation11], 1
    %4958 = vsyncpa [#allocation14], 1

</llo_original>
